<compile_context>
chip_gen: v6e
topology: v6e:2x2x1
jax: 0.10.0
libtpu: 0.0.40
codegen_flags: <defaults>
</compile_context>

<pallas_src>
import jax
import jax.numpy as jnp
from jax import lax
import numpy as np
from jax.experimental import pallas as pl
from jax.experimental.pallas import tpu as pltpu

NUM_LAYERS = 4
# Layer -> lane-slot of its h/c in the packed (1, NUM_LAYERS*H) state.
# Top layer (3) sits in slot 0 so the output head reads lanes 0:H directly;
# layers 0..2 sit in slots 1..3 so the wavefront-head mask is a contiguous
# lane range.
SLOT = (1, 2, 3, 0)


def lstm_kernel(x_ref, w_in_ref, w_big_ref, b_ref, b_out_ref, w_out_hbm,
                out_ref, xproj_ref, w_out_vmem, dma_sem):
    T = xproj_ref.shape[0]
    GW = b_ref.shape[1]              # packed gate width = 4 * S  ([I|F|O|G])
    S = GW // 4                      # packed state width = NUM_LAYERS * H
    L = NUM_LAYERS
    H = S // L
    ND = T + L - 1                   # number of wavefront (anti-diagonal) steps

    # Kick off the output-head weight copy now; it is only consumed after the
    # recurrence, so the DMA is hidden behind the wavefront steps.
    head_cp = pltpu.make_async_copy(w_out_hbm, w_out_vmem, dma_sem.at[0])
    head_cp.start()

    # Hoisted layer-0 input projection for all timesteps: one (T,in)@(in,GW)
    # matmul; w_in already scatters layer-0's gate columns into the packed
    # [I|F|O|G] x slot layout (zeros elsewhere).
    xproj_ref[...] = jnp.dot(x_ref[...], w_in_ref[...],
                             preferred_element_type=jnp.float32)

    bias = b_ref[...]                                    # (1, GW)
    lane = lax.broadcasted_iota(jnp.int32, (1, S), 1)    # for head masks

    h = jnp.zeros((1, S), jnp.float32)   # packed [h3 | h0 | h1 | h2]
    c = jnp.zeros((1, S), jnp.float32)   # packed cell state, same layout

    # Wavefront over anti-diagonals d = t + l.  All active layer-cells on a
    # diagonal are independent and read only state written on diagonal d-1,
    # so one fused (1,S)@(S,4S) matmul produces every layer's gates at once.
    for d in range(ND):
        t = min(d, T - 1)            # static xproj row (clamped past the end;
                                     # only feeds the finished layer 0 -> unused)
        gates = (bias + xproj_ref[pl.ds(t, 1), :]
                 + jnp.dot(h, w_big_ref[...],
                           preferred_element_type=jnp.float32))
        # Single-EUP sigmoid over the [I|F|O] blocks, tanh over [G].
        sig = 0.5 * jnp.tanh(0.5 * gates[:, 0:3 * S]) + 0.5
        i_g = sig[:, 0:S]
        f_g = sig[:, S:2 * S]
        o_g = sig[:, 2 * S:3 * S]
        g_g = jnp.tanh(gates[:, 3 * S:4 * S])
        c_new = f_g * c + i_g * g_g
        h_new = o_g * jnp.tanh(c_new)
        if d < L - 1:
            # Wavefront head: layers l > d have not started; keep their (zero)
            # state.  Active layers 0..d occupy the contiguous lane range
            # [H, (d+2)*H) thanks to the slot ordering.
            m = ((lane >= H) & (lane < (d + 2) * H)).astype(jnp.float32)
            c_new = c_new * m
            h_new = h_new * m
        # Wavefront tail needs no masking: once a layer has consumed its last
        # input, any further (stale) updates to it are never read again.
        c, h = c_new, h_new

    # hidden2out on the top layer's last hidden state (packed lanes 0:H).
    head_cp.wait()
    out_ref[...] = (jnp.dot(h[:, 0:H], w_out_vmem[...],
                            preferred_element_type=jnp.float32)
                    + b_out_ref[...])


def lstm_forward(x, w_ih0, w_ih_rest, w_hh, b, w_out, b_out):
    """Host-side weight packing + single-invocation pallas_call."""
    # TODO(synk): the PyTorch module carries self.hidden across forward calls;
    # here each call starts from init_hidden()'s zero state.
    T, input_size = x.shape
    H = w_hh.shape[1]
    L = NUM_LAYERS
    S = L * H
    GW = 4 * S
    out_dim = w_out.shape[1]
    out_pad = pl.cdiv(out_dim, 128) * 128

    src_off = (0, H, 3 * H, 2 * H)   # torch gate cols (i,f,g,o) -> our (I,F,O,G)

    w_ih0_n = np.asarray(w_ih0, np.float32)
    w_ih_rest_n = np.asarray(w_ih_rest, np.float32)
    w_hh_n = np.asarray(w_hh, np.float32)
    b_n = np.asarray(b, np.float32)

    w_in = np.zeros((input_size, GW), np.float32)   # layer-0 input proj, scattered
    w_big = np.zeros((S, GW), np.float32)           # fused input+recurrent weights
    bias_pack = np.zeros((1, GW), np.float32)

    for l in range(L):
        r_hh = SLOT[l] * H                          # rows of h_l in the packed state
        for gi, so in enumerate(src_off):
            col = gi * S + SLOT[l] * H              # layer l's lanes in gate block gi
            w_big[r_hh:r_hh + H, col:col + H] = w_hh_n[l][:, so:so + H]
            bias_pack[0, col:col + H] = b_n[l, so:so + H]
            if l == 0:
                w_in[:, col:col + H] = w_ih0_n[:, so:so + H]
            else:
                r_ih = SLOT[l - 1] * H              # rows of h_{l-1}
                w_big[r_ih:r_ih + H, col:col + H] = w_ih_rest_n[l - 1][:, so:so + H]

    # Output head: (H, out_pad), fed by the top layer only (packed lanes 0:H).
    w_out_p = np.zeros((H, out_pad), np.float32)
    w_out_p[:, :out_dim] = np.asarray(w_out, np.float32)
    b_out_p = np.zeros((1, out_pad), np.float32)
    b_out_p[0, :out_dim] = np.asarray(b_out, np.float32).reshape(-1)

    vmem = pl.BlockSpec(memory_space=pltpu.MemorySpace.VMEM)
    out = pl.pallas_call(
        lstm_kernel,
        out_shape=jax.ShapeDtypeStruct((1, out_pad), jnp.float32),
        in_specs=[vmem, vmem, vmem, vmem, vmem,
                  pl.BlockSpec(memory_space=pl.ANY)],   # w_out stays in HBM; copied manually
        out_specs=vmem,
        scratch_shapes=[pltpu.VMEM((T, GW), jnp.float32),       # hoisted layer-0 projection
                        pltpu.VMEM((H, out_pad), jnp.float32),  # output-head weight landing pad
                        pltpu.SemaphoreType.DMA((1,))],
    )(x.astype(jnp.float32), jnp.asarray(w_in), jnp.asarray(w_big),
      jnp.asarray(bias_pack), jnp.asarray(b_out_p), jnp.asarray(w_out_p))
    return out[:, :out_dim]


def reference_forward(x, w_ih0, w_ih_rest, w_hh, b, w_out, b_out):
    """Pure-JAX reference matching torch.nn.LSTM(num_layers=4) + Linear."""
    T, _ = x.shape
    H = w_hh.shape[1]
    hs = [jnp.zeros((1, H), jnp.float32) for _ in range(NUM_LAYERS)]
    cs = [jnp.zeros((1, H), jnp.float32) for _ in range(NUM_LAYERS)]
    for t in range(T):
        inp = x[t:t + 1, :]
        for l in range(NUM_LAYERS):
            w_ih = w_ih0 if l == 0 else w_ih_rest[l - 1]
            gates = inp @ w_ih + hs[l] @ w_hh[l] + b[l:l + 1, :]
            i_g = jax.nn.sigmoid(gates[:, 0:H])
            f_g = jax.nn.sigmoid(gates[:, H:2 * H])
            g_g = jnp.tanh(gates[:, 2 * H:3 * H])
            o_g = jax.nn.sigmoid(gates[:, 3 * H:4 * H])
            cs[l] = f_g * cs[l] + i_g * g_g
            hs[l] = o_g * jnp.tanh(cs[l])
            inp = hs[l]
    return hs[-1] @ w_out + b_out


if __name__ == "__main__":
    input_size = 32
    hidden_dim = 32
    seq_len = 8
    out_dim = 900

    key = jax.random.PRNGKey(0)
    keys = jax.random.split(key, 8)

    # PyTorch default LSTM init: U(-1/sqrt(H), 1/sqrt(H)); Linear: U(-1/sqrt(in), 1/sqrt(in)).
    k_lstm = 1.0 / np.sqrt(hidden_dim)
    k_lin = 1.0 / np.sqrt(hidden_dim)

    x = jax.random.normal(keys[0], (seq_len, input_size), jnp.float32)

    w_ih0 = jax.random.uniform(keys[1], (input_size, 4 * hidden_dim),
                               jnp.float32, -k_lstm, k_lstm)
    w_ih_rest = jax.random.uniform(keys[2], (3, hidden_dim, 4 * hidden_dim),
                                   jnp.float32, -k_lstm, k_lstm)
    w_hh = jax.random.uniform(keys[3], (4, hidden_dim, 4 * hidden_dim),
                              jnp.float32, -k_lstm, k_lstm)
    b_ih = jax.random.uniform(keys[4], (4, 4 * hidden_dim),
                              jnp.float32, -k_lstm, k_lstm)
    b_hh = jax.random.uniform(keys[5], (4, 4 * hidden_dim),
                              jnp.float32, -k_lstm, k_lstm)
    b = b_ih + b_hh

    w_out = jax.random.uniform(keys[6], (hidden_dim, out_dim),
                               jnp.float32, -k_lin, k_lin)
    b_out = jax.random.uniform(keys[7], (1, out_dim),
                               jnp.float32, -k_lin, k_lin)

    out = lstm_forward(x, w_ih0, w_ih_rest, w_hh, b, w_out, b_out)
    out = jax.block_until_ready(out)

    ref = reference_forward(x, w_ih0, w_ih_rest, w_hh, b, w_out, b_out)
    np.testing.assert_allclose(np.asarray(out), np.asarray(ref),
                               rtol=5e-5, atol=5e-5)

    assert out.shape == (1, out_dim)
    print("KERNEL_OK")
</pallas_src>

<mosaic_0001>
module attributes {stable_mosaic.version = 11 : i64} {
  func.func @lstm_kernel(%arg0: memref<8x32xf32, #tpu.memory_space<vmem>>, %arg1: memref<32x512xf32, #tpu.memory_space<vmem>>, %arg2: memref<128x512xf32, #tpu.memory_space<vmem>>, %arg3: memref<1x512xf32, #tpu.memory_space<vmem>>, %arg4: memref<1x1024xf32, #tpu.memory_space<vmem>>, %arg5: memref<32x1024xf32, #tpu.memory_space<any>>, %arg6: memref<1x1024xf32, #tpu.memory_space<vmem>>, %arg7: memref<8x512xf32, #tpu.memory_space<vmem>>, %arg8: memref<32x1024xf32, #tpu.memory_space<vmem>>, %arg9: memref<1x!tpu.dma_semaphore, #tpu.memory_space<semaphore_mem>>) attributes {dimension_semantics = [], scalar_prefetch = 0 : i64, scratch_operands = 3 : i64, tpu.core_type = #tpu.core_type<tc>} {
    %c0_i32 = arith.constant 0 : i32
    %0 = tpu.memref_slice %arg9[%c0_i32] : memref<1x!tpu.dma_semaphore, #tpu.memory_space<semaphore_mem>> -> memref<1x!tpu.dma_semaphore, #tpu.memory_space<semaphore_mem>>
    %1 = tpu.memref_squeeze %0 : memref<1x!tpu.dma_semaphore, #tpu.memory_space<semaphore_mem>> -> memref<!tpu.dma_semaphore, #tpu.memory_space<semaphore_mem>>
    tpu.enqueue_dma source(%arg5 : memref<32x1024xf32, #tpu.memory_space<any>>) target(%arg8 : memref<32x1024xf32, #tpu.memory_space<vmem>>) target_semaphore(%1 : memref<!tpu.dma_semaphore, #tpu.memory_space<semaphore_mem>>)
    %c0 = arith.constant 0 : index
    %c0_0 = arith.constant 0 : index
    %2 = vector.load %arg0[%c0, %c0_0] : memref<8x32xf32, #tpu.memory_space<vmem>>, vector<8x32xf32>
    %c0_1 = arith.constant 0 : index
    %c0_2 = arith.constant 0 : index
    %3 = vector.load %arg1[%c0_1, %c0_2] : memref<32x512xf32, #tpu.memory_space<vmem>>, vector<32x512xf32>
    %cst = arith.constant dense<0.000000e+00> : vector<8x512xf32>
    %4 = tpu.matmul %2, %3, %cst {dimension_numbers = #tpu.dot_dimension_numbers<[1], [0], [0], [1], [0, 0, 1, 1], [], []>} : vector<8x32xf32>, vector<32x512xf32>, vector<8x512xf32> -> vector<8x512xf32>
    %c0_3 = arith.constant 0 : index
    %c0_4 = arith.constant 0 : index
    %5 = vector.load %arg7[%c0_3, %c0_4] : memref<8x512xf32, #tpu.memory_space<vmem>>, vector<8x512xf32>
    tpu.vector_store %arg7[%c0_3, %c0_4], %4 {strides = array<i32>} : memref<8x512xf32, #tpu.memory_space<vmem>>, vector<8x512xf32>,
    %c0_5 = arith.constant 0 : index
    %c0_6 = arith.constant 0 : index
    %6 = vector.load %arg3[%c0_5, %c0_6] : memref<1x512xf32, #tpu.memory_space<vmem>>, vector<1x512xf32>
    %7 = tpu.iota {dimensions = array<i32: 1>} : vector<1x128xi32>
    %cst_7 = arith.constant 0.000000e+00 : f32
    %8 = vector.broadcast %cst_7 : f32 to vector<1x128xf32>
    %cst_8 = arith.constant 0.000000e+00 : f32
    %9 = vector.broadcast %cst_8 : f32 to vector<1x128xf32>
    %c0_9 = arith.constant 0 : index
    %c0_10 = arith.constant 0 : index
    %10 = vector.load %arg7[%c0_9, %c0_10] : memref<8x512xf32, #tpu.memory_space<vmem>>, vector<1x512xf32>
    %11 = arith.addf %6, %10 : vector<1x512xf32>
    %c0_11 = arith.constant 0 : index
    %c0_12 = arith.constant 0 : index
    %12 = vector.load %arg2[%c0_11, %c0_12] : memref<128x512xf32, #tpu.memory_space<vmem>>, vector<128x512xf32>
    %cst_13 = arith.constant dense<0.000000e+00> : vector<1x512xf32>
    %13 = tpu.matmul %8, %12, %cst_13 {dimension_numbers = #tpu.dot_dimension_numbers<[1], [0], [0], [1], [0, 0, 1, 1], [], []>} : vector<1x128xf32>, vector<128x512xf32>, vector<1x512xf32> -> vector<1x512xf32>
    %14 = arith.addf %11, %13 : vector<1x512xf32>
    %15 = vector.extract_strided_slice %14 {offsets = [0, 0], sizes = [1, 384], strides = [1, 1]} : vector<1x512xf32> to vector<1x384xf32>
    %cst_14 = arith.constant 5.000000e-01 : f32
    %16 = vector.broadcast %cst_14 : f32 to vector<1x384xf32>
    %17 = arith.mulf %16, %15 : vector<1x384xf32>
    %18 = math.tanh %17 : vector<1x384xf32>
    %cst_15 = arith.constant 5.000000e-01 : f32
    %19 = vector.broadcast %cst_15 : f32 to vector<1x384xf32>
    %20 = arith.mulf %19, %18 : vector<1x384xf32>
    %cst_16 = arith.constant 5.000000e-01 : f32
    %21 = vector.broadcast %cst_16 : f32 to vector<1x384xf32>
    %22 = arith.addf %20, %21 : vector<1x384xf32>
    %23 = vector.extract_strided_slice %22 {offsets = [0, 0], sizes = [1, 128], strides = [1, 1]} : vector<1x384xf32> to vector<1x128xf32>
    %24 = vector.extract_strided_slice %22 {offsets = [0, 128], sizes = [1, 128], strides = [1, 1]} : vector<1x384xf32> to vector<1x128xf32>
    %25 = vector.extract_strided_slice %22 {offsets = [0, 256], sizes = [1, 128], strides = [1, 1]} : vector<1x384xf32> to vector<1x128xf32>
    %26 = vector.extract_strided_slice %14 {offsets = [0, 384], sizes = [1, 128], strides = [1, 1]} : vector<1x512xf32> to vector<1x128xf32>
    %27 = math.tanh %26 : vector<1x128xf32>
    %28 = arith.mulf %24, %9 : vector<1x128xf32>
    %29 = arith.mulf %23, %27 : vector<1x128xf32>
    %30 = arith.addf %28, %29 : vector<1x128xf32>
    %31 = math.tanh %30 : vector<1x128xf32>
    %32 = arith.mulf %25, %31 : vector<1x128xf32>
    %c32_i32 = arith.constant 32 : i32
    %33 = vector.broadcast %c32_i32 : i32 to vector<1x128xi32>
    %34 = arith.cmpi sge, %7, %33 : vector<1x128xi32>
    %c64_i32 = arith.constant 64 : i32
    %35 = vector.broadcast %c64_i32 : i32 to vector<1x128xi32>
    %36 = arith.cmpi slt, %7, %35 : vector<1x128xi32>
    %37 = arith.andi %34, %36 : vector<1x128xi1>
    %38 = arith.extui %37 : vector<1x128xi1> to vector<1x128xi32>
    %39 = arith.sitofp %38 : vector<1x128xi32> to vector<1x128xf32>
    %40 = arith.mulf %30, %39 : vector<1x128xf32>
    %41 = arith.mulf %32, %39 : vector<1x128xf32>
    %c1 = arith.constant 1 : index
    %c0_17 = arith.constant 0 : index
    %42 = vector.load %arg7[%c1, %c0_17] : memref<8x512xf32, #tpu.memory_space<vmem>>, vector<1x512xf32>
    %43 = arith.addf %6, %42 : vector<1x512xf32>
    %c0_18 = arith.constant 0 : index
    %c0_19 = arith.constant 0 : index
    %44 = vector.load %arg2[%c0_18, %c0_19] : memref<128x512xf32, #tpu.memory_space<vmem>>, vector<128x512xf32>
    %cst_20 = arith.constant dense<0.000000e+00> : vector<1x512xf32>
    %45 = tpu.matmul %41, %44, %cst_20 {dimension_numbers = #tpu.dot_dimension_numbers<[1], [0], [0], [1], [0, 0, 1, 1], [], []>} : vector<1x128xf32>, vector<128x512xf32>, vector<1x512xf32> -> vector<1x512xf32>
    %46 = arith.addf %43, %45 : vector<1x512xf32>
    %47 = vector.extract_strided_slice %46 {offsets = [0, 0], sizes = [1, 384], strides = [1, 1]} : vector<1x512xf32> to vector<1x384xf32>
    %cst_21 = arith.constant 5.000000e-01 : f32
    %48 = vector.broadcast %cst_21 : f32 to vector<1x384xf32>
    %49 = arith.mulf %48, %47 : vector<1x384xf32>
    %50 = math.tanh %49 : vector<1x384xf32>
    %cst_22 = arith.constant 5.000000e-01 : f32
    %51 = vector.broadcast %cst_22 : f32 to vector<1x384xf32>
    %52 = arith.mulf %51, %50 : vector<1x384xf32>
    %cst_23 = arith.constant 5.000000e-01 : f32
    %53 = vector.broadcast %cst_23 : f32 to vector<1x384xf32>
    %54 = arith.addf %52, %53 : vector<1x384xf32>
    %55 = vector.extract_strided_slice %54 {offsets = [0, 0], sizes = [1, 128], strides = [1, 1]} : vector<1x384xf32> to vector<1x128xf32>
    %56 = vector.extract_strided_slice %54 {offsets = [0, 128], sizes = [1, 128], strides = [1, 1]} : vector<1x384xf32> to vector<1x128xf32>
    %57 = vector.extract_strided_slice %54 {offsets = [0, 256], sizes = [1, 128], strides = [1, 1]} : vector<1x384xf32> to vector<1x128xf32>
    %58 = vector.extract_strided_slice %46 {offsets = [0, 384], sizes = [1, 128], strides = [1, 1]} : vector<1x512xf32> to vector<1x128xf32>
    %59 = math.tanh %58 : vector<1x128xf32>
    %60 = arith.mulf %56, %40 : vector<1x128xf32>
    %61 = arith.mulf %55, %59 : vector<1x128xf32>
    %62 = arith.addf %60, %61 : vector<1x128xf32>
    %63 = math.tanh %62 : vector<1x128xf32>
    %64 = arith.mulf %57, %63 : vector<1x128xf32>
    %c32_i32_24 = arith.constant 32 : i32
    %65 = vector.broadcast %c32_i32_24 : i32 to vector<1x128xi32>
    %66 = arith.cmpi sge, %7, %65 : vector<1x128xi32>
    %c96_i32 = arith.constant 96 : i32
    %67 = vector.broadcast %c96_i32 : i32 to vector<1x128xi32>
    %68 = arith.cmpi slt, %7, %67 : vector<1x128xi32>
    %69 = arith.andi %66, %68 : vector<1x128xi1>
    %70 = arith.extui %69 : vector<1x128xi1> to vector<1x128xi32>
    %71 = arith.sitofp %70 : vector<1x128xi32> to vector<1x128xf32>
    %72 = arith.mulf %62, %71 : vector<1x128xf32>
    %73 = arith.mulf %64, %71 : vector<1x128xf32>
    %c2 = arith.constant 2 : index
    %c0_25 = arith.constant 0 : index
    %74 = vector.load %arg7[%c2, %c0_25] : memref<8x512xf32, #tpu.memory_space<vmem>>, vector<1x512xf32>
    %75 = arith.addf %6, %74 : vector<1x512xf32>
    %c0_26 = arith.constant 0 : index
    %c0_27 = arith.constant 0 : index
    %76 = vector.load %arg2[%c0_26, %c0_27] : memref<128x512xf32, #tpu.memory_space<vmem>>, vector<128x512xf32>
    %cst_28 = arith.constant dense<0.000000e+00> : vector<1x512xf32>
    %77 = tpu.matmul %73, %76, %cst_28 {dimension_numbers = #tpu.dot_dimension_numbers<[1], [0], [0], [1], [0, 0, 1, 1], [], []>} : vector<1x128xf32>, vector<128x512xf32>, vector<1x512xf32> -> vector<1x512xf32>
    %78 = arith.addf %75, %77 : vector<1x512xf32>
    %79 = vector.extract_strided_slice %78 {offsets = [0, 0], sizes = [1, 384], strides = [1, 1]} : vector<1x512xf32> to vector<1x384xf32>
    %cst_29 = arith.constant 5.000000e-01 : f32
    %80 = vector.broadcast %cst_29 : f32 to vector<1x384xf32>
    %81 = arith.mulf %80, %79 : vector<1x384xf32>
    %82 = math.tanh %81 : vector<1x384xf32>
    %cst_30 = arith.constant 5.000000e-01 : f32
    %83 = vector.broadcast %cst_30 : f32 to vector<1x384xf32>
    %84 = arith.mulf %83, %82 : vector<1x384xf32>
    %cst_31 = arith.constant 5.000000e-01 : f32
    %85 = vector.broadcast %cst_31 : f32 to vector<1x384xf32>
    %86 = arith.addf %84, %85 : vector<1x384xf32>
    %87 = vector.extract_strided_slice %86 {offsets = [0, 0], sizes = [1, 128], strides = [1, 1]} : vector<1x384xf32> to vector<1x128xf32>
    %88 = vector.extract_strided_slice %86 {offsets = [0, 128], sizes = [1, 128], strides = [1, 1]} : vector<1x384xf32> to vector<1x128xf32>
    %89 = vector.extract_strided_slice %86 {offsets = [0, 256], sizes = [1, 128], strides = [1, 1]} : vector<1x384xf32> to vector<1x128xf32>
    %90 = vector.extract_strided_slice %78 {offsets = [0, 384], sizes = [1, 128], strides = [1, 1]} : vector<1x512xf32> to vector<1x128xf32>
    %91 = math.tanh %90 : vector<1x128xf32>
    %92 = arith.mulf %88, %72 : vector<1x128xf32>
    %93 = arith.mulf %87, %91 : vector<1x128xf32>
    %94 = arith.addf %92, %93 : vector<1x128xf32>
    %95 = math.tanh %94 : vector<1x128xf32>
    %96 = arith.mulf %89, %95 : vector<1x128xf32>
    %c32_i32_32 = arith.constant 32 : i32
    %97 = vector.broadcast %c32_i32_32 : i32 to vector<1x128xi32>
    %98 = arith.cmpi sge, %7, %97 : vector<1x128xi32>
    %c128_i32 = arith.constant 128 : i32
    %99 = vector.broadcast %c128_i32 : i32 to vector<1x128xi32>
    %100 = arith.cmpi slt, %7, %99 : vector<1x128xi32>
    %101 = arith.andi %98, %100 : vector<1x128xi1>
    %102 = arith.extui %101 : vector<1x128xi1> to vector<1x128xi32>
    %103 = arith.sitofp %102 : vector<1x128xi32> to vector<1x128xf32>
    %104 = arith.mulf %94, %103 : vector<1x128xf32>
    %105 = arith.mulf %96, %103 : vector<1x128xf32>
    %c3 = arith.constant 3 : index
    %c0_33 = arith.constant 0 : index
    %106 = vector.load %arg7[%c3, %c0_33] : memref<8x512xf32, #tpu.memory_space<vmem>>, vector<1x512xf32>
    %107 = arith.addf %6, %106 : vector<1x512xf32>
    %c0_34 = arith.constant 0 : index
    %c0_35 = arith.constant 0 : index
    %108 = vector.load %arg2[%c0_34, %c0_35] : memref<128x512xf32, #tpu.memory_space<vmem>>, vector<128x512xf32>
    %cst_36 = arith.constant dense<0.000000e+00> : vector<1x512xf32>
    %109 = tpu.matmul %105, %108, %cst_36 {dimension_numbers = #tpu.dot_dimension_numbers<[1], [0], [0], [1], [0, 0, 1, 1], [], []>} : vector<1x128xf32>, vector<128x512xf32>, vector<1x512xf32> -> vector<1x512xf32>
    %110 = arith.addf %107, %109 : vector<1x512xf32>
    %111 = vector.extract_strided_slice %110 {offsets = [0, 0], sizes = [1, 384], strides = [1, 1]} : vector<1x512xf32> to vector<1x384xf32>
    %cst_37 = arith.constant 5.000000e-01 : f32
    %112 = vector.broadcast %cst_37 : f32 to vector<1x384xf32>
    %113 = arith.mulf %112, %111 : vector<1x384xf32>
    %114 = math.tanh %113 : vector<1x384xf32>
    %cst_38 = arith.constant 5.000000e-01 : f32
    %115 = vector.broadcast %cst_38 : f32 to vector<1x384xf32>
    %116 = arith.mulf %115, %114 : vector<1x384xf32>
    %cst_39 = arith.constant 5.000000e-01 : f32
    %117 = vector.broadcast %cst_39 : f32 to vector<1x384xf32>
    %118 = arith.addf %116, %117 : vector<1x384xf32>
    %119 = vector.extract_strided_slice %118 {offsets = [0, 0], sizes = [1, 128], strides = [1, 1]} : vector<1x384xf32> to vector<1x128xf32>
    %120 = vector.extract_strided_slice %118 {offsets = [0, 128], sizes = [1, 128], strides = [1, 1]} : vector<1x384xf32> to vector<1x128xf32>
    %121 = vector.extract_strided_slice %118 {offsets = [0, 256], sizes = [1, 128], strides = [1, 1]} : vector<1x384xf32> to vector<1x128xf32>
    %122 = vector.extract_strided_slice %110 {offsets = [0, 384], sizes = [1, 128], strides = [1, 1]} : vector<1x512xf32> to vector<1x128xf32>
    %123 = math.tanh %122 : vector<1x128xf32>
    %124 = arith.mulf %120, %104 : vector<1x128xf32>
    %125 = arith.mulf %119, %123 : vector<1x128xf32>
    %126 = arith.addf %124, %125 : vector<1x128xf32>
    %127 = math.tanh %126 : vector<1x128xf32>
    %128 = arith.mulf %121, %127 : vector<1x128xf32>
    %c4 = arith.constant 4 : index
    %c0_40 = arith.constant 0 : index
    %129 = vector.load %arg7[%c4, %c0_40] : memref<8x512xf32, #tpu.memory_space<vmem>>, vector<1x512xf32>
    %130 = arith.addf %6, %129 : vector<1x512xf32>
    %c0_41 = arith.constant 0 : index
    %c0_42 = arith.constant 0 : index
    %131 = vector.load %arg2[%c0_41, %c0_42] : memref<128x512xf32, #tpu.memory_space<vmem>>, vector<128x512xf32>
    %cst_43 = arith.constant dense<0.000000e+00> : vector<1x512xf32>
    %132 = tpu.matmul %128, %131, %cst_43 {dimension_numbers = #tpu.dot_dimension_numbers<[1], [0], [0], [1], [0, 0, 1, 1], [], []>} : vector<1x128xf32>, vector<128x512xf32>, vector<1x512xf32> -> vector<1x512xf32>
    %133 = arith.addf %130, %132 : vector<1x512xf32>
    %134 = vector.extract_strided_slice %133 {offsets = [0, 0], sizes = [1, 384], strides = [1, 1]} : vector<1x512xf32> to vector<1x384xf32>
    %cst_44 = arith.constant 5.000000e-01 : f32
    %135 = vector.broadcast %cst_44 : f32 to vector<1x384xf32>
    %136 = arith.mulf %135, %134 : vector<1x384xf32>
    %137 = math.tanh %136 : vector<1x384xf32>
    %cst_45 = arith.constant 5.000000e-01 : f32
    %138 = vector.broadcast %cst_45 : f32 to vector<1x384xf32>
    %139 = arith.mulf %138, %137 : vector<1x384xf32>
    %cst_46 = arith.constant 5.000000e-01 : f32
    %140 = vector.broadcast %cst_46 : f32 to vector<1x384xf32>
    %141 = arith.addf %139, %140 : vector<1x384xf32>
    %142 = vector.extract_strided_slice %141 {offsets = [0, 0], sizes = [1, 128], strides = [1, 1]} : vector<1x384xf32> to vector<1x128xf32>
    %143 = vector.extract_strided_slice %141 {offsets = [0, 128], sizes = [1, 128], strides = [1, 1]} : vector<1x384xf32> to vector<1x128xf32>
    %144 = vector.extract_strided_slice %141 {offsets = [0, 256], sizes = [1, 128], strides = [1, 1]} : vector<1x384xf32> to vector<1x128xf32>
    %145 = vector.extract_strided_slice %133 {offsets = [0, 384], sizes = [1, 128], strides = [1, 1]} : vector<1x512xf32> to vector<1x128xf32>
    %146 = math.tanh %145 : vector<1x128xf32>
    %147 = arith.mulf %143, %126 : vector<1x128xf32>
    %148 = arith.mulf %142, %146 : vector<1x128xf32>
    %149 = arith.addf %147, %148 : vector<1x128xf32>
    %150 = math.tanh %149 : vector<1x128xf32>
    %151 = arith.mulf %144, %150 : vector<1x128xf32>
    %c5 = arith.constant 5 : index
    %c0_47 = arith.constant 0 : index
    %152 = vector.load %arg7[%c5, %c0_47] : memref<8x512xf32, #tpu.memory_space<vmem>>, vector<1x512xf32>
    %153 = arith.addf %6, %152 : vector<1x512xf32>
    %c0_48 = arith.constant 0 : index
    %c0_49 = arith.constant 0 : index
    %154 = vector.load %arg2[%c0_48, %c0_49] : memref<128x512xf32, #tpu.memory_space<vmem>>, vector<128x512xf32>
    %cst_50 = arith.constant dense<0.000000e+00> : vector<1x512xf32>
    %155 = tpu.matmul %151, %154, %cst_50 {dimension_numbers = #tpu.dot_dimension_numbers<[1], [0], [0], [1], [0, 0, 1, 1], [], []>} : vector<1x128xf32>, vector<128x512xf32>, vector<1x512xf32> -> vector<1x512xf32>
    %156 = arith.addf %153, %155 : vector<1x512xf32>
    %157 = vector.extract_strided_slice %156 {offsets = [0, 0], sizes = [1, 384], strides = [1, 1]} : vector<1x512xf32> to vector<1x384xf32>
    %cst_51 = arith.constant 5.000000e-01 : f32
    %158 = vector.broadcast %cst_51 : f32 to vector<1x384xf32>
    %159 = arith.mulf %158, %157 : vector<1x384xf32>
    %160 = math.tanh %159 : vector<1x384xf32>
    %cst_52 = arith.constant 5.000000e-01 : f32
    %161 = vector.broadcast %cst_52 : f32 to vector<1x384xf32>
    %162 = arith.mulf %161, %160 : vector<1x384xf32>
    %cst_53 = arith.constant 5.000000e-01 : f32
    %163 = vector.broadcast %cst_53 : f32 to vector<1x384xf32>
    %164 = arith.addf %162, %163 : vector<1x384xf32>
    %165 = vector.extract_strided_slice %164 {offsets = [0, 0], sizes = [1, 128], strides = [1, 1]} : vector<1x384xf32> to vector<1x128xf32>
    %166 = vector.extract_strided_slice %164 {offsets = [0, 128], sizes = [1, 128], strides = [1, 1]} : vector<1x384xf32> to vector<1x128xf32>
    %167 = vector.extract_strided_slice %164 {offsets = [0, 256], sizes = [1, 128], strides = [1, 1]} : vector<1x384xf32> to vector<1x128xf32>
    %168 = vector.extract_strided_slice %156 {offsets = [0, 384], sizes = [1, 128], strides = [1, 1]} : vector<1x512xf32> to vector<1x128xf32>
    %169 = math.tanh %168 : vector<1x128xf32>
    %170 = arith.mulf %166, %149 : vector<1x128xf32>
    %171 = arith.mulf %165, %169 : vector<1x128xf32>
    %172 = arith.addf %170, %171 : vector<1x128xf32>
    %173 = math.tanh %172 : vector<1x128xf32>
    %174 = arith.mulf %167, %173 : vector<1x128xf32>
    %c6 = arith.constant 6 : index
    %c0_54 = arith.constant 0 : index
    %175 = vector.load %arg7[%c6, %c0_54] : memref<8x512xf32, #tpu.memory_space<vmem>>, vector<1x512xf32>
    %176 = arith.addf %6, %175 : vector<1x512xf32>
    %c0_55 = arith.constant 0 : index
    %c0_56 = arith.constant 0 : index
    %177 = vector.load %arg2[%c0_55, %c0_56] : memref<128x512xf32, #tpu.memory_space<vmem>>, vector<128x512xf32>
    %cst_57 = arith.constant dense<0.000000e+00> : vector<1x512xf32>
    %178 = tpu.matmul %174, %177, %cst_57 {dimension_numbers = #tpu.dot_dimension_numbers<[1], [0], [0], [1], [0, 0, 1, 1], [], []>} : vector<1x128xf32>, vector<128x512xf32>, vector<1x512xf32> -> vector<1x512xf32>
    %179 = arith.addf %176, %178 : vector<1x512xf32>
    %180 = vector.extract_strided_slice %179 {offsets = [0, 0], sizes = [1, 384], strides = [1, 1]} : vector<1x512xf32> to vector<1x384xf32>
    %cst_58 = arith.constant 5.000000e-01 : f32
    %181 = vector.broadcast %cst_58 : f32 to vector<1x384xf32>
    %182 = arith.mulf %181, %180 : vector<1x384xf32>
    %183 = math.tanh %182 : vector<1x384xf32>
    %cst_59 = arith.constant 5.000000e-01 : f32
    %184 = vector.broadcast %cst_59 : f32 to vector<1x384xf32>
    %185 = arith.mulf %184, %183 : vector<1x384xf32>
    %cst_60 = arith.constant 5.000000e-01 : f32
    %186 = vector.broadcast %cst_60 : f32 to vector<1x384xf32>
    %187 = arith.addf %185, %186 : vector<1x384xf32>
    %188 = vector.extract_strided_slice %187 {offsets = [0, 0], sizes = [1, 128], strides = [1, 1]} : vector<1x384xf32> to vector<1x128xf32>
    %189 = vector.extract_strided_slice %187 {offsets = [0, 128], sizes = [1, 128], strides = [1, 1]} : vector<1x384xf32> to vector<1x128xf32>
    %190 = vector.extract_strided_slice %187 {offsets = [0, 256], sizes = [1, 128], strides = [1, 1]} : vector<1x384xf32> to vector<1x128xf32>
    %191 = vector.extract_strided_slice %179 {offsets = [0, 384], sizes = [1, 128], strides = [1, 1]} : vector<1x512xf32> to vector<1x128xf32>
    %192 = math.tanh %191 : vector<1x128xf32>
    %193 = arith.mulf %189, %172 : vector<1x128xf32>
    %194 = arith.mulf %188, %192 : vector<1x128xf32>
    %195 = arith.addf %193, %194 : vector<1x128xf32>
    %196 = math.tanh %195 : vector<1x128xf32>
    %197 = arith.mulf %190, %196 : vector<1x128xf32>
    %c7 = arith.constant 7 : index
    %c0_61 = arith.constant 0 : index
    %198 = vector.load %arg7[%c7, %c0_61] : memref<8x512xf32, #tpu.memory_space<vmem>>, vector<1x512xf32>
    %199 = arith.addf %6, %198 : vector<1x512xf32>
    %c0_62 = arith.constant 0 : index
    %c0_63 = arith.constant 0 : index
    %200 = vector.load %arg2[%c0_62, %c0_63] : memref<128x512xf32, #tpu.memory_space<vmem>>, vector<128x512xf32>
    %cst_64 = arith.constant dense<0.000000e+00> : vector<1x512xf32>
    %201 = tpu.matmul %197, %200, %cst_64 {dimension_numbers = #tpu.dot_dimension_numbers<[1], [0], [0], [1], [0, 0, 1, 1], [], []>} : vector<1x128xf32>, vector<128x512xf32>, vector<1x512xf32> -> vector<1x512xf32>
    %202 = arith.addf %199, %201 : vector<1x512xf32>
    %203 = vector.extract_strided_slice %202 {offsets = [0, 0], sizes = [1, 384], strides = [1, 1]} : vector<1x512xf32> to vector<1x384xf32>
    %cst_65 = arith.constant 5.000000e-01 : f32
    %204 = vector.broadcast %cst_65 : f32 to vector<1x384xf32>
    %205 = arith.mulf %204, %203 : vector<1x384xf32>
    %206 = math.tanh %205 : vector<1x384xf32>
    %cst_66 = arith.constant 5.000000e-01 : f32
    %207 = vector.broadcast %cst_66 : f32 to vector<1x384xf32>
    %208 = arith.mulf %207, %206 : vector<1x384xf32>
    %cst_67 = arith.constant 5.000000e-01 : f32
    %209 = vector.broadcast %cst_67 : f32 to vector<1x384xf32>
    %210 = arith.addf %208, %209 : vector<1x384xf32>
    %211 = vector.extract_strided_slice %210 {offsets = [0, 0], sizes = [1, 128], strides = [1, 1]} : vector<1x384xf32> to vector<1x128xf32>
    %212 = vector.extract_strided_slice %210 {offsets = [0, 128], sizes = [1, 128], strides = [1, 1]} : vector<1x384xf32> to vector<1x128xf32>
    %213 = vector.extract_strided_slice %210 {offsets = [0, 256], sizes = [1, 128], strides = [1, 1]} : vector<1x384xf32> to vector<1x128xf32>
    %214 = vector.extract_strided_slice %202 {offsets = [0, 384], sizes = [1, 128], strides = [1, 1]} : vector<1x512xf32> to vector<1x128xf32>
    %215 = math.tanh %214 : vector<1x128xf32>
    %216 = arith.mulf %212, %195 : vector<1x128xf32>
    %217 = arith.mulf %211, %215 : vector<1x128xf32>
    %218 = arith.addf %216, %217 : vector<1x128xf32>
    %219 = math.tanh %218 : vector<1x128xf32>
    %220 = arith.mulf %213, %219 : vector<1x128xf32>
    %c7_68 = arith.constant 7 : index
    %c0_69 = arith.constant 0 : index
    %221 = vector.load %arg7[%c7_68, %c0_69] : memref<8x512xf32, #tpu.memory_space<vmem>>, vector<1x512xf32>
    %222 = arith.addf %6, %221 : vector<1x512xf32>
    %c0_70 = arith.constant 0 : index
    %c0_71 = arith.constant 0 : index
    %223 = vector.load %arg2[%c0_70, %c0_71] : memref<128x512xf32, #tpu.memory_space<vmem>>, vector<128x512xf32>
    %cst_72 = arith.constant dense<0.000000e+00> : vector<1x512xf32>
    %224 = tpu.matmul %220, %223, %cst_72 {dimension_numbers = #tpu.dot_dimension_numbers<[1], [0], [0], [1], [0, 0, 1, 1], [], []>} : vector<1x128xf32>, vector<128x512xf32>, vector<1x512xf32> -> vector<1x512xf32>
    %225 = arith.addf %222, %224 : vector<1x512xf32>
    %226 = vector.extract_strided_slice %225 {offsets = [0, 0], sizes = [1, 384], strides = [1, 1]} : vector<1x512xf32> to vector<1x384xf32>
    %cst_73 = arith.constant 5.000000e-01 : f32
    %227 = vector.broadcast %cst_73 : f32 to vector<1x384xf32>
    %228 = arith.mulf %227, %226 : vector<1x384xf32>
    %229 = math.tanh %228 : vector<1x384xf32>
    %cst_74 = arith.constant 5.000000e-01 : f32
    %230 = vector.broadcast %cst_74 : f32 to vector<1x384xf32>
    %231 = arith.mulf %230, %229 : vector<1x384xf32>
    %cst_75 = arith.constant 5.000000e-01 : f32
    %232 = vector.broadcast %cst_75 : f32 to vector<1x384xf32>
    %233 = arith.addf %231, %232 : vector<1x384xf32>
    %234 = vector.extract_strided_slice %233 {offsets = [0, 0], sizes = [1, 128], strides = [1, 1]} : vector<1x384xf32> to vector<1x128xf32>
    %235 = vector.extract_strided_slice %233 {offsets = [0, 128], sizes = [1, 128], strides = [1, 1]} : vector<1x384xf32> to vector<1x128xf32>
    %236 = vector.extract_strided_slice %233 {offsets = [0, 256], sizes = [1, 128], strides = [1, 1]} : vector<1x384xf32> to vector<1x128xf32>
    %237 = vector.extract_strided_slice %225 {offsets = [0, 384], sizes = [1, 128], strides = [1, 1]} : vector<1x512xf32> to vector<1x128xf32>
    %238 = math.tanh %237 : vector<1x128xf32>
    %239 = arith.mulf %235, %218 : vector<1x128xf32>
    %240 = arith.mulf %234, %238 : vector<1x128xf32>
    %241 = arith.addf %239, %240 : vector<1x128xf32>
    %242 = math.tanh %241 : vector<1x128xf32>
    %243 = arith.mulf %236, %242 : vector<1x128xf32>
    %c7_76 = arith.constant 7 : index
    %c0_77 = arith.constant 0 : index
    %244 = vector.load %arg7[%c7_76, %c0_77] : memref<8x512xf32, #tpu.memory_space<vmem>>, vector<1x512xf32>
    %245 = arith.addf %6, %244 : vector<1x512xf32>
    %c0_78 = arith.constant 0 : index
    %c0_79 = arith.constant 0 : index
    %246 = vector.load %arg2[%c0_78, %c0_79] : memref<128x512xf32, #tpu.memory_space<vmem>>, vector<128x512xf32>
    %cst_80 = arith.constant dense<0.000000e+00> : vector<1x512xf32>
    %247 = tpu.matmul %243, %246, %cst_80 {dimension_numbers = #tpu.dot_dimension_numbers<[1], [0], [0], [1], [0, 0, 1, 1], [], []>} : vector<1x128xf32>, vector<128x512xf32>, vector<1x512xf32> -> vector<1x512xf32>
    %248 = arith.addf %245, %247 : vector<1x512xf32>
    %249 = vector.extract_strided_slice %248 {offsets = [0, 0], sizes = [1, 384], strides = [1, 1]} : vector<1x512xf32> to vector<1x384xf32>
    %cst_81 = arith.constant 5.000000e-01 : f32
    %250 = vector.broadcast %cst_81 : f32 to vector<1x384xf32>
    %251 = arith.mulf %250, %249 : vector<1x384xf32>
    %252 = math.tanh %251 : vector<1x384xf32>
    %cst_82 = arith.constant 5.000000e-01 : f32
    %253 = vector.broadcast %cst_82 : f32 to vector<1x384xf32>
    %254 = arith.mulf %253, %252 : vector<1x384xf32>
    %cst_83 = arith.constant 5.000000e-01 : f32
    %255 = vector.broadcast %cst_83 : f32 to vector<1x384xf32>
    %256 = arith.addf %254, %255 : vector<1x384xf32>
    %257 = vector.extract_strided_slice %256 {offsets = [0, 0], sizes = [1, 128], strides = [1, 1]} : vector<1x384xf32> to vector<1x128xf32>
    %258 = vector.extract_strided_slice %256 {offsets = [0, 128], sizes = [1, 128], strides = [1, 1]} : vector<1x384xf32> to vector<1x128xf32>
    %259 = vector.extract_strided_slice %256 {offsets = [0, 256], sizes = [1, 128], strides = [1, 1]} : vector<1x384xf32> to vector<1x128xf32>
    %260 = vector.extract_strided_slice %248 {offsets = [0, 384], sizes = [1, 128], strides = [1, 1]} : vector<1x512xf32> to vector<1x128xf32>
    %261 = math.tanh %260 : vector<1x128xf32>
    %262 = arith.mulf %258, %241 : vector<1x128xf32>
    %263 = arith.mulf %257, %261 : vector<1x128xf32>
    %264 = arith.addf %262, %263 : vector<1x128xf32>
    %265 = math.tanh %264 : vector<1x128xf32>
    %266 = arith.mulf %259, %265 : vector<1x128xf32>
    %c7_84 = arith.constant 7 : index
    %c0_85 = arith.constant 0 : index
    %267 = vector.load %arg7[%c7_84, %c0_85] : memref<8x512xf32, #tpu.memory_space<vmem>>, vector<1x512xf32>
    %268 = arith.addf %6, %267 : vector<1x512xf32>
    %c0_86 = arith.constant 0 : index
    %c0_87 = arith.constant 0 : index
    %269 = vector.load %arg2[%c0_86, %c0_87] : memref<128x512xf32, #tpu.memory_space<vmem>>, vector<128x512xf32>
    %cst_88 = arith.constant dense<0.000000e+00> : vector<1x512xf32>
    %270 = tpu.matmul %266, %269, %cst_88 {dimension_numbers = #tpu.dot_dimension_numbers<[1], [0], [0], [1], [0, 0, 1, 1], [], []>} : vector<1x128xf32>, vector<128x512xf32>, vector<1x512xf32> -> vector<1x512xf32>
    %271 = arith.addf %268, %270 : vector<1x512xf32>
    %272 = vector.extract_strided_slice %271 {offsets = [0, 0], sizes = [1, 384], strides = [1, 1]} : vector<1x512xf32> to vector<1x384xf32>
    %cst_89 = arith.constant 5.000000e-01 : f32
    %273 = vector.broadcast %cst_89 : f32 to vector<1x384xf32>
    %274 = arith.mulf %273, %272 : vector<1x384xf32>
    %275 = math.tanh %274 : vector<1x384xf32>
    %cst_90 = arith.constant 5.000000e-01 : f32
    %276 = vector.broadcast %cst_90 : f32 to vector<1x384xf32>
    %277 = arith.mulf %276, %275 : vector<1x384xf32>
    %cst_91 = arith.constant 5.000000e-01 : f32
    %278 = vector.broadcast %cst_91 : f32 to vector<1x384xf32>
    %279 = arith.addf %277, %278 : vector<1x384xf32>
    %280 = vector.extract_strided_slice %279 {offsets = [0, 0], sizes = [1, 128], strides = [1, 1]} : vector<1x384xf32> to vector<1x128xf32>
    %281 = vector.extract_strided_slice %279 {offsets = [0, 128], sizes = [1, 128], strides = [1, 1]} : vector<1x384xf32> to vector<1x128xf32>
    %282 = vector.extract_strided_slice %279 {offsets = [0, 256], sizes = [1, 128], strides = [1, 1]} : vector<1x384xf32> to vector<1x128xf32>
    %283 = vector.extract_strided_slice %271 {offsets = [0, 384], sizes = [1, 128], strides = [1, 1]} : vector<1x512xf32> to vector<1x128xf32>
    %284 = math.tanh %283 : vector<1x128xf32>
    %285 = arith.mulf %281, %264 : vector<1x128xf32>
    %286 = arith.mulf %280, %284 : vector<1x128xf32>
    %287 = arith.addf %285, %286 : vector<1x128xf32>
    %288 = math.tanh %287 : vector<1x128xf32>
    %289 = arith.mulf %282, %288 : vector<1x128xf32>
    %c0_i32_92 = arith.constant 0 : i32
    %290 = tpu.memref_slice %arg9[%c0_i32_92] : memref<1x!tpu.dma_semaphore, #tpu.memory_space<semaphore_mem>> -> memref<1x!tpu.dma_semaphore, #tpu.memory_space<semaphore_mem>>
    %291 = tpu.memref_squeeze %290 : memref<1x!tpu.dma_semaphore, #tpu.memory_space<semaphore_mem>> -> memref<!tpu.dma_semaphore, #tpu.memory_space<semaphore_mem>>
    tpu.wait_dma2 semaphore(%291 : memref<!tpu.dma_semaphore, #tpu.memory_space<semaphore_mem>>) src(%arg5 : memref<32x1024xf32, #tpu.memory_space<any>>) dst(%arg8 : memref<32x1024xf32, #tpu.memory_space<vmem>>)
    %292 = vector.extract_strided_slice %289 {offsets = [0, 0], sizes = [1, 32], strides = [1, 1]} : vector<1x128xf32> to vector<1x32xf32>
    %c0_93 = arith.constant 0 : index
    %c0_94 = arith.constant 0 : index
    %293 = vector.load %arg8[%c0_93, %c0_94] : memref<32x1024xf32, #tpu.memory_space<vmem>>, vector<32x1024xf32>
    %cst_95 = arith.constant dense<0.000000e+00> : vector<1x1024xf32>
    %294 = tpu.matmul %292, %293, %cst_95 {dimension_numbers = #tpu.dot_dimension_numbers<[1], [0], [0], [1], [0, 0, 1, 1], [], []>} : vector<1x32xf32>, vector<32x1024xf32>, vector<1x1024xf32> -> vector<1x1024xf32>
    %c0_96 = arith.constant 0 : index
    %c0_97 = arith.constant 0 : index
    %295 = vector.load %arg4[%c0_96, %c0_97] : memref<1x1024xf32, #tpu.memory_space<vmem>>, vector<1x1024xf32>
    %296 = arith.addf %294, %295 : vector<1x1024xf32>
    %c0_98 = arith.constant 0 : index
    %c0_99 = arith.constant 0 : index
    %297 = vector.load %arg6[%c0_98, %c0_99] : memref<1x1024xf32, #tpu.memory_space<vmem>>, vector<1x1024xf32>
    tpu.vector_store %arg6[%c0_98, %c0_99], %296 {strides = array<i32>} : memref<1x1024xf32, #tpu.memory_space<vmem>>, vector<1x1024xf32>,
    return
  }
}

</mosaic_0001>

<llo_original>
// kernel: tpu_custom_call.1
$region0: #{tpu_custom_call.1}
  #allocation0 [shape = 'u32[]', space=smem, size = 0x4, offset = 0x4, fixed_abs, tag = 'smem constant byte address 0x4 - core index']
  #allocation1 [shape = 'u32[144,128]{1,0:T(1,128)}', space=vmem, size = 0x12000, scoped, tag = 'internal scratch']
  #allocation2 [shape = 'f32[8,512]{1,0:T(8,128)}', space=vmem, size = 0x4000, scoped, tag = 'scratch operand']
  #allocation3 [shape = 'f32[32,1024]{1,0:T(8,128)}', space=vmem, size = 0x20000, scoped, tag = 'scratch operand']
  #allocation4 [shape = 's32[1]{0}', space=sflag, size = 0x4, scoped, tag = 'scratch operand']
  #allocation14 [shape = 's32[]', space=sflag, size = 0x4, offset = 0, fixed_abs, tag = 'sflag constant byte address 0x0 - dummy sync flag']
  #allocation15 [shape = 's32[]', space=sflag, size = 0x4, offset = 0, fixed_abs, tag = 'sflag constant byte address 0x0 - dummy sync flag']
  #allocation16 [shape = 'u32[]', space=smem, size = 0x4, offset = 0x44, fixed_abs, tag = 'smem constant byte address 0x44 - assertion arg 0']
  #allocation17 [shape = 'u32[]', space=smem, size = 0x4, offset = 0x48, fixed_abs, tag = 'smem constant byte address 0x48 - assertion arg 1']
  %s0 = inlined_call_operand.hbm [shape: f32[8,32], index: 0, kind: input, shape index: {}]
  %s1 = inlined_call_operand.hbm [shape: f32[32,512], index: 1, kind: input, shape index: {}]
  %s2 = inlined_call_operand.hbm [shape: f32[128,512], index: 2, kind: input, shape index: {}]
  %s3 = inlined_call_operand.vmem [shape: f32[1,512], index: 3, kind: input, shape index: {}]
  %s4 = inlined_call_operand.hbm [shape: f32[1,1024], index: 4, kind: input, shape index: {}]
  %s5 = inlined_call_operand.hbm [shape: f32[32,1024], index: 5, kind: input, shape index: {}]
  %s6 = inlined_call_operand.hbm [shape: f32[1,1024], index: 6, kind: output, shape index: {}]
  %s7 = sld [smem:[#allocation0]]
  $region50: #{tpu_custom_call.1} parent=0
    _
  %s9 = ssub.s32 1, %s7
  %s10 = scalar_select 0, %s9, %s7
  $region1: #{tpu_custom_call.1} parent=0
    #allocation5 [shape = 'u8[4096]{0}', space=vmem, size = 0x1000, scoped, tag = 'input window, operand 0, single buffered']
    #allocation6 [shape = 's32[1]{0}', space=sflag, size = 0x4, scoped, tag = 'scoped memory for tpu_custom_call.1']
    #allocation7 [shape = 's32[1]{0}', space=sflag, size = 0x4, scoped, tag = 'scoped memory for tpu_custom_call.1']
    #allocation8 [shape = 'u8[65536]{0}', space=vmem, size = 0x10000, scoped, tag = 'input window, operand 1, single buffered']
    #allocation9 [shape = 's32[1]{0}', space=sflag, size = 0x4, scoped, tag = 'scoped memory for tpu_custom_call.1']
    #allocation10 [shape = 'u8[262144]{0}', space=vmem, size = 0x40000, scoped, tag = 'input window, operand 2, single buffered']
    #allocation11 [shape = 'u8[4096]{0}', space=vmem, size = 0x1000, scoped, tag = 'input window, operand 4, single buffered']
    #allocation12 [shape = 's32[1]{0}', space=sflag, size = 0x4, scoped, tag = 'scoped memory for tpu_custom_call.1']
    #allocation13 [shape = 'u8[4096]{0}', space=vmem, size = 0x1000, scoped, tag = 'output window, operand 0, single buffered']
    %11 = vsyncpa [#allocation6], 0
    %12 = vsyncpa [#allocation9], 0
    %13 = vsyncpa [#allocation12], 0
    %14 = vsyncpa [#allocation7], 0
    // Predicated region
    $region2: #{tpu_custom_call.1} parent=1 // pred_check
      _
    $region3: #{tpu_custom_call.1} parent=1 // pred_check_branch
      %16 = sbr.rel (0) target = $region5
    $region4: #{tpu_custom_call.1} parent=1 // pred_region
      %s18 = ssub.s32 128, 128
      %19 = vsyncadd [#allocation6], %s18
      %s21 = sshll.u32 [#allocation5], 4
      %s22 = int_to_ptr.vmem [resolvable:$true] %s21
      %24 = dma.hbm_to_vmem [thread:$0]  %s0, 128, %s22, [#allocation6]
    $region5: #{tpu_custom_call.1} parent=1 // pred_fallthru
      _
    // Predicated region
    $region6: #{tpu_custom_call.1} parent=1 // pred_check
      _
    $region7: #{tpu_custom_call.1} parent=1 // pred_check_branch
      %26 = sbr.rel (0) target = $region9
    $region8: #{tpu_custom_call.1} parent=1 // pred_region
      %s28 = ssub.s32 2048, 2048
      %29 = vsyncadd [#allocation9], %s28
      %s30 = sshll.u32 [#allocation8], 4
      %s31 = int_to_ptr.vmem [resolvable:$true] %s30
      %36 = dma.hbm_to_vmem [thread:$0]  %s1, 2048, %s31, [#allocation9], 512, 512, 32
    $region9: #{tpu_custom_call.1} parent=1 // pred_fallthru
      _
    // Predicated region
    $region10: #{tpu_custom_call.1} parent=1 // pred_check
      _
    $region11: #{tpu_custom_call.1} parent=1 // pred_check_branch
      %38 = sbr.rel (0) target = $region13
    $region12: #{tpu_custom_call.1} parent=1 // pred_region
      %s40 = ssub.s32 8192, 8192
      %41 = vsyncadd [#allocation9], %s40
      %s42 = sshll.u32 [#allocation10], 4
      %s43 = int_to_ptr.vmem [resolvable:$true] %s42
      %48 = dma.hbm_to_vmem [thread:$0]  %s2, 8192, %s43, [#allocation9], 512, 512, 32
    $region13: #{tpu_custom_call.1} parent=1 // pred_fallthru
      _
    // Predicated region
    $region14: #{tpu_custom_call.1} parent=1 // pred_check
      _
    $region15: #{tpu_custom_call.1} parent=1 // pred_check_branch
      %50 = sbr.rel (0) target = $region17
    $region16: #{tpu_custom_call.1} parent=1 // pred_region
      _
    $region17: #{tpu_custom_call.1} parent=1 // pred_fallthru
      _
    // Predicated region
    $region18: #{tpu_custom_call.1} parent=1 // pred_check
      _
    $region19: #{tpu_custom_call.1} parent=1 // pred_check_branch
      %52 = sbr.rel (0) target = $region21
    $region20: #{tpu_custom_call.1} parent=1 // pred_region
      %s54 = ssub.s32 128, 128
      %55 = vsyncadd [#allocation12], %s54
      %s57 = sshll.u32 [#allocation11], 4
      %s58 = int_to_ptr.vmem [resolvable:$true] %s57
      %60 = dma.hbm_to_vmem [thread:$0]  %s4, 128, %s58, [#allocation12]
    $region21: #{tpu_custom_call.1} parent=1 // pred_fallthru
      _
    // Predicated region
    $region22: #{tpu_custom_call.1} parent=1 // pred_check
      _
    $region23: #{tpu_custom_call.1} parent=1 // pred_check_branch
      %62 = sbr.rel (0) target = $region25
    $region24: #{tpu_custom_call.1} parent=1 // pred_region
      %63 = dma.done [#allocation6], 128
    $region25: #{tpu_custom_call.1} parent=1 // pred_fallthru
      _
    // Predicated region
    $region26: #{tpu_custom_call.1} parent=1 // pred_check
      _
    $region27: #{tpu_custom_call.1} parent=1 // pred_check_branch
      %65 = sbr.rel (0) target = $region29
    $region28: #{tpu_custom_call.1} parent=1 // pred_region
      %66 = dma.done [#allocation9], 2048
    $region29: #{tpu_custom_call.1} parent=1 // pred_fallthru
      _
    // Predicated region
    $region30: #{tpu_custom_call.1} parent=1 // pred_check
      _
    $region31: #{tpu_custom_call.1} parent=1 // pred_check_branch
      %68 = sbr.rel (0) target = $region33
    $region32: #{tpu_custom_call.1} parent=1 // pred_region
      %69 = dma.done [#allocation9], 8192
    $region33: #{tpu_custom_call.1} parent=1 // pred_fallthru
      _
    // Predicated region
    $region34: #{tpu_custom_call.1} parent=1 // pred_check
      _
    $region35: #{tpu_custom_call.1} parent=1 // pred_check_branch
      %71 = sbr.rel (0) target = $region37
    $region36: #{tpu_custom_call.1} parent=1 // pred_region
      %72 = dma.done [#allocation12], 128
    $region37: #{tpu_custom_call.1} parent=1 // pred_fallthru
      _
    // Predicated region
    $region38: #{tpu_custom_call.1} parent=1 // pred_check
      _
    $region39: #{tpu_custom_call.1} parent=1 // pred_check_branch
      %74 = sbr.rel target = $region41
    $region40: #{tpu_custom_call.1} parent=1 // pred_region
      %75 = sst [smem:[#allocation16]] [#allocation15]
      %76 = sst [smem:[#allocation17]] [#allocation14]
    $region41: #{tpu_custom_call.1} parent=1 // pred_fallthru
      _
    %78 = shalt.err (0)
    %s80 = sshll.u32 [#allocation3], 4
    %s81 = int_to_ptr.vmem [resolvable:$true] %s80
    %83 = dma.hbm_to_vmem [thread:$0]  %s5, 4096, %s81, [#allocation4]
    %v84 = vld [vmem:[#allocation5] sm:$0xff]
    %v85 = vld [vmem:[#allocation8] sm:$0xff]
    %v86 = vld [vmem:[#allocation8 + $0x8] sm:$0xff]
    %v87 = vld [vmem:[#allocation8 + $0x10] sm:$0xff]
    %v88 = vld [vmem:[#allocation8 + $0x18] sm:$0xff]
    %v89 = vld [vmem:[#allocation8 + $0x20] sm:$0xff]
    %v90 = vld [vmem:[#allocation8 + $0x28] sm:$0xff]
    %v91 = vld [vmem:[#allocation8 + $0x30] sm:$0xff]
    %v92 = vld [vmem:[#allocation8 + $0x38] sm:$0xff]
    %v93 = vld [vmem:[#allocation8 + $0x40] sm:$0xff]
    %v94 = vld [vmem:[#allocation8 + $0x48] sm:$0xff]
    %v95 = vld [vmem:[#allocation8 + $0x50] sm:$0xff]
    %v96 = vld [vmem:[#allocation8 + $0x58] sm:$0xff]
    %v97 = vld [vmem:[#allocation8 + $0x60] sm:$0xff]
    %v98 = vld [vmem:[#allocation8 + $0x68] sm:$0xff]
    %v99 = vld [vmem:[#allocation8 + $0x70] sm:$0xff]
    %v100 = vld [vmem:[#allocation8 + $0x78] sm:$0xff]
    %vm101 = vcmask 261120
    %v103 = vsel %vm101, %v84, 0
    %105 = vmatprep.subr.mxu0 0.0
    %106 = vmatpush1.msra.mxu0 0.0
    %107 = vmatprep.subr.mxu0 0.0
    %108 = vmatpush1.msra.mxu0 0.0
    %109 = vmatprep.subr.mxu0 0.0
    %110 = vmatpush1.msra.mxu0 0.0
    %111 = vmatprep.subr.mxu0 0.0
    %112 = vmatpush1.msra.mxu0 0.0
    %113 = vmatprep.subr.mxu0 0.0
    %114 = vmatpush1.msra.mxu0 0.0
    %115 = vmatprep.subr.mxu0 0.0
    %116 = vmatpush1.msra.mxu0 0.0
    %117 = vmatprep.subr.mxu0 0.0
    %118 = vmatpush1.msra.mxu0 0.0
    %119 = vmatprep.subr.mxu0 0.0
    %120 = vmatpush1.msra.mxu0 0.0
    %121 = vmatprep.subr.mxu0 0.0
    %122 = vmatpush1.msra.mxu0 0.0
    %123 = vmatprep.subr.mxu0 0.0
    %124 = vmatpush1.msra.mxu0 0.0
    %125 = vmatprep.subr.mxu0 0.0
    %126 = vmatpush1.msra.mxu0 0.0
    %127 = vmatprep.subr.mxu0 0.0
    %128 = vmatpush1.msra.mxu0 0.0
    %129 = vmatprep.subr.mxu0 %v98
    %130 = vmatpush1.msra.mxu0 %v97
    %131 = vmatprep.subr.mxu0 %v94
    %132 = vmatpush1.msra.mxu0 %v93
    %133 = vmatprep.subr.mxu0 %v90
    %134 = vmatpush1.msra.mxu0 %v89
    %135 = vmatprep.subr.mxu0 %v86
    %136 = vmatpush1.msra.mxu0 %v85
    %137 = vmatprep.subr.mxu0 0.0
    %138 = vmatpush2.msra.mxu0 0.0
    %139 = vmatprep.subr.mxu0 0.0
    %140 = vmatpush2.msra.mxu0 0.0
    %141 = vmatprep.subr.mxu0 0.0
    %142 = vmatpush2.msra.mxu0 0.0
    %143 = vmatprep.subr.mxu0 0.0
    %144 = vmatpush2.msra.mxu0 0.0
    %145 = vmatprep.subr.mxu0 0.0
    %146 = vmatpush2.msra.mxu0 0.0
    %147 = vmatprep.subr.mxu0 0.0
    %148 = vmatpush2.msra.mxu0 0.0
    %149 = vmatprep.subr.mxu0 0.0
    %150 = vmatpush2.msra.mxu0 0.0
    %151 = vmatprep.subr.mxu0 0.0
    %152 = vmatpush2.msra.mxu0 0.0
    %153 = vmatprep.subr.mxu0 0.0
    %154 = vmatpush2.msra.mxu0 0.0
    %155 = vmatprep.subr.mxu0 0.0
    %156 = vmatpush2.msra.mxu0 0.0
    %157 = vmatprep.subr.mxu0 0.0
    %158 = vmatpush2.msra.mxu0 0.0
    %159 = vmatprep.subr.mxu0 0.0
    %160 = vmatpush2.msra.mxu0 0.0
    %161 = vmatprep.subr.mxu0 0.0
    %162 = vmatpush2.msra.mxu0 0.0
    %163 = vmatprep.subr.mxu0 0.0
    %164 = vmatpush2.msra.mxu0 0.0
    %165 = vmatprep.subr.mxu0 0.0
    %166 = vmatpush2.msra.mxu0 0.0
    %167 = vmatprep.subr.mxu0 0.0
    %168 = vmatpush2.msra.mxu0 0.0
    %169 = vmatprep.mubr.f32.mxu0 0.0
    %170 = vmatmul.mubr.f32.gmra.mxu0 %v103
    %v171 = vpop.f32.mrf.mxu0
    %v172 = vadd.f32 0.0, %v171
    %v173 = vpop.f32.mrf.mxu0
    %v174 = vadd.f32 0.0, %v173
    %175 = vdwg.mxu0
    %176 = vmatprep.subr.mxu0 0.0
    %177 = vmatpush1.msra.mxu0 0.0
    %178 = vmatprep.subr.mxu0 0.0
    %179 = vmatpush1.msra.mxu0 0.0
    %180 = vmatprep.subr.mxu0 0.0
    %181 = vmatpush1.msra.mxu0 0.0
    %182 = vmatprep.subr.mxu0 0.0
    %183 = vmatpush1.msra.mxu0 0.0
    %184 = vmatprep.subr.mxu0 0.0
    %185 = vmatpush1.msra.mxu0 0.0
    %186 = vmatprep.subr.mxu0 0.0
    %187 = vmatpush1.msra.mxu0 0.0
    %188 = vmatprep.subr.mxu0 0.0
    %189 = vmatpush1.msra.mxu0 0.0
    %190 = vmatprep.subr.mxu0 0.0
    %191 = vmatpush1.msra.mxu0 0.0
    %192 = vmatprep.subr.mxu0 0.0
    %193 = vmatpush1.msra.mxu0 0.0
    %194 = vmatprep.subr.mxu0 0.0
    %195 = vmatpush1.msra.mxu0 0.0
    %196 = vmatprep.subr.mxu0 0.0
    %197 = vmatpush1.msra.mxu0 0.0
    %198 = vmatprep.subr.mxu0 0.0
    %199 = vmatpush1.msra.mxu0 0.0
    %200 = vmatprep.subr.mxu0 %v100
    %201 = vmatpush1.msra.mxu0 %v99
    %202 = vmatprep.subr.mxu0 %v96
    %203 = vmatpush1.msra.mxu0 %v95
    %204 = vmatprep.subr.mxu0 %v92
    %205 = vmatpush1.msra.mxu0 %v91
    %206 = vmatprep.subr.mxu0 %v88
    %207 = vmatpush1.msra.mxu0 %v87
    %208 = vmatprep.subr.mxu0 0.0
    %209 = vmatpush2.msra.mxu0 0.0
    %210 = vmatprep.subr.mxu0 0.0
    %211 = vmatpush2.msra.mxu0 0.0
    %212 = vmatprep.subr.mxu0 0.0
    %213 = vmatpush2.msra.mxu0 0.0
    %214 = vmatprep.subr.mxu0 0.0
    %215 = vmatpush2.msra.mxu0 0.0
    %216 = vmatprep.subr.mxu0 0.0
    %217 = vmatpush2.msra.mxu0 0.0
    %218 = vmatprep.subr.mxu0 0.0
    %219 = vmatpush2.msra.mxu0 0.0
    %220 = vmatprep.subr.mxu0 0.0
    %221 = vmatpush2.msra.mxu0 0.0
    %222 = vmatprep.subr.mxu0 0.0
    %223 = vmatpush2.msra.mxu0 0.0
    %224 = vmatprep.subr.mxu0 0.0
    %225 = vmatpush2.msra.mxu0 0.0
    %226 = vmatprep.subr.mxu0 0.0
    %227 = vmatpush2.msra.mxu0 0.0
    %228 = vmatprep.subr.mxu0 0.0
    %229 = vmatpush2.msra.mxu0 0.0
    %230 = vmatprep.subr.mxu0 0.0
    %231 = vmatpush2.msra.mxu0 0.0
    %232 = vmatprep.subr.mxu0 0.0
    %233 = vmatpush2.msra.mxu0 0.0
    %234 = vmatprep.subr.mxu0 0.0
    %235 = vmatpush2.msra.mxu0 0.0
    %236 = vmatprep.subr.mxu0 0.0
    %237 = vmatpush2.msra.mxu0 0.0
    %238 = vmatprep.subr.mxu0 0.0
    %239 = vmatpush2.msra.mxu0 0.0
    %240 = vmatprep.mubr.f32.mxu0 0.0
    %241 = vmatmul.mubr.f32.gmra.mxu0 %v103
    %v242 = vpop.f32.mrf.mxu0
    %v243 = vadd.f32 0.0, %v242
    %v244 = vpop.f32.mrf.mxu0
    %v245 = vadd.f32 0.0, %v244
    %246 = vdwg.mxu0
    %247 = vst [vmem:[#allocation2] sm:$0xff] %v172
    %248 = vst [vmem:[#allocation2 + $0x8] sm:$0xff] %v174
    %249 = vst [vmem:[#allocation2 + $0x10] sm:$0xff] %v243
    %250 = vst [vmem:[#allocation2 + $0x18] sm:$0xff] %v245
    %v251 = vld [vmem:[%s3] sm:$0xf]
    %v252 = vlaneseq
    %v253 = vand.u32 %v252, 127
    %v254 = vld [vmem:[#allocation2] ss:$8 sm:$0xf]
    %v255 = vadd.f32 %v251, %v254
    %v256 = vld [vmem:[#allocation10] sm:$0xff]
    %v257 = vld [vmem:[#allocation10 + $0x8] sm:$0xff]
    %v258 = vld [vmem:[#allocation10 + $0x10] sm:$0xff]
    %v259 = vld [vmem:[#allocation10 + $0x18] sm:$0xff]
    %v260 = vld [vmem:[#allocation10 + $0x20] sm:$0xff]
    %v261 = vld [vmem:[#allocation10 + $0x28] sm:$0xff]
    %v262 = vld [vmem:[#allocation10 + $0x30] sm:$0xff]
    %v263 = vld [vmem:[#allocation10 + $0x38] sm:$0xff]
    %v264 = vld [vmem:[#allocation10 + $0x40] sm:$0xff]
    %v265 = vld [vmem:[#allocation10 + $0x48] sm:$0xff]
    %v266 = vld [vmem:[#allocation10 + $0x50] sm:$0xff]
    %v267 = vld [vmem:[#allocation10 + $0x58] sm:$0xff]
    %v268 = vld [vmem:[#allocation10 + $0x60] sm:$0xff]
    %v269 = vld [vmem:[#allocation10 + $0x68] sm:$0xff]
    %v270 = vld [vmem:[#allocation10 + $0x70] sm:$0xff]
    %v271 = vld [vmem:[#allocation10 + $0x78] sm:$0xff]
    %v272 = vld [vmem:[#allocation10 + $0x80] sm:$0xff]
    %v273 = vld [vmem:[#allocation10 + $0x88] sm:$0xff]
    %v274 = vld [vmem:[#allocation10 + $0x90] sm:$0xff]
    %v275 = vld [vmem:[#allocation10 + $0x98] sm:$0xff]
    %v276 = vld [vmem:[#allocation10 + $0xa0] sm:$0xff]
    %v277 = vld [vmem:[#allocation10 + $0xa8] sm:$0xff]
    %v278 = vld [vmem:[#allocation10 + $0xb0] sm:$0xff]
    %v279 = vld [vmem:[#allocation10 + $0xb8] sm:$0xff]
    %v280 = vld [vmem:[#allocation10 + $0xc0] sm:$0xff]
    %v281 = vld [vmem:[#allocation10 + $0xc8] sm:$0xff]
    %v282 = vld [vmem:[#allocation10 + $0xd0] sm:$0xff]
    %v283 = vld [vmem:[#allocation10 + $0xd8] sm:$0xff]
    %v284 = vld [vmem:[#allocation10 + $0xe0] sm:$0xff]
    %v285 = vld [vmem:[#allocation10 + $0xe8] sm:$0xff]
    %v286 = vld [vmem:[#allocation10 + $0xf0] sm:$0xff]
    %v287 = vld [vmem:[#allocation10 + $0xf8] sm:$0xff]
    %v288 = vld [vmem:[#allocation10 + $0x100] sm:$0xff]
    %v289 = vld [vmem:[#allocation10 + $0x108] sm:$0xff]
    %v290 = vld [vmem:[#allocation10 + $0x110] sm:$0xff]
    %v291 = vld [vmem:[#allocation10 + $0x118] sm:$0xff]
    %v292 = vld [vmem:[#allocation10 + $0x120] sm:$0xff]
    %v293 = vld [vmem:[#allocation10 + $0x128] sm:$0xff]
    %v294 = vld [vmem:[#allocation10 + $0x130] sm:$0xff]
    %v295 = vld [vmem:[#allocation10 + $0x138] sm:$0xff]
    %v296 = vld [vmem:[#allocation10 + $0x140] sm:$0xff]
    %v297 = vld [vmem:[#allocation10 + $0x148] sm:$0xff]
    %v298 = vld [vmem:[#allocation10 + $0x150] sm:$0xff]
    %v299 = vld [vmem:[#allocation10 + $0x158] sm:$0xff]
    %v300 = vld [vmem:[#allocation10 + $0x160] sm:$0xff]
    %v301 = vld [vmem:[#allocation10 + $0x168] sm:$0xff]
    %v302 = vld [vmem:[#allocation10 + $0x170] sm:$0xff]
    %v303 = vld [vmem:[#allocation10 + $0x178] sm:$0xff]
    %v304 = vld [vmem:[#allocation10 + $0x180] sm:$0xff]
    %v305 = vld [vmem:[#allocation10 + $0x188] sm:$0xff]
    %v306 = vld [vmem:[#allocation10 + $0x190] sm:$0xff]
    %v307 = vld [vmem:[#allocation10 + $0x198] sm:$0xff]
    %v308 = vld [vmem:[#allocation10 + $0x1a0] sm:$0xff]
    %v309 = vld [vmem:[#allocation10 + $0x1a8] sm:$0xff]
    %v310 = vld [vmem:[#allocation10 + $0x1b0] sm:$0xff]
    %v311 = vld [vmem:[#allocation10 + $0x1b8] sm:$0xff]
    %v312 = vld [vmem:[#allocation10 + $0x1c0] sm:$0xff]
    %v313 = vld [vmem:[#allocation10 + $0x1c8] sm:$0xff]
    %v314 = vld [vmem:[#allocation10 + $0x1d0] sm:$0xff]
    %v315 = vld [vmem:[#allocation10 + $0x1d8] sm:$0xff]
    %v316 = vld [vmem:[#allocation10 + $0x1e0] sm:$0xff]
    %v317 = vld [vmem:[#allocation10 + $0x1e8] sm:$0xff]
    %v318 = vld [vmem:[#allocation10 + $0x1f0] sm:$0xff]
    %v319 = vld [vmem:[#allocation10 + $0x1f8] sm:$0xff]
    %320 = vmatprep.subr.mxu0 %v317
    %321 = vmatpush1.msra.mxu0 %v316
    %322 = vmatprep.subr.mxu0 %v313
    %323 = vmatpush1.msra.mxu0 %v312
    %324 = vmatprep.subr.mxu0 %v309
    %325 = vmatpush1.msra.mxu0 %v308
    %326 = vmatprep.subr.mxu0 %v305
    %327 = vmatpush1.msra.mxu0 %v304
    %328 = vmatprep.subr.mxu0 %v301
    %329 = vmatpush1.msra.mxu0 %v300
    %330 = vmatprep.subr.mxu0 %v297
    %331 = vmatpush1.msra.mxu0 %v296
    %332 = vmatprep.subr.mxu0 %v293
    %333 = vmatpush1.msra.mxu0 %v292
    %334 = vmatprep.subr.mxu0 %v289
    %335 = vmatpush1.msra.mxu0 %v288
    %336 = vmatprep.subr.mxu0 %v285
    %337 = vmatpush1.msra.mxu0 %v284
    %338 = vmatprep.subr.mxu0 %v281
    %339 = vmatpush1.msra.mxu0 %v280
    %340 = vmatprep.subr.mxu0 %v277
    %341 = vmatpush1.msra.mxu0 %v276
    %342 = vmatprep.subr.mxu0 %v273
    %343 = vmatpush1.msra.mxu0 %v272
    %344 = vmatprep.subr.mxu0 %v269
    %345 = vmatpush1.msra.mxu0 %v268
    %346 = vmatprep.subr.mxu0 %v265
    %347 = vmatpush1.msra.mxu0 %v264
    %348 = vmatprep.subr.mxu0 %v261
    %349 = vmatpush1.msra.mxu0 %v260
    %350 = vmatprep.subr.mxu0 %v257
    %351 = vmatpush1.msra.mxu0 %v256
    %352 = vmatprep.subr.mxu0 0.0
    %353 = vmatpush2.msra.mxu0 0.0
    %354 = vmatprep.subr.mxu0 0.0
    %355 = vmatpush2.msra.mxu0 0.0
    %356 = vmatprep.subr.mxu0 0.0
    %357 = vmatpush2.msra.mxu0 0.0
    %358 = vmatprep.subr.mxu0 0.0
    %359 = vmatpush2.msra.mxu0 0.0
    %360 = vmatprep.subr.mxu0 0.0
    %361 = vmatpush2.msra.mxu0 0.0
    %362 = vmatprep.subr.mxu0 0.0
    %363 = vmatpush2.msra.mxu0 0.0
    %364 = vmatprep.subr.mxu0 0.0
    %365 = vmatpush2.msra.mxu0 0.0
    %366 = vmatprep.subr.mxu0 0.0
    %367 = vmatpush2.msra.mxu0 0.0
    %368 = vmatprep.subr.mxu0 0.0
    %369 = vmatpush2.msra.mxu0 0.0
    %370 = vmatprep.subr.mxu0 0.0
    %371 = vmatpush2.msra.mxu0 0.0
    %372 = vmatprep.subr.mxu0 0.0
    %373 = vmatpush2.msra.mxu0 0.0
    %374 = vmatprep.subr.mxu0 0.0
    %375 = vmatpush2.msra.mxu0 0.0
    %376 = vmatprep.subr.mxu0 0.0
    %377 = vmatpush2.msra.mxu0 0.0
    %378 = vmatprep.subr.mxu0 0.0
    %379 = vmatpush2.msra.mxu0 0.0
    %380 = vmatprep.subr.mxu0 0.0
    %381 = vmatpush2.msra.mxu0 0.0
    %382 = vmatprep.subr.mxu0 0.0
    %383 = vmatpush2.msra.mxu0 0.0
    %384 = vmatprep.mubr.f32.mxu0 0.0
    %385 = vmatmul.mubr.f32.gmra.mxu0 0.0
    %v386 = vpop.f32.mrf.mxu0
    %v387 = vadd.f32 0.0, %v386
    %v388 = vpop.f32.mrf.mxu0
    %v389 = vadd.f32 0.0, %v388
    %390 = vdwg.mxu0
    %391 = vmatprep.subr.mxu0 %v319
    %392 = vmatpush1.msra.mxu0 %v318
    %393 = vmatprep.subr.mxu0 %v315
    %394 = vmatpush1.msra.mxu0 %v314
    %395 = vmatprep.subr.mxu0 %v311
    %396 = vmatpush1.msra.mxu0 %v310
    %397 = vmatprep.subr.mxu0 %v307
    %398 = vmatpush1.msra.mxu0 %v306
    %399 = vmatprep.subr.mxu0 %v303
    %400 = vmatpush1.msra.mxu0 %v302
    %401 = vmatprep.subr.mxu0 %v299
    %402 = vmatpush1.msra.mxu0 %v298
    %403 = vmatprep.subr.mxu0 %v295
    %404 = vmatpush1.msra.mxu0 %v294
    %405 = vmatprep.subr.mxu0 %v291
    %406 = vmatpush1.msra.mxu0 %v290
    %407 = vmatprep.subr.mxu0 %v287
    %408 = vmatpush1.msra.mxu0 %v286
    %409 = vmatprep.subr.mxu0 %v283
    %410 = vmatpush1.msra.mxu0 %v282
    %411 = vmatprep.subr.mxu0 %v279
    %412 = vmatpush1.msra.mxu0 %v278
    %413 = vmatprep.subr.mxu0 %v275
    %414 = vmatpush1.msra.mxu0 %v274
    %415 = vmatprep.subr.mxu0 %v271
    %416 = vmatpush1.msra.mxu0 %v270
    %417 = vmatprep.subr.mxu0 %v267
    %418 = vmatpush1.msra.mxu0 %v266
    %419 = vmatprep.subr.mxu0 %v263
    %420 = vmatpush1.msra.mxu0 %v262
    %421 = vmatprep.subr.mxu0 %v259
    %422 = vmatpush1.msra.mxu0 %v258
    %423 = vmatprep.subr.mxu0 0.0
    %424 = vmatpush2.msra.mxu0 0.0
    %425 = vmatprep.subr.mxu0 0.0
    %426 = vmatpush2.msra.mxu0 0.0
    %427 = vmatprep.subr.mxu0 0.0
    %428 = vmatpush2.msra.mxu0 0.0
    %429 = vmatprep.subr.mxu0 0.0
    %430 = vmatpush2.msra.mxu0 0.0
    %431 = vmatprep.subr.mxu0 0.0
    %432 = vmatpush2.msra.mxu0 0.0
    %433 = vmatprep.subr.mxu0 0.0
    %434 = vmatpush2.msra.mxu0 0.0
    %435 = vmatprep.subr.mxu0 0.0
    %436 = vmatpush2.msra.mxu0 0.0
    %437 = vmatprep.subr.mxu0 0.0
    %438 = vmatpush2.msra.mxu0 0.0
    %439 = vmatprep.subr.mxu0 0.0
    %440 = vmatpush2.msra.mxu0 0.0
    %441 = vmatprep.subr.mxu0 0.0
    %442 = vmatpush2.msra.mxu0 0.0
    %443 = vmatprep.subr.mxu0 0.0
    %444 = vmatpush2.msra.mxu0 0.0
    %445 = vmatprep.subr.mxu0 0.0
    %446 = vmatpush2.msra.mxu0 0.0
    %447 = vmatprep.subr.mxu0 0.0
    %448 = vmatpush2.msra.mxu0 0.0
    %449 = vmatprep.subr.mxu0 0.0
    %450 = vmatpush2.msra.mxu0 0.0
    %451 = vmatprep.subr.mxu0 0.0
    %452 = vmatpush2.msra.mxu0 0.0
    %453 = vmatprep.subr.mxu0 0.0
    %454 = vmatpush2.msra.mxu0 0.0
    %455 = vmatprep.mubr.f32.mxu0 0.0
    %456 = vmatmul.mubr.f32.gmra.mxu0 0.0
    %v457 = vpop.f32.mrf.mxu0
    %v458 = vadd.f32 0.0, %v457
    %v459 = vpop.f32.mrf.mxu0
    %v460 = vadd.f32 0.0, %v459
    %461 = vdwg.mxu0
    %v466 = vcombine.low %v387, %v389
    %v467 = vcombine.low %v458, %v460
    %v469 = vunpack.c.l.s4 1966171168
    %v470 = vunpack.c.0.s8 %v469
    %v471 = vlaneseq
    %v472 = vshrl.u32 %v471, 7
    %v473 = vsub.s32 %v470, %v472
    %v474 = vrot.slane %v466, %v473
    %v476 = vunpack.c.l.s4 1966171168
    %v477 = vunpack.c.0.s8 %v476
    %v478 = vlaneseq
    %v479 = vshrl.u32 %v478, 7
    %v480 = vsub.s32 %v477, %v479
    %v481 = vrot.slane %v467, %v480
    %v482 = vcombine.low %v474, %v481
    %v484 = vunpack.c.l.s4 1966171168
    %v485 = vunpack.c.0.s8 %v484
    %v486 = vlaneseq
    %v487 = vshrl.u32 %v486, 7
    %v488 = vsub.s32 %v485, %v487
    %v489 = vrot.slane %v482, %v488
    %v491 = vadd.f32 %v255, %v489
    %v492 = vmul.f32 %v491, 0.5
    %v493 = vtanh.pop %v492
    %v494 = vmul.f32 %v493, 0.5
    %v495 = vadd.f32 %v494, 0.5
    %v497 = vrot.slane %v491, 3
    %v499 = vtanh.pop %v497
    %v501 = vrot.slane %v495, 1
    %v503 = vmul.f32 %v501, 0.0
    %v504 = vmul.f32 %v495, %v499
    %v505 = vadd.f32 %v503, %v504
    %v506 = vtanh.pop %v505
    %v507 = vrot.slane %v495, 2
    %v509 = vmul.f32 %v507, %v506
    %vm510 = vcmp.ge.s32.totalorder %v253, 32
    %vm511 = vcmp.lt.s32.totalorder %v253, 64
    %vm512 = vmand %vm510, %vm511
    %v513 = vsel %vm512, 1, 0
    %v514 = vcvt.s32.f32 %v513
    %v515 = vmul.f32 %v505, %v514
    %v516 = vmul.f32 %v509, %v514
    %s517 = scalar_lea.vmem [#allocation2], 1
    %v518 = vld [vmem:[%s517] ss:$8 sm:$0xf]
    %v519 = vadd.f32 %v251, %v518
    %520 = vmatprep.subr.mxu0 %v317
    %521 = vmatpush1.msra.mxu0 %v316
    %522 = vmatprep.subr.mxu0 %v313
    %523 = vmatpush1.msra.mxu0 %v312
    %524 = vmatprep.subr.mxu0 %v309
    %525 = vmatpush1.msra.mxu0 %v308
    %526 = vmatprep.subr.mxu0 %v305
    %527 = vmatpush1.msra.mxu0 %v304
    %528 = vmatprep.subr.mxu0 %v301
    %529 = vmatpush1.msra.mxu0 %v300
    %530 = vmatprep.subr.mxu0 %v297
    %531 = vmatpush1.msra.mxu0 %v296
    %532 = vmatprep.subr.mxu0 %v293
    %533 = vmatpush1.msra.mxu0 %v292
    %534 = vmatprep.subr.mxu0 %v289
    %535 = vmatpush1.msra.mxu0 %v288
    %536 = vmatprep.subr.mxu0 %v285
    %537 = vmatpush1.msra.mxu0 %v284
    %538 = vmatprep.subr.mxu0 %v281
    %539 = vmatpush1.msra.mxu0 %v280
    %540 = vmatprep.subr.mxu0 %v277
    %541 = vmatpush1.msra.mxu0 %v276
    %542 = vmatprep.subr.mxu0 %v273
    %543 = vmatpush1.msra.mxu0 %v272
    %544 = vmatprep.subr.mxu0 %v269
    %545 = vmatpush1.msra.mxu0 %v268
    %546 = vmatprep.subr.mxu0 %v265
    %547 = vmatpush1.msra.mxu0 %v264
    %548 = vmatprep.subr.mxu0 %v261
    %549 = vmatpush1.msra.mxu0 %v260
    %550 = vmatprep.subr.mxu0 %v257
    %551 = vmatpush1.msra.mxu0 %v256
    %552 = vmatprep.subr.mxu0 0.0
    %553 = vmatpush2.msra.mxu0 0.0
    %554 = vmatprep.subr.mxu0 0.0
    %555 = vmatpush2.msra.mxu0 0.0
    %556 = vmatprep.subr.mxu0 0.0
    %557 = vmatpush2.msra.mxu0 0.0
    %558 = vmatprep.subr.mxu0 0.0
    %559 = vmatpush2.msra.mxu0 0.0
    %560 = vmatprep.subr.mxu0 0.0
    %561 = vmatpush2.msra.mxu0 0.0
    %562 = vmatprep.subr.mxu0 0.0
    %563 = vmatpush2.msra.mxu0 0.0
    %564 = vmatprep.subr.mxu0 0.0
    %565 = vmatpush2.msra.mxu0 0.0
    %566 = vmatprep.subr.mxu0 0.0
    %567 = vmatpush2.msra.mxu0 0.0
    %568 = vmatprep.subr.mxu0 0.0
    %569 = vmatpush2.msra.mxu0 0.0
    %570 = vmatprep.subr.mxu0 0.0
    %571 = vmatpush2.msra.mxu0 0.0
    %572 = vmatprep.subr.mxu0 0.0
    %573 = vmatpush2.msra.mxu0 0.0
    %574 = vmatprep.subr.mxu0 0.0
    %575 = vmatpush2.msra.mxu0 0.0
    %576 = vmatprep.subr.mxu0 0.0
    %577 = vmatpush2.msra.mxu0 0.0
    %578 = vmatprep.subr.mxu0 0.0
    %579 = vmatpush2.msra.mxu0 0.0
    %580 = vmatprep.subr.mxu0 0.0
    %581 = vmatpush2.msra.mxu0 0.0
    %582 = vmatprep.subr.mxu0 0.0
    %583 = vmatpush2.msra.mxu0 0.0
    %584 = vmatprep.mubr.f32.mxu0 0.0
    %585 = vmatmul.mubr.f32.gmra.mxu0 %v516
    %v586 = vpop.f32.mrf.mxu0
    %v587 = vadd.f32 0.0, %v586
    %v588 = vpop.f32.mrf.mxu0
    %v589 = vadd.f32 0.0, %v588
    %590 = vdwg.mxu0
    %591 = vmatprep.subr.mxu0 %v319
    %592 = vmatpush1.msra.mxu0 %v318
    %593 = vmatprep.subr.mxu0 %v315
    %594 = vmatpush1.msra.mxu0 %v314
    %595 = vmatprep.subr.mxu0 %v311
    %596 = vmatpush1.msra.mxu0 %v310
    %597 = vmatprep.subr.mxu0 %v307
    %598 = vmatpush1.msra.mxu0 %v306
    %599 = vmatprep.subr.mxu0 %v303
    %600 = vmatpush1.msra.mxu0 %v302
    %601 = vmatprep.subr.mxu0 %v299
    %602 = vmatpush1.msra.mxu0 %v298
    %603 = vmatprep.subr.mxu0 %v295
    %604 = vmatpush1.msra.mxu0 %v294
    %605 = vmatprep.subr.mxu0 %v291
    %606 = vmatpush1.msra.mxu0 %v290
    %607 = vmatprep.subr.mxu0 %v287
    %608 = vmatpush1.msra.mxu0 %v286
    %609 = vmatprep.subr.mxu0 %v283
    %610 = vmatpush1.msra.mxu0 %v282
    %611 = vmatprep.subr.mxu0 %v279
    %612 = vmatpush1.msra.mxu0 %v278
    %613 = vmatprep.subr.mxu0 %v275
    %614 = vmatpush1.msra.mxu0 %v274
    %615 = vmatprep.subr.mxu0 %v271
    %616 = vmatpush1.msra.mxu0 %v270
    %617 = vmatprep.subr.mxu0 %v267
    %618 = vmatpush1.msra.mxu0 %v266
    %619 = vmatprep.subr.mxu0 %v263
    %620 = vmatpush1.msra.mxu0 %v262
    %621 = vmatprep.subr.mxu0 %v259
    %622 = vmatpush1.msra.mxu0 %v258
    %623 = vmatprep.subr.mxu0 0.0
    %624 = vmatpush2.msra.mxu0 0.0
    %625 = vmatprep.subr.mxu0 0.0
    %626 = vmatpush2.msra.mxu0 0.0
    %627 = vmatprep.subr.mxu0 0.0
    %628 = vmatpush2.msra.mxu0 0.0
    %629 = vmatprep.subr.mxu0 0.0
    %630 = vmatpush2.msra.mxu0 0.0
    %631 = vmatprep.subr.mxu0 0.0
    %632 = vmatpush2.msra.mxu0 0.0
    %633 = vmatprep.subr.mxu0 0.0
    %634 = vmatpush2.msra.mxu0 0.0
    %635 = vmatprep.subr.mxu0 0.0
    %636 = vmatpush2.msra.mxu0 0.0
    %637 = vmatprep.subr.mxu0 0.0
    %638 = vmatpush2.msra.mxu0 0.0
    %639 = vmatprep.subr.mxu0 0.0
    %640 = vmatpush2.msra.mxu0 0.0
    %641 = vmatprep.subr.mxu0 0.0
    %642 = vmatpush2.msra.mxu0 0.0
    %643 = vmatprep.subr.mxu0 0.0
    %644 = vmatpush2.msra.mxu0 0.0
    %645 = vmatprep.subr.mxu0 0.0
    %646 = vmatpush2.msra.mxu0 0.0
    %647 = vmatprep.subr.mxu0 0.0
    %648 = vmatpush2.msra.mxu0 0.0
    %649 = vmatprep.subr.mxu0 0.0
    %650 = vmatpush2.msra.mxu0 0.0
    %651 = vmatprep.subr.mxu0 0.0
    %652 = vmatpush2.msra.mxu0 0.0
    %653 = vmatprep.subr.mxu0 0.0
    %654 = vmatpush2.msra.mxu0 0.0
    %655 = vmatprep.mubr.f32.mxu0 0.0
    %656 = vmatmul.mubr.f32.gmra.mxu0 %v516
    %v657 = vpop.f32.mrf.mxu0
    %v658 = vadd.f32 0.0, %v657
    %v659 = vpop.f32.mrf.mxu0
    %v660 = vadd.f32 0.0, %v659
    %661 = vdwg.mxu0
    %v666 = vcombine.low %v587, %v589
    %v667 = vcombine.low %v658, %v660
    %v669 = vunpack.c.l.s4 1966171168
    %v670 = vunpack.c.0.s8 %v669
    %v671 = vlaneseq
    %v672 = vshrl.u32 %v671, 7
    %v673 = vsub.s32 %v670, %v672
    %v674 = vrot.slane %v666, %v673
    %v676 = vunpack.c.l.s4 1966171168
    %v677 = vunpack.c.0.s8 %v676
    %v678 = vlaneseq
    %v679 = vshrl.u32 %v678, 7
    %v680 = vsub.s32 %v677, %v679
    %v681 = vrot.slane %v667, %v680
    %v682 = vcombine.low %v674, %v681
    %v684 = vunpack.c.l.s4 1966171168
    %v685 = vunpack.c.0.s8 %v684
    %v686 = vlaneseq
    %v687 = vshrl.u32 %v686, 7
    %v688 = vsub.s32 %v685, %v687
    %v689 = vrot.slane %v682, %v688
    %v691 = vadd.f32 %v519, %v689
    %v692 = vmul.f32 %v691, 0.5
    %v693 = vtanh.pop %v692
    %v694 = vmul.f32 %v693, 0.5
    %v695 = vadd.f32 %v694, 0.5
    %v697 = vrot.slane %v691, 3
    %v699 = vtanh.pop %v697
    %v701 = vrot.slane %v695, 1
    %v703 = vmul.f32 %v701, %v515
    %v704 = vmul.f32 %v695, %v699
    %v705 = vadd.f32 %v703, %v704
    %v706 = vtanh.pop %v705
    %v707 = vrot.slane %v695, 2
    %v709 = vmul.f32 %v707, %v706
    %vm710 = vcmp.lt.s32.totalorder %v253, 96
    %vm711 = vmand %vm510, %vm710
    %v712 = vsel %vm711, 1, 0
    %v713 = vcvt.s32.f32 %v712
    %v714 = vmul.f32 %v705, %v713
    %v715 = vmul.f32 %v709, %v713
    %s716 = scalar_lea.vmem [#allocation2], 2
    %v717 = vld [vmem:[%s716] ss:$8 sm:$0xf]
    %v718 = vadd.f32 %v251, %v717
    %719 = vmatprep.subr.mxu0 %v317
    %720 = vmatpush1.msra.mxu0 %v316
    %721 = vmatprep.subr.mxu0 %v313
    %722 = vmatpush1.msra.mxu0 %v312
    %723 = vmatprep.subr.mxu0 %v309
    %724 = vmatpush1.msra.mxu0 %v308
    %725 = vmatprep.subr.mxu0 %v305
    %726 = vmatpush1.msra.mxu0 %v304
    %727 = vmatprep.subr.mxu0 %v301
    %728 = vmatpush1.msra.mxu0 %v300
    %729 = vmatprep.subr.mxu0 %v297
    %730 = vmatpush1.msra.mxu0 %v296
    %731 = vmatprep.subr.mxu0 %v293
    %732 = vmatpush1.msra.mxu0 %v292
    %733 = vmatprep.subr.mxu0 %v289
    %734 = vmatpush1.msra.mxu0 %v288
    %735 = vmatprep.subr.mxu0 %v285
    %736 = vmatpush1.msra.mxu0 %v284
    %737 = vmatprep.subr.mxu0 %v281
    %738 = vmatpush1.msra.mxu0 %v280
    %739 = vmatprep.subr.mxu0 %v277
    %740 = vmatpush1.msra.mxu0 %v276
    %741 = vmatprep.subr.mxu0 %v273
    %742 = vmatpush1.msra.mxu0 %v272
    %743 = vmatprep.subr.mxu0 %v269
    %744 = vmatpush1.msra.mxu0 %v268
    %745 = vmatprep.subr.mxu0 %v265
    %746 = vmatpush1.msra.mxu0 %v264
    %747 = vmatprep.subr.mxu0 %v261
    %748 = vmatpush1.msra.mxu0 %v260
    %749 = vmatprep.subr.mxu0 %v257
    %750 = vmatpush1.msra.mxu0 %v256
    %751 = vmatprep.subr.mxu0 0.0
    %752 = vmatpush2.msra.mxu0 0.0
    %753 = vmatprep.subr.mxu0 0.0
    %754 = vmatpush2.msra.mxu0 0.0
    %755 = vmatprep.subr.mxu0 0.0
    %756 = vmatpush2.msra.mxu0 0.0
    %757 = vmatprep.subr.mxu0 0.0
    %758 = vmatpush2.msra.mxu0 0.0
    %759 = vmatprep.subr.mxu0 0.0
    %760 = vmatpush2.msra.mxu0 0.0
    %761 = vmatprep.subr.mxu0 0.0
    %762 = vmatpush2.msra.mxu0 0.0
    %763 = vmatprep.subr.mxu0 0.0
    %764 = vmatpush2.msra.mxu0 0.0
    %765 = vmatprep.subr.mxu0 0.0
    %766 = vmatpush2.msra.mxu0 0.0
    %767 = vmatprep.subr.mxu0 0.0
    %768 = vmatpush2.msra.mxu0 0.0
    %769 = vmatprep.subr.mxu0 0.0
    %770 = vmatpush2.msra.mxu0 0.0
    %771 = vmatprep.subr.mxu0 0.0
    %772 = vmatpush2.msra.mxu0 0.0
    %773 = vmatprep.subr.mxu0 0.0
    %774 = vmatpush2.msra.mxu0 0.0
    %775 = vmatprep.subr.mxu0 0.0
    %776 = vmatpush2.msra.mxu0 0.0
    %777 = vmatprep.subr.mxu0 0.0
    %778 = vmatpush2.msra.mxu0 0.0
    %779 = vmatprep.subr.mxu0 0.0
    %780 = vmatpush2.msra.mxu0 0.0
    %781 = vmatprep.subr.mxu0 0.0
    %782 = vmatpush2.msra.mxu0 0.0
    %783 = vmatprep.mubr.f32.mxu0 0.0
    %784 = vmatmul.mubr.f32.gmra.mxu0 %v715
    %v785 = vpop.f32.mrf.mxu0
    %v786 = vadd.f32 0.0, %v785
    %v787 = vpop.f32.mrf.mxu0
    %v788 = vadd.f32 0.0, %v787
    %789 = vdwg.mxu0
    %790 = vmatprep.subr.mxu0 %v319
    %791 = vmatpush1.msra.mxu0 %v318
    %792 = vmatprep.subr.mxu0 %v315
    %793 = vmatpush1.msra.mxu0 %v314
    %794 = vmatprep.subr.mxu0 %v311
    %795 = vmatpush1.msra.mxu0 %v310
    %796 = vmatprep.subr.mxu0 %v307
    %797 = vmatpush1.msra.mxu0 %v306
    %798 = vmatprep.subr.mxu0 %v303
    %799 = vmatpush1.msra.mxu0 %v302
    %800 = vmatprep.subr.mxu0 %v299
    %801 = vmatpush1.msra.mxu0 %v298
    %802 = vmatprep.subr.mxu0 %v295
    %803 = vmatpush1.msra.mxu0 %v294
    %804 = vmatprep.subr.mxu0 %v291
    %805 = vmatpush1.msra.mxu0 %v290
    %806 = vmatprep.subr.mxu0 %v287
    %807 = vmatpush1.msra.mxu0 %v286
    %808 = vmatprep.subr.mxu0 %v283
    %809 = vmatpush1.msra.mxu0 %v282
    %810 = vmatprep.subr.mxu0 %v279
    %811 = vmatpush1.msra.mxu0 %v278
    %812 = vmatprep.subr.mxu0 %v275
    %813 = vmatpush1.msra.mxu0 %v274
    %814 = vmatprep.subr.mxu0 %v271
    %815 = vmatpush1.msra.mxu0 %v270
    %816 = vmatprep.subr.mxu0 %v267
    %817 = vmatpush1.msra.mxu0 %v266
    %818 = vmatprep.subr.mxu0 %v263
    %819 = vmatpush1.msra.mxu0 %v262
    %820 = vmatprep.subr.mxu0 %v259
    %821 = vmatpush1.msra.mxu0 %v258
    %822 = vmatprep.subr.mxu0 0.0
    %823 = vmatpush2.msra.mxu0 0.0
    %824 = vmatprep.subr.mxu0 0.0
    %825 = vmatpush2.msra.mxu0 0.0
    %826 = vmatprep.subr.mxu0 0.0
    %827 = vmatpush2.msra.mxu0 0.0
    %828 = vmatprep.subr.mxu0 0.0
    %829 = vmatpush2.msra.mxu0 0.0
    %830 = vmatprep.subr.mxu0 0.0
    %831 = vmatpush2.msra.mxu0 0.0
    %832 = vmatprep.subr.mxu0 0.0
    %833 = vmatpush2.msra.mxu0 0.0
    %834 = vmatprep.subr.mxu0 0.0
    %835 = vmatpush2.msra.mxu0 0.0
    %836 = vmatprep.subr.mxu0 0.0
    %837 = vmatpush2.msra.mxu0 0.0
    %838 = vmatprep.subr.mxu0 0.0
    %839 = vmatpush2.msra.mxu0 0.0
    %840 = vmatprep.subr.mxu0 0.0
    %841 = vmatpush2.msra.mxu0 0.0
    %842 = vmatprep.subr.mxu0 0.0
    %843 = vmatpush2.msra.mxu0 0.0
    %844 = vmatprep.subr.mxu0 0.0
    %845 = vmatpush2.msra.mxu0 0.0
    %846 = vmatprep.subr.mxu0 0.0
    %847 = vmatpush2.msra.mxu0 0.0
    %848 = vmatprep.subr.mxu0 0.0
    %849 = vmatpush2.msra.mxu0 0.0
    %850 = vmatprep.subr.mxu0 0.0
    %851 = vmatpush2.msra.mxu0 0.0
    %852 = vmatprep.subr.mxu0 0.0
    %853 = vmatpush2.msra.mxu0 0.0
    %854 = vmatprep.mubr.f32.mxu0 0.0
    %855 = vmatmul.mubr.f32.gmra.mxu0 %v715
    %v856 = vpop.f32.mrf.mxu0
    %v857 = vadd.f32 0.0, %v856
    %v858 = vpop.f32.mrf.mxu0
    %v859 = vadd.f32 0.0, %v858
    %860 = vdwg.mxu0
    %v865 = vcombine.low %v786, %v788
    %v866 = vcombine.low %v857, %v859
    %v868 = vunpack.c.l.s4 1966171168
    %v869 = vunpack.c.0.s8 %v868
    %v870 = vlaneseq
    %v871 = vshrl.u32 %v870, 7
    %v872 = vsub.s32 %v869, %v871
    %v873 = vrot.slane %v865, %v872
    %v875 = vunpack.c.l.s4 1966171168
    %v876 = vunpack.c.0.s8 %v875
    %v877 = vlaneseq
    %v878 = vshrl.u32 %v877, 7
    %v879 = vsub.s32 %v876, %v878
    %v880 = vrot.slane %v866, %v879
    %v881 = vcombine.low %v873, %v880
    %v883 = vunpack.c.l.s4 1966171168
    %v884 = vunpack.c.0.s8 %v883
    %v885 = vlaneseq
    %v886 = vshrl.u32 %v885, 7
    %v887 = vsub.s32 %v884, %v886
    %v888 = vrot.slane %v881, %v887
    %v890 = vadd.f32 %v718, %v888
    %v891 = vmul.f32 %v890, 0.5
    %v892 = vtanh.pop %v891
    %v893 = vmul.f32 %v892, 0.5
    %v894 = vadd.f32 %v893, 0.5
    %v896 = vrot.slane %v890, 3
    %v898 = vtanh.pop %v896
    %v900 = vrot.slane %v894, 1
    %v902 = vmul.f32 %v900, %v714
    %v903 = vmul.f32 %v894, %v898
    %v904 = vadd.f32 %v902, %v903
    %v905 = vtanh.pop %v904
    %v906 = vrot.slane %v894, 2
    %v908 = vmul.f32 %v906, %v905
    %vm909 = vcmp.lt.s32.totalorder %v253, 128
    %vm910 = vmand %vm510, %vm909
    %v911 = vsel %vm910, 1, 0
    %v912 = vcvt.s32.f32 %v911
    %v913 = vmul.f32 %v904, %v912
    %v914 = vmul.f32 %v908, %v912
    %s915 = scalar_lea.vmem [#allocation2], 3
    %v916 = vld [vmem:[%s915] ss:$8 sm:$0xf]
    %v917 = vadd.f32 %v251, %v916
    %918 = vmatprep.subr.mxu0 %v317
    %919 = vmatpush1.msra.mxu0 %v316
    %920 = vmatprep.subr.mxu0 %v313
    %921 = vmatpush1.msra.mxu0 %v312
    %922 = vmatprep.subr.mxu0 %v309
    %923 = vmatpush1.msra.mxu0 %v308
    %924 = vmatprep.subr.mxu0 %v305
    %925 = vmatpush1.msra.mxu0 %v304
    %926 = vmatprep.subr.mxu0 %v301
    %927 = vmatpush1.msra.mxu0 %v300
    %928 = vmatprep.subr.mxu0 %v297
    %929 = vmatpush1.msra.mxu0 %v296
    %930 = vmatprep.subr.mxu0 %v293
    %931 = vmatpush1.msra.mxu0 %v292
    %932 = vmatprep.subr.mxu0 %v289
    %933 = vmatpush1.msra.mxu0 %v288
    %934 = vmatprep.subr.mxu0 %v285
    %935 = vmatpush1.msra.mxu0 %v284
    %936 = vmatprep.subr.mxu0 %v281
    %937 = vmatpush1.msra.mxu0 %v280
    %938 = vmatprep.subr.mxu0 %v277
    %939 = vmatpush1.msra.mxu0 %v276
    %940 = vmatprep.subr.mxu0 %v273
    %941 = vmatpush1.msra.mxu0 %v272
    %942 = vmatprep.subr.mxu0 %v269
    %943 = vmatpush1.msra.mxu0 %v268
    %944 = vmatprep.subr.mxu0 %v265
    %945 = vmatpush1.msra.mxu0 %v264
    %946 = vmatprep.subr.mxu0 %v261
    %947 = vmatpush1.msra.mxu0 %v260
    %948 = vmatprep.subr.mxu0 %v257
    %949 = vmatpush1.msra.mxu0 %v256
    %950 = vmatprep.subr.mxu0 0.0
    %951 = vmatpush2.msra.mxu0 0.0
    %952 = vmatprep.subr.mxu0 0.0
    %953 = vmatpush2.msra.mxu0 0.0
    %954 = vmatprep.subr.mxu0 0.0
    %955 = vmatpush2.msra.mxu0 0.0
    %956 = vmatprep.subr.mxu0 0.0
    %957 = vmatpush2.msra.mxu0 0.0
    %958 = vmatprep.subr.mxu0 0.0
    %959 = vmatpush2.msra.mxu0 0.0
    %960 = vmatprep.subr.mxu0 0.0
    %961 = vmatpush2.msra.mxu0 0.0
    %962 = vmatprep.subr.mxu0 0.0
    %963 = vmatpush2.msra.mxu0 0.0
    %964 = vmatprep.subr.mxu0 0.0
    %965 = vmatpush2.msra.mxu0 0.0
    %966 = vmatprep.subr.mxu0 0.0
    %967 = vmatpush2.msra.mxu0 0.0
    %968 = vmatprep.subr.mxu0 0.0
    %969 = vmatpush2.msra.mxu0 0.0
    %970 = vmatprep.subr.mxu0 0.0
    %971 = vmatpush2.msra.mxu0 0.0
    %972 = vmatprep.subr.mxu0 0.0
    %973 = vmatpush2.msra.mxu0 0.0
    %974 = vmatprep.subr.mxu0 0.0
    %975 = vmatpush2.msra.mxu0 0.0
    %976 = vmatprep.subr.mxu0 0.0
    %977 = vmatpush2.msra.mxu0 0.0
    %978 = vmatprep.subr.mxu0 0.0
    %979 = vmatpush2.msra.mxu0 0.0
    %980 = vmatprep.subr.mxu0 0.0
    %981 = vmatpush2.msra.mxu0 0.0
    %982 = vmatprep.mubr.f32.mxu0 0.0
    %983 = vmatmul.mubr.f32.gmra.mxu0 %v914
    %v984 = vpop.f32.mrf.mxu0
    %v985 = vadd.f32 0.0, %v984
    %v986 = vpop.f32.mrf.mxu0
    %v987 = vadd.f32 0.0, %v986
    %988 = vdwg.mxu0
    %989 = vmatprep.subr.mxu0 %v319
    %990 = vmatpush1.msra.mxu0 %v318
    %991 = vmatprep.subr.mxu0 %v315
    %992 = vmatpush1.msra.mxu0 %v314
    %993 = vmatprep.subr.mxu0 %v311
    %994 = vmatpush1.msra.mxu0 %v310
    %995 = vmatprep.subr.mxu0 %v307
    %996 = vmatpush1.msra.mxu0 %v306
    %997 = vmatprep.subr.mxu0 %v303
    %998 = vmatpush1.msra.mxu0 %v302
    %999 = vmatprep.subr.mxu0 %v299
    %1000 = vmatpush1.msra.mxu0 %v298
    %1001 = vmatprep.subr.mxu0 %v295
    %1002 = vmatpush1.msra.mxu0 %v294
    %1003 = vmatprep.subr.mxu0 %v291
    %1004 = vmatpush1.msra.mxu0 %v290
    %1005 = vmatprep.subr.mxu0 %v287
    %1006 = vmatpush1.msra.mxu0 %v286
    %1007 = vmatprep.subr.mxu0 %v283
    %1008 = vmatpush1.msra.mxu0 %v282
    %1009 = vmatprep.subr.mxu0 %v279
    %1010 = vmatpush1.msra.mxu0 %v278
    %1011 = vmatprep.subr.mxu0 %v275
    %1012 = vmatpush1.msra.mxu0 %v274
    %1013 = vmatprep.subr.mxu0 %v271
    %1014 = vmatpush1.msra.mxu0 %v270
    %1015 = vmatprep.subr.mxu0 %v267
    %1016 = vmatpush1.msra.mxu0 %v266
    %1017 = vmatprep.subr.mxu0 %v263
    %1018 = vmatpush1.msra.mxu0 %v262
    %1019 = vmatprep.subr.mxu0 %v259
    %1020 = vmatpush1.msra.mxu0 %v258
    %1021 = vmatprep.subr.mxu0 0.0
    %1022 = vmatpush2.msra.mxu0 0.0
    %1023 = vmatprep.subr.mxu0 0.0
    %1024 = vmatpush2.msra.mxu0 0.0
    %1025 = vmatprep.subr.mxu0 0.0
    %1026 = vmatpush2.msra.mxu0 0.0
    %1027 = vmatprep.subr.mxu0 0.0
    %1028 = vmatpush2.msra.mxu0 0.0
    %1029 = vmatprep.subr.mxu0 0.0
    %1030 = vmatpush2.msra.mxu0 0.0
    %1031 = vmatprep.subr.mxu0 0.0
    %1032 = vmatpush2.msra.mxu0 0.0
    %1033 = vmatprep.subr.mxu0 0.0
    %1034 = vmatpush2.msra.mxu0 0.0
    %1035 = vmatprep.subr.mxu0 0.0
    %1036 = vmatpush2.msra.mxu0 0.0
    %1037 = vmatprep.subr.mxu0 0.0
    %1038 = vmatpush2.msra.mxu0 0.0
    %1039 = vmatprep.subr.mxu0 0.0
    %1040 = vmatpush2.msra.mxu0 0.0
    %1041 = vmatprep.subr.mxu0 0.0
    %1042 = vmatpush2.msra.mxu0 0.0
    %1043 = vmatprep.subr.mxu0 0.0
    %1044 = vmatpush2.msra.mxu0 0.0
    %1045 = vmatprep.subr.mxu0 0.0
    %1046 = vmatpush2.msra.mxu0 0.0
    %1047 = vmatprep.subr.mxu0 0.0
    %1048 = vmatpush2.msra.mxu0 0.0
    %1049 = vmatprep.subr.mxu0 0.0
    %1050 = vmatpush2.msra.mxu0 0.0
    %1051 = vmatprep.subr.mxu0 0.0
    %1052 = vmatpush2.msra.mxu0 0.0
    %1053 = vmatprep.mubr.f32.mxu0 0.0
    %1054 = vmatmul.mubr.f32.gmra.mxu0 %v914
    %v1055 = vpop.f32.mrf.mxu0
    %v1056 = vadd.f32 0.0, %v1055
    %v1057 = vpop.f32.mrf.mxu0
    %v1058 = vadd.f32 0.0, %v1057
    %1059 = vdwg.mxu0
    %v1064 = vcombine.low %v985, %v987
    %v1065 = vcombine.low %v1056, %v1058
    %v1067 = vunpack.c.l.s4 1966171168
    %v1068 = vunpack.c.0.s8 %v1067
    %v1069 = vlaneseq
    %v1070 = vshrl.u32 %v1069, 7
    %v1071 = vsub.s32 %v1068, %v1070
    %v1072 = vrot.slane %v1064, %v1071
    %v1074 = vunpack.c.l.s4 1966171168
    %v1075 = vunpack.c.0.s8 %v1074
    %v1076 = vlaneseq
    %v1077 = vshrl.u32 %v1076, 7
    %v1078 = vsub.s32 %v1075, %v1077
    %v1079 = vrot.slane %v1065, %v1078
    %v1080 = vcombine.low %v1072, %v1079
    %v1082 = vunpack.c.l.s4 1966171168
    %v1083 = vunpack.c.0.s8 %v1082
    %v1084 = vlaneseq
    %v1085 = vshrl.u32 %v1084, 7
    %v1086 = vsub.s32 %v1083, %v1085
    %v1087 = vrot.slane %v1080, %v1086
    %v1089 = vadd.f32 %v917, %v1087
    %v1090 = vmul.f32 %v1089, 0.5
    %v1091 = vtanh.pop %v1090
    %v1092 = vmul.f32 %v1091, 0.5
    %v1093 = vadd.f32 %v1092, 0.5
    %v1095 = vrot.slane %v1089, 3
    %v1097 = vtanh.pop %v1095
    %v1099 = vrot.slane %v1093, 1
    %v1101 = vmul.f32 %v1099, %v913
    %v1102 = vmul.f32 %v1093, %v1097
    %v1103 = vadd.f32 %v1101, %v1102
    %v1104 = vtanh.pop %v1103
    %v1105 = vrot.slane %v1093, 2
    %v1107 = vmul.f32 %v1105, %v1104
    %s1108 = scalar_lea.vmem [#allocation2], 4
    %v1109 = vld [vmem:[%s1108] ss:$8 sm:$0xf]
    %v1110 = vadd.f32 %v251, %v1109
    %1111 = vmatprep.subr.mxu0 %v317
    %1112 = vmatpush1.msra.mxu0 %v316
    %1113 = vmatprep.subr.mxu0 %v313
    %1114 = vmatpush1.msra.mxu0 %v312
    %1115 = vmatprep.subr.mxu0 %v309
    %1116 = vmatpush1.msra.mxu0 %v308
    %1117 = vmatprep.subr.mxu0 %v305
    %1118 = vmatpush1.msra.mxu0 %v304
    %1119 = vmatprep.subr.mxu0 %v301
    %1120 = vmatpush1.msra.mxu0 %v300
    %1121 = vmatprep.subr.mxu0 %v297
    %1122 = vmatpush1.msra.mxu0 %v296
    %1123 = vmatprep.subr.mxu0 %v293
    %1124 = vmatpush1.msra.mxu0 %v292
    %1125 = vmatprep.subr.mxu0 %v289
    %1126 = vmatpush1.msra.mxu0 %v288
    %1127 = vmatprep.subr.mxu0 %v285
    %1128 = vmatpush1.msra.mxu0 %v284
    %1129 = vmatprep.subr.mxu0 %v281
    %1130 = vmatpush1.msra.mxu0 %v280
    %1131 = vmatprep.subr.mxu0 %v277
    %1132 = vmatpush1.msra.mxu0 %v276
    %1133 = vmatprep.subr.mxu0 %v273
    %1134 = vmatpush1.msra.mxu0 %v272
    %1135 = vmatprep.subr.mxu0 %v269
    %1136 = vmatpush1.msra.mxu0 %v268
    %1137 = vmatprep.subr.mxu0 %v265
    %1138 = vmatpush1.msra.mxu0 %v264
    %1139 = vmatprep.subr.mxu0 %v261
    %1140 = vmatpush1.msra.mxu0 %v260
    %1141 = vmatprep.subr.mxu0 %v257
    %1142 = vmatpush1.msra.mxu0 %v256
    %1143 = vmatprep.subr.mxu0 0.0
    %1144 = vmatpush2.msra.mxu0 0.0
    %1145 = vmatprep.subr.mxu0 0.0
    %1146 = vmatpush2.msra.mxu0 0.0
    %1147 = vmatprep.subr.mxu0 0.0
    %1148 = vmatpush2.msra.mxu0 0.0
    %1149 = vmatprep.subr.mxu0 0.0
    %1150 = vmatpush2.msra.mxu0 0.0
    %1151 = vmatprep.subr.mxu0 0.0
    %1152 = vmatpush2.msra.mxu0 0.0
    %1153 = vmatprep.subr.mxu0 0.0
    %1154 = vmatpush2.msra.mxu0 0.0
    %1155 = vmatprep.subr.mxu0 0.0
    %1156 = vmatpush2.msra.mxu0 0.0
    %1157 = vmatprep.subr.mxu0 0.0
    %1158 = vmatpush2.msra.mxu0 0.0
    %1159 = vmatprep.subr.mxu0 0.0
    %1160 = vmatpush2.msra.mxu0 0.0
    %1161 = vmatprep.subr.mxu0 0.0
    %1162 = vmatpush2.msra.mxu0 0.0
    %1163 = vmatprep.subr.mxu0 0.0
    %1164 = vmatpush2.msra.mxu0 0.0
    %1165 = vmatprep.subr.mxu0 0.0
    %1166 = vmatpush2.msra.mxu0 0.0
    %1167 = vmatprep.subr.mxu0 0.0
    %1168 = vmatpush2.msra.mxu0 0.0
    %1169 = vmatprep.subr.mxu0 0.0
    %1170 = vmatpush2.msra.mxu0 0.0
    %1171 = vmatprep.subr.mxu0 0.0
    %1172 = vmatpush2.msra.mxu0 0.0
    %1173 = vmatprep.subr.mxu0 0.0
    %1174 = vmatpush2.msra.mxu0 0.0
    %1175 = vmatprep.mubr.f32.mxu0 0.0
    %1176 = vmatmul.mubr.f32.gmra.mxu0 %v1107
    %v1177 = vpop.f32.mrf.mxu0
    %v1178 = vadd.f32 0.0, %v1177
    %v1179 = vpop.f32.mrf.mxu0
    %v1180 = vadd.f32 0.0, %v1179
    %1181 = vdwg.mxu0
    %1182 = vmatprep.subr.mxu0 %v319
    %1183 = vmatpush1.msra.mxu0 %v318
    %1184 = vmatprep.subr.mxu0 %v315
    %1185 = vmatpush1.msra.mxu0 %v314
    %1186 = vmatprep.subr.mxu0 %v311
    %1187 = vmatpush1.msra.mxu0 %v310
    %1188 = vmatprep.subr.mxu0 %v307
    %1189 = vmatpush1.msra.mxu0 %v306
    %1190 = vmatprep.subr.mxu0 %v303
    %1191 = vmatpush1.msra.mxu0 %v302
    %1192 = vmatprep.subr.mxu0 %v299
    %1193 = vmatpush1.msra.mxu0 %v298
    %1194 = vmatprep.subr.mxu0 %v295
    %1195 = vmatpush1.msra.mxu0 %v294
    %1196 = vmatprep.subr.mxu0 %v291
    %1197 = vmatpush1.msra.mxu0 %v290
    %1198 = vmatprep.subr.mxu0 %v287
    %1199 = vmatpush1.msra.mxu0 %v286
    %1200 = vmatprep.subr.mxu0 %v283
    %1201 = vmatpush1.msra.mxu0 %v282
    %1202 = vmatprep.subr.mxu0 %v279
    %1203 = vmatpush1.msra.mxu0 %v278
    %1204 = vmatprep.subr.mxu0 %v275
    %1205 = vmatpush1.msra.mxu0 %v274
    %1206 = vmatprep.subr.mxu0 %v271
    %1207 = vmatpush1.msra.mxu0 %v270
    %1208 = vmatprep.subr.mxu0 %v267
    %1209 = vmatpush1.msra.mxu0 %v266
    %1210 = vmatprep.subr.mxu0 %v263
    %1211 = vmatpush1.msra.mxu0 %v262
    %1212 = vmatprep.subr.mxu0 %v259
    %1213 = vmatpush1.msra.mxu0 %v258
    %1214 = vmatprep.subr.mxu0 0.0
    %1215 = vmatpush2.msra.mxu0 0.0
    %1216 = vmatprep.subr.mxu0 0.0
    %1217 = vmatpush2.msra.mxu0 0.0
    %1218 = vmatprep.subr.mxu0 0.0
    %1219 = vmatpush2.msra.mxu0 0.0
    %1220 = vmatprep.subr.mxu0 0.0
    %1221 = vmatpush2.msra.mxu0 0.0
    %1222 = vmatprep.subr.mxu0 0.0
    %1223 = vmatpush2.msra.mxu0 0.0
    %1224 = vmatprep.subr.mxu0 0.0
    %1225 = vmatpush2.msra.mxu0 0.0
    %1226 = vmatprep.subr.mxu0 0.0
    %1227 = vmatpush2.msra.mxu0 0.0
    %1228 = vmatprep.subr.mxu0 0.0
    %1229 = vmatpush2.msra.mxu0 0.0
    %1230 = vmatprep.subr.mxu0 0.0
    %1231 = vmatpush2.msra.mxu0 0.0
    %1232 = vmatprep.subr.mxu0 0.0
    %1233 = vmatpush2.msra.mxu0 0.0
    %1234 = vmatprep.subr.mxu0 0.0
    %1235 = vmatpush2.msra.mxu0 0.0
    %1236 = vmatprep.subr.mxu0 0.0
    %1237 = vmatpush2.msra.mxu0 0.0
    %1238 = vmatprep.subr.mxu0 0.0
    %1239 = vmatpush2.msra.mxu0 0.0
    %1240 = vmatprep.subr.mxu0 0.0
    %1241 = vmatpush2.msra.mxu0 0.0
    %1242 = vmatprep.subr.mxu0 0.0
    %1243 = vmatpush2.msra.mxu0 0.0
    %1244 = vmatprep.subr.mxu0 0.0
    %1245 = vmatpush2.msra.mxu0 0.0
    %1246 = vmatprep.mubr.f32.mxu0 0.0
    %1247 = vmatmul.mubr.f32.gmra.mxu0 %v1107
    %v1248 = vpop.f32.mrf.mxu0
    %v1249 = vadd.f32 0.0, %v1248
    %v1250 = vpop.f32.mrf.mxu0
    %v1251 = vadd.f32 0.0, %v1250
    %1252 = vdwg.mxu0
    %v1257 = vcombine.low %v1178, %v1180
    %v1258 = vcombine.low %v1249, %v1251
    %v1260 = vunpack.c.l.s4 1966171168
    %v1261 = vunpack.c.0.s8 %v1260
    %v1262 = vlaneseq
    %v1263 = vshrl.u32 %v1262, 7
    %v1264 = vsub.s32 %v1261, %v1263
    %v1265 = vrot.slane %v1257, %v1264
    %v1267 = vunpack.c.l.s4 1966171168
    %v1268 = vunpack.c.0.s8 %v1267
    %v1269 = vlaneseq
    %v1270 = vshrl.u32 %v1269, 7
    %v1271 = vsub.s32 %v1268, %v1270
    %v1272 = vrot.slane %v1258, %v1271
    %v1273 = vcombine.low %v1265, %v1272
    %v1275 = vunpack.c.l.s4 1966171168
    %v1276 = vunpack.c.0.s8 %v1275
    %v1277 = vlaneseq
    %v1278 = vshrl.u32 %v1277, 7
    %v1279 = vsub.s32 %v1276, %v1278
    %v1280 = vrot.slane %v1273, %v1279
    %v1282 = vadd.f32 %v1110, %v1280
    %v1283 = vmul.f32 %v1282, 0.5
    %v1284 = vtanh.pop %v1283
    %v1285 = vmul.f32 %v1284, 0.5
    %v1286 = vadd.f32 %v1285, 0.5
    %v1288 = vrot.slane %v1282, 3
    %v1290 = vtanh.pop %v1288
    %v1292 = vrot.slane %v1286, 1
    %v1294 = vmul.f32 %v1292, %v1103
    %v1295 = vmul.f32 %v1286, %v1290
    %v1296 = vadd.f32 %v1294, %v1295
    %v1297 = vtanh.pop %v1296
    %v1298 = vrot.slane %v1286, 2
    %v1300 = vmul.f32 %v1298, %v1297
    %s1301 = scalar_lea.vmem [#allocation2], 5
    %v1302 = vld [vmem:[%s1301] ss:$8 sm:$0xf]
    %v1303 = vadd.f32 %v251, %v1302
    %1304 = vmatprep.subr.mxu0 %v317
    %1305 = vmatpush1.msra.mxu0 %v316
    %1306 = vmatprep.subr.mxu0 %v313
    %1307 = vmatpush1.msra.mxu0 %v312
    %1308 = vmatprep.subr.mxu0 %v309
    %1309 = vmatpush1.msra.mxu0 %v308
    %1310 = vmatprep.subr.mxu0 %v305
    %1311 = vmatpush1.msra.mxu0 %v304
    %1312 = vmatprep.subr.mxu0 %v301
    %1313 = vmatpush1.msra.mxu0 %v300
    %1314 = vmatprep.subr.mxu0 %v297
    %1315 = vmatpush1.msra.mxu0 %v296
    %1316 = vmatprep.subr.mxu0 %v293
    %1317 = vmatpush1.msra.mxu0 %v292
    %1318 = vmatprep.subr.mxu0 %v289
    %1319 = vmatpush1.msra.mxu0 %v288
    %1320 = vmatprep.subr.mxu0 %v285
    %1321 = vmatpush1.msra.mxu0 %v284
    %1322 = vmatprep.subr.mxu0 %v281
    %1323 = vmatpush1.msra.mxu0 %v280
    %1324 = vmatprep.subr.mxu0 %v277
    %1325 = vmatpush1.msra.mxu0 %v276
    %1326 = vmatprep.subr.mxu0 %v273
    %1327 = vmatpush1.msra.mxu0 %v272
    %1328 = vmatprep.subr.mxu0 %v269
    %1329 = vmatpush1.msra.mxu0 %v268
    %1330 = vmatprep.subr.mxu0 %v265
    %1331 = vmatpush1.msra.mxu0 %v264
    %1332 = vmatprep.subr.mxu0 %v261
    %1333 = vmatpush1.msra.mxu0 %v260
    %1334 = vmatprep.subr.mxu0 %v257
    %1335 = vmatpush1.msra.mxu0 %v256
    %1336 = vmatprep.subr.mxu0 0.0
    %1337 = vmatpush2.msra.mxu0 0.0
    %1338 = vmatprep.subr.mxu0 0.0
    %1339 = vmatpush2.msra.mxu0 0.0
    %1340 = vmatprep.subr.mxu0 0.0
    %1341 = vmatpush2.msra.mxu0 0.0
    %1342 = vmatprep.subr.mxu0 0.0
    %1343 = vmatpush2.msra.mxu0 0.0
    %1344 = vmatprep.subr.mxu0 0.0
    %1345 = vmatpush2.msra.mxu0 0.0
    %1346 = vmatprep.subr.mxu0 0.0
    %1347 = vmatpush2.msra.mxu0 0.0
    %1348 = vmatprep.subr.mxu0 0.0
    %1349 = vmatpush2.msra.mxu0 0.0
    %1350 = vmatprep.subr.mxu0 0.0
    %1351 = vmatpush2.msra.mxu0 0.0
    %1352 = vmatprep.subr.mxu0 0.0
    %1353 = vmatpush2.msra.mxu0 0.0
    %1354 = vmatprep.subr.mxu0 0.0
    %1355 = vmatpush2.msra.mxu0 0.0
    %1356 = vmatprep.subr.mxu0 0.0
    %1357 = vmatpush2.msra.mxu0 0.0
    %1358 = vmatprep.subr.mxu0 0.0
    %1359 = vmatpush2.msra.mxu0 0.0
    %1360 = vmatprep.subr.mxu0 0.0
    %1361 = vmatpush2.msra.mxu0 0.0
    %1362 = vmatprep.subr.mxu0 0.0
    %1363 = vmatpush2.msra.mxu0 0.0
    %1364 = vmatprep.subr.mxu0 0.0
    %1365 = vmatpush2.msra.mxu0 0.0
    %1366 = vmatprep.subr.mxu0 0.0
    %1367 = vmatpush2.msra.mxu0 0.0
    %1368 = vmatprep.mubr.f32.mxu0 0.0
    %1369 = vmatmul.mubr.f32.gmra.mxu0 %v1300
    %v1370 = vpop.f32.mrf.mxu0
    %v1371 = vadd.f32 0.0, %v1370
    %v1372 = vpop.f32.mrf.mxu0
    %v1373 = vadd.f32 0.0, %v1372
    %1374 = vdwg.mxu0
    %1375 = vmatprep.subr.mxu0 %v319
    %1376 = vmatpush1.msra.mxu0 %v318
    %1377 = vmatprep.subr.mxu0 %v315
    %1378 = vmatpush1.msra.mxu0 %v314
    %1379 = vmatprep.subr.mxu0 %v311
    %1380 = vmatpush1.msra.mxu0 %v310
    %1381 = vmatprep.subr.mxu0 %v307
    %1382 = vmatpush1.msra.mxu0 %v306
    %1383 = vmatprep.subr.mxu0 %v303
    %1384 = vmatpush1.msra.mxu0 %v302
    %1385 = vmatprep.subr.mxu0 %v299
    %1386 = vmatpush1.msra.mxu0 %v298
    %1387 = vmatprep.subr.mxu0 %v295
    %1388 = vmatpush1.msra.mxu0 %v294
    %1389 = vmatprep.subr.mxu0 %v291
    %1390 = vmatpush1.msra.mxu0 %v290
    %1391 = vmatprep.subr.mxu0 %v287
    %1392 = vmatpush1.msra.mxu0 %v286
    %1393 = vmatprep.subr.mxu0 %v283
    %1394 = vmatpush1.msra.mxu0 %v282
    %1395 = vmatprep.subr.mxu0 %v279
    %1396 = vmatpush1.msra.mxu0 %v278
    %1397 = vmatprep.subr.mxu0 %v275
    %1398 = vmatpush1.msra.mxu0 %v274
    %1399 = vmatprep.subr.mxu0 %v271
    %1400 = vmatpush1.msra.mxu0 %v270
    %1401 = vmatprep.subr.mxu0 %v267
    %1402 = vmatpush1.msra.mxu0 %v266
    %1403 = vmatprep.subr.mxu0 %v263
    %1404 = vmatpush1.msra.mxu0 %v262
    %1405 = vmatprep.subr.mxu0 %v259
    %1406 = vmatpush1.msra.mxu0 %v258
    %1407 = vmatprep.subr.mxu0 0.0
    %1408 = vmatpush2.msra.mxu0 0.0
    %1409 = vmatprep.subr.mxu0 0.0
    %1410 = vmatpush2.msra.mxu0 0.0
    %1411 = vmatprep.subr.mxu0 0.0
    %1412 = vmatpush2.msra.mxu0 0.0
    %1413 = vmatprep.subr.mxu0 0.0
    %1414 = vmatpush2.msra.mxu0 0.0
    %1415 = vmatprep.subr.mxu0 0.0
    %1416 = vmatpush2.msra.mxu0 0.0
    %1417 = vmatprep.subr.mxu0 0.0
    %1418 = vmatpush2.msra.mxu0 0.0
    %1419 = vmatprep.subr.mxu0 0.0
    %1420 = vmatpush2.msra.mxu0 0.0
    %1421 = vmatprep.subr.mxu0 0.0
    %1422 = vmatpush2.msra.mxu0 0.0
    %1423 = vmatprep.subr.mxu0 0.0
    %1424 = vmatpush2.msra.mxu0 0.0
    %1425 = vmatprep.subr.mxu0 0.0
    %1426 = vmatpush2.msra.mxu0 0.0
    %1427 = vmatprep.subr.mxu0 0.0
    %1428 = vmatpush2.msra.mxu0 0.0
    %1429 = vmatprep.subr.mxu0 0.0
    %1430 = vmatpush2.msra.mxu0 0.0
    %1431 = vmatprep.subr.mxu0 0.0
    %1432 = vmatpush2.msra.mxu0 0.0
    %1433 = vmatprep.subr.mxu0 0.0
    %1434 = vmatpush2.msra.mxu0 0.0
    %1435 = vmatprep.subr.mxu0 0.0
    %1436 = vmatpush2.msra.mxu0 0.0
    %1437 = vmatprep.subr.mxu0 0.0
    %1438 = vmatpush2.msra.mxu0 0.0
    %1439 = vmatprep.mubr.f32.mxu0 0.0
    %1440 = vmatmul.mubr.f32.gmra.mxu0 %v1300
    %v1441 = vpop.f32.mrf.mxu0
    %v1442 = vadd.f32 0.0, %v1441
    %v1443 = vpop.f32.mrf.mxu0
    %v1444 = vadd.f32 0.0, %v1443
    %1445 = vdwg.mxu0
    %v1450 = vcombine.low %v1371, %v1373
    %v1451 = vcombine.low %v1442, %v1444
    %v1453 = vunpack.c.l.s4 1966171168
    %v1454 = vunpack.c.0.s8 %v1453
    %v1455 = vlaneseq
    %v1456 = vshrl.u32 %v1455, 7
    %v1457 = vsub.s32 %v1454, %v1456
    %v1458 = vrot.slane %v1450, %v1457
    %v1460 = vunpack.c.l.s4 1966171168
    %v1461 = vunpack.c.0.s8 %v1460
    %v1462 = vlaneseq
    %v1463 = vshrl.u32 %v1462, 7
    %v1464 = vsub.s32 %v1461, %v1463
    %v1465 = vrot.slane %v1451, %v1464
    %v1466 = vcombine.low %v1458, %v1465
    %v1468 = vunpack.c.l.s4 1966171168
    %v1469 = vunpack.c.0.s8 %v1468
    %v1470 = vlaneseq
    %v1471 = vshrl.u32 %v1470, 7
    %v1472 = vsub.s32 %v1469, %v1471
    %v1473 = vrot.slane %v1466, %v1472
    %v1475 = vadd.f32 %v1303, %v1473
    %v1476 = vmul.f32 %v1475, 0.5
    %v1477 = vtanh.pop %v1476
    %v1478 = vmul.f32 %v1477, 0.5
    %v1479 = vadd.f32 %v1478, 0.5
    %v1481 = vrot.slane %v1475, 3
    %v1483 = vtanh.pop %v1481
    %v1485 = vrot.slane %v1479, 1
    %v1487 = vmul.f32 %v1485, %v1296
    %v1488 = vmul.f32 %v1479, %v1483
    %v1489 = vadd.f32 %v1487, %v1488
    %v1490 = vtanh.pop %v1489
    %v1491 = vrot.slane %v1479, 2
    %v1493 = vmul.f32 %v1491, %v1490
    %s1494 = scalar_lea.vmem [#allocation2], 6
    %v1495 = vld [vmem:[%s1494] ss:$8 sm:$0xf]
    %v1496 = vadd.f32 %v251, %v1495
    %1497 = vmatprep.subr.mxu0 %v317
    %1498 = vmatpush1.msra.mxu0 %v316
    %1499 = vmatprep.subr.mxu0 %v313
    %1500 = vmatpush1.msra.mxu0 %v312
    %1501 = vmatprep.subr.mxu0 %v309
    %1502 = vmatpush1.msra.mxu0 %v308
    %1503 = vmatprep.subr.mxu0 %v305
    %1504 = vmatpush1.msra.mxu0 %v304
    %1505 = vmatprep.subr.mxu0 %v301
    %1506 = vmatpush1.msra.mxu0 %v300
    %1507 = vmatprep.subr.mxu0 %v297
    %1508 = vmatpush1.msra.mxu0 %v296
    %1509 = vmatprep.subr.mxu0 %v293
    %1510 = vmatpush1.msra.mxu0 %v292
    %1511 = vmatprep.subr.mxu0 %v289
    %1512 = vmatpush1.msra.mxu0 %v288
    %1513 = vmatprep.subr.mxu0 %v285
    %1514 = vmatpush1.msra.mxu0 %v284
    %1515 = vmatprep.subr.mxu0 %v281
    %1516 = vmatpush1.msra.mxu0 %v280
    %1517 = vmatprep.subr.mxu0 %v277
    %1518 = vmatpush1.msra.mxu0 %v276
    %1519 = vmatprep.subr.mxu0 %v273
    %1520 = vmatpush1.msra.mxu0 %v272
    %1521 = vmatprep.subr.mxu0 %v269
    %1522 = vmatpush1.msra.mxu0 %v268
    %1523 = vmatprep.subr.mxu0 %v265
    %1524 = vmatpush1.msra.mxu0 %v264
    %1525 = vmatprep.subr.mxu0 %v261
    %1526 = vmatpush1.msra.mxu0 %v260
    %1527 = vmatprep.subr.mxu0 %v257
    %1528 = vmatpush1.msra.mxu0 %v256
    %1529 = vmatprep.subr.mxu0 0.0
    %1530 = vmatpush2.msra.mxu0 0.0
    %1531 = vmatprep.subr.mxu0 0.0
    %1532 = vmatpush2.msra.mxu0 0.0
    %1533 = vmatprep.subr.mxu0 0.0
    %1534 = vmatpush2.msra.mxu0 0.0
    %1535 = vmatprep.subr.mxu0 0.0
    %1536 = vmatpush2.msra.mxu0 0.0
    %1537 = vmatprep.subr.mxu0 0.0
    %1538 = vmatpush2.msra.mxu0 0.0
    %1539 = vmatprep.subr.mxu0 0.0
    %1540 = vmatpush2.msra.mxu0 0.0
    %1541 = vmatprep.subr.mxu0 0.0
    %1542 = vmatpush2.msra.mxu0 0.0
    %1543 = vmatprep.subr.mxu0 0.0
    %1544 = vmatpush2.msra.mxu0 0.0
    %1545 = vmatprep.subr.mxu0 0.0
    %1546 = vmatpush2.msra.mxu0 0.0
    %1547 = vmatprep.subr.mxu0 0.0
    %1548 = vmatpush2.msra.mxu0 0.0
    %1549 = vmatprep.subr.mxu0 0.0
    %1550 = vmatpush2.msra.mxu0 0.0
    %1551 = vmatprep.subr.mxu0 0.0
    %1552 = vmatpush2.msra.mxu0 0.0
    %1553 = vmatprep.subr.mxu0 0.0
    %1554 = vmatpush2.msra.mxu0 0.0
    %1555 = vmatprep.subr.mxu0 0.0
    %1556 = vmatpush2.msra.mxu0 0.0
    %1557 = vmatprep.subr.mxu0 0.0
    %1558 = vmatpush2.msra.mxu0 0.0
    %1559 = vmatprep.subr.mxu0 0.0
    %1560 = vmatpush2.msra.mxu0 0.0
    %1561 = vmatprep.mubr.f32.mxu0 0.0
    %1562 = vmatmul.mubr.f32.gmra.mxu0 %v1493
    %v1563 = vpop.f32.mrf.mxu0
    %v1564 = vadd.f32 0.0, %v1563
    %v1565 = vpop.f32.mrf.mxu0
    %v1566 = vadd.f32 0.0, %v1565
    %1567 = vdwg.mxu0
    %1568 = vmatprep.subr.mxu0 %v319
    %1569 = vmatpush1.msra.mxu0 %v318
    %1570 = vmatprep.subr.mxu0 %v315
    %1571 = vmatpush1.msra.mxu0 %v314
    %1572 = vmatprep.subr.mxu0 %v311
    %1573 = vmatpush1.msra.mxu0 %v310
    %1574 = vmatprep.subr.mxu0 %v307
    %1575 = vmatpush1.msra.mxu0 %v306
    %1576 = vmatprep.subr.mxu0 %v303
    %1577 = vmatpush1.msra.mxu0 %v302
    %1578 = vmatprep.subr.mxu0 %v299
    %1579 = vmatpush1.msra.mxu0 %v298
    %1580 = vmatprep.subr.mxu0 %v295
    %1581 = vmatpush1.msra.mxu0 %v294
    %1582 = vmatprep.subr.mxu0 %v291
    %1583 = vmatpush1.msra.mxu0 %v290
    %1584 = vmatprep.subr.mxu0 %v287
    %1585 = vmatpush1.msra.mxu0 %v286
    %1586 = vmatprep.subr.mxu0 %v283
    %1587 = vmatpush1.msra.mxu0 %v282
    %1588 = vmatprep.subr.mxu0 %v279
    %1589 = vmatpush1.msra.mxu0 %v278
    %1590 = vmatprep.subr.mxu0 %v275
    %1591 = vmatpush1.msra.mxu0 %v274
    %1592 = vmatprep.subr.mxu0 %v271
    %1593 = vmatpush1.msra.mxu0 %v270
    %1594 = vmatprep.subr.mxu0 %v267
    %1595 = vmatpush1.msra.mxu0 %v266
    %1596 = vmatprep.subr.mxu0 %v263
    %1597 = vmatpush1.msra.mxu0 %v262
    %1598 = vmatprep.subr.mxu0 %v259
    %1599 = vmatpush1.msra.mxu0 %v258
    %1600 = vmatprep.subr.mxu0 0.0
    %1601 = vmatpush2.msra.mxu0 0.0
    %1602 = vmatprep.subr.mxu0 0.0
    %1603 = vmatpush2.msra.mxu0 0.0
    %1604 = vmatprep.subr.mxu0 0.0
    %1605 = vmatpush2.msra.mxu0 0.0
    %1606 = vmatprep.subr.mxu0 0.0
    %1607 = vmatpush2.msra.mxu0 0.0
    %1608 = vmatprep.subr.mxu0 0.0
    %1609 = vmatpush2.msra.mxu0 0.0
    %1610 = vmatprep.subr.mxu0 0.0
    %1611 = vmatpush2.msra.mxu0 0.0
    %1612 = vmatprep.subr.mxu0 0.0
    %1613 = vmatpush2.msra.mxu0 0.0
    %1614 = vmatprep.subr.mxu0 0.0
    %1615 = vmatpush2.msra.mxu0 0.0
    %1616 = vmatprep.subr.mxu0 0.0
    %1617 = vmatpush2.msra.mxu0 0.0
    %1618 = vmatprep.subr.mxu0 0.0
    %1619 = vmatpush2.msra.mxu0 0.0
    %1620 = vmatprep.subr.mxu0 0.0
    %1621 = vmatpush2.msra.mxu0 0.0
    %1622 = vmatprep.subr.mxu0 0.0
    %1623 = vmatpush2.msra.mxu0 0.0
    %1624 = vmatprep.subr.mxu0 0.0
    %1625 = vmatpush2.msra.mxu0 0.0
    %1626 = vmatprep.subr.mxu0 0.0
    %1627 = vmatpush2.msra.mxu0 0.0
    %1628 = vmatprep.subr.mxu0 0.0
    %1629 = vmatpush2.msra.mxu0 0.0
    %1630 = vmatprep.subr.mxu0 0.0
    %1631 = vmatpush2.msra.mxu0 0.0
    %1632 = vmatprep.mubr.f32.mxu0 0.0
    %1633 = vmatmul.mubr.f32.gmra.mxu0 %v1493
    %v1634 = vpop.f32.mrf.mxu0
    %v1635 = vadd.f32 0.0, %v1634
    %v1636 = vpop.f32.mrf.mxu0
    %v1637 = vadd.f32 0.0, %v1636
    %1638 = vdwg.mxu0
    %v1643 = vcombine.low %v1564, %v1566
    %v1644 = vcombine.low %v1635, %v1637
    %v1646 = vunpack.c.l.s4 1966171168
    %v1647 = vunpack.c.0.s8 %v1646
    %v1648 = vlaneseq
    %v1649 = vshrl.u32 %v1648, 7
    %v1650 = vsub.s32 %v1647, %v1649
    %v1651 = vrot.slane %v1643, %v1650
    %v1653 = vunpack.c.l.s4 1966171168
    %v1654 = vunpack.c.0.s8 %v1653
    %v1655 = vlaneseq
    %v1656 = vshrl.u32 %v1655, 7
    %v1657 = vsub.s32 %v1654, %v1656
    %v1658 = vrot.slane %v1644, %v1657
    %v1659 = vcombine.low %v1651, %v1658
    %v1661 = vunpack.c.l.s4 1966171168
    %v1662 = vunpack.c.0.s8 %v1661
    %v1663 = vlaneseq
    %v1664 = vshrl.u32 %v1663, 7
    %v1665 = vsub.s32 %v1662, %v1664
    %v1666 = vrot.slane %v1659, %v1665
    %v1668 = vadd.f32 %v1496, %v1666
    %v1669 = vmul.f32 %v1668, 0.5
    %v1670 = vtanh.pop %v1669
    %v1671 = vmul.f32 %v1670, 0.5
    %v1672 = vadd.f32 %v1671, 0.5
    %v1674 = vrot.slane %v1668, 3
    %v1676 = vtanh.pop %v1674
    %v1678 = vrot.slane %v1672, 1
    %v1680 = vmul.f32 %v1678, %v1489
    %v1681 = vmul.f32 %v1672, %v1676
    %v1682 = vadd.f32 %v1680, %v1681
    %v1683 = vtanh.pop %v1682
    %v1684 = vrot.slane %v1672, 2
    %v1686 = vmul.f32 %v1684, %v1683
    %s1687 = scalar_lea.vmem [#allocation2], 7
    %v1688 = vld [vmem:[%s1687] ss:$8 sm:$0xf]
    %v1689 = vadd.f32 %v251, %v1688
    %1690 = vmatprep.subr.mxu0 %v317
    %1691 = vmatpush1.msra.mxu0 %v316
    %1692 = vmatprep.subr.mxu0 %v313
    %1693 = vmatpush1.msra.mxu0 %v312
    %1694 = vmatprep.subr.mxu0 %v309
    %1695 = vmatpush1.msra.mxu0 %v308
    %1696 = vmatprep.subr.mxu0 %v305
    %1697 = vmatpush1.msra.mxu0 %v304
    %1698 = vmatprep.subr.mxu0 %v301
    %1699 = vmatpush1.msra.mxu0 %v300
    %1700 = vmatprep.subr.mxu0 %v297
    %1701 = vmatpush1.msra.mxu0 %v296
    %1702 = vmatprep.subr.mxu0 %v293
    %1703 = vmatpush1.msra.mxu0 %v292
    %1704 = vmatprep.subr.mxu0 %v289
    %1705 = vmatpush1.msra.mxu0 %v288
    %1706 = vmatprep.subr.mxu0 %v285
    %1707 = vmatpush1.msra.mxu0 %v284
    %1708 = vmatprep.subr.mxu0 %v281
    %1709 = vmatpush1.msra.mxu0 %v280
    %1710 = vmatprep.subr.mxu0 %v277
    %1711 = vmatpush1.msra.mxu0 %v276
    %1712 = vmatprep.subr.mxu0 %v273
    %1713 = vmatpush1.msra.mxu0 %v272
    %1714 = vmatprep.subr.mxu0 %v269
    %1715 = vmatpush1.msra.mxu0 %v268
    %1716 = vmatprep.subr.mxu0 %v265
    %1717 = vmatpush1.msra.mxu0 %v264
    %1718 = vmatprep.subr.mxu0 %v261
    %1719 = vmatpush1.msra.mxu0 %v260
    %1720 = vmatprep.subr.mxu0 %v257
    %1721 = vmatpush1.msra.mxu0 %v256
    %1722 = vmatprep.subr.mxu0 0.0
    %1723 = vmatpush2.msra.mxu0 0.0
    %1724 = vmatprep.subr.mxu0 0.0
    %1725 = vmatpush2.msra.mxu0 0.0
    %1726 = vmatprep.subr.mxu0 0.0
    %1727 = vmatpush2.msra.mxu0 0.0
    %1728 = vmatprep.subr.mxu0 0.0
    %1729 = vmatpush2.msra.mxu0 0.0
    %1730 = vmatprep.subr.mxu0 0.0
    %1731 = vmatpush2.msra.mxu0 0.0
    %1732 = vmatprep.subr.mxu0 0.0
    %1733 = vmatpush2.msra.mxu0 0.0
    %1734 = vmatprep.subr.mxu0 0.0
    %1735 = vmatpush2.msra.mxu0 0.0
    %1736 = vmatprep.subr.mxu0 0.0
    %1737 = vmatpush2.msra.mxu0 0.0
    %1738 = vmatprep.subr.mxu0 0.0
    %1739 = vmatpush2.msra.mxu0 0.0
    %1740 = vmatprep.subr.mxu0 0.0
    %1741 = vmatpush2.msra.mxu0 0.0
    %1742 = vmatprep.subr.mxu0 0.0
    %1743 = vmatpush2.msra.mxu0 0.0
    %1744 = vmatprep.subr.mxu0 0.0
    %1745 = vmatpush2.msra.mxu0 0.0
    %1746 = vmatprep.subr.mxu0 0.0
    %1747 = vmatpush2.msra.mxu0 0.0
    %1748 = vmatprep.subr.mxu0 0.0
    %1749 = vmatpush2.msra.mxu0 0.0
    %1750 = vmatprep.subr.mxu0 0.0
    %1751 = vmatpush2.msra.mxu0 0.0
    %1752 = vmatprep.subr.mxu0 0.0
    %1753 = vmatpush2.msra.mxu0 0.0
    %1754 = vmatprep.mubr.f32.mxu0 0.0
    %1755 = vmatmul.mubr.f32.gmra.mxu0 %v1686
    %v1756 = vpop.f32.mrf.mxu0
    %v1757 = vadd.f32 0.0, %v1756
    %v1758 = vpop.f32.mrf.mxu0
    %v1759 = vadd.f32 0.0, %v1758
    %1760 = vdwg.mxu0
    %1761 = vmatprep.subr.mxu0 %v319
    %1762 = vmatpush1.msra.mxu0 %v318
    %1763 = vmatprep.subr.mxu0 %v315
    %1764 = vmatpush1.msra.mxu0 %v314
    %1765 = vmatprep.subr.mxu0 %v311
    %1766 = vmatpush1.msra.mxu0 %v310
    %1767 = vmatprep.subr.mxu0 %v307
    %1768 = vmatpush1.msra.mxu0 %v306
    %1769 = vmatprep.subr.mxu0 %v303
    %1770 = vmatpush1.msra.mxu0 %v302
    %1771 = vmatprep.subr.mxu0 %v299
    %1772 = vmatpush1.msra.mxu0 %v298
    %1773 = vmatprep.subr.mxu0 %v295
    %1774 = vmatpush1.msra.mxu0 %v294
    %1775 = vmatprep.subr.mxu0 %v291
    %1776 = vmatpush1.msra.mxu0 %v290
    %1777 = vmatprep.subr.mxu0 %v287
    %1778 = vmatpush1.msra.mxu0 %v286
    %1779 = vmatprep.subr.mxu0 %v283
    %1780 = vmatpush1.msra.mxu0 %v282
    %1781 = vmatprep.subr.mxu0 %v279
    %1782 = vmatpush1.msra.mxu0 %v278
    %1783 = vmatprep.subr.mxu0 %v275
    %1784 = vmatpush1.msra.mxu0 %v274
    %1785 = vmatprep.subr.mxu0 %v271
    %1786 = vmatpush1.msra.mxu0 %v270
    %1787 = vmatprep.subr.mxu0 %v267
    %1788 = vmatpush1.msra.mxu0 %v266
    %1789 = vmatprep.subr.mxu0 %v263
    %1790 = vmatpush1.msra.mxu0 %v262
    %1791 = vmatprep.subr.mxu0 %v259
    %1792 = vmatpush1.msra.mxu0 %v258
    %1793 = vmatprep.subr.mxu0 0.0
    %1794 = vmatpush2.msra.mxu0 0.0
    %1795 = vmatprep.subr.mxu0 0.0
    %1796 = vmatpush2.msra.mxu0 0.0
    %1797 = vmatprep.subr.mxu0 0.0
    %1798 = vmatpush2.msra.mxu0 0.0
    %1799 = vmatprep.subr.mxu0 0.0
    %1800 = vmatpush2.msra.mxu0 0.0
    %1801 = vmatprep.subr.mxu0 0.0
    %1802 = vmatpush2.msra.mxu0 0.0
    %1803 = vmatprep.subr.mxu0 0.0
    %1804 = vmatpush2.msra.mxu0 0.0
    %1805 = vmatprep.subr.mxu0 0.0
    %1806 = vmatpush2.msra.mxu0 0.0
    %1807 = vmatprep.subr.mxu0 0.0
    %1808 = vmatpush2.msra.mxu0 0.0
    %1809 = vmatprep.subr.mxu0 0.0
    %1810 = vmatpush2.msra.mxu0 0.0
    %1811 = vmatprep.subr.mxu0 0.0
    %1812 = vmatpush2.msra.mxu0 0.0
    %1813 = vmatprep.subr.mxu0 0.0
    %1814 = vmatpush2.msra.mxu0 0.0
    %1815 = vmatprep.subr.mxu0 0.0
    %1816 = vmatpush2.msra.mxu0 0.0
    %1817 = vmatprep.subr.mxu0 0.0
    %1818 = vmatpush2.msra.mxu0 0.0
    %1819 = vmatprep.subr.mxu0 0.0
    %1820 = vmatpush2.msra.mxu0 0.0
    %1821 = vmatprep.subr.mxu0 0.0
    %1822 = vmatpush2.msra.mxu0 0.0
    %1823 = vmatprep.subr.mxu0 0.0
    %1824 = vmatpush2.msra.mxu0 0.0
    %1825 = vmatprep.mubr.f32.mxu0 0.0
    %1826 = vmatmul.mubr.f32.gmra.mxu0 %v1686
    %v1827 = vpop.f32.mrf.mxu0
    %v1828 = vadd.f32 0.0, %v1827
    %v1829 = vpop.f32.mrf.mxu0
    %v1830 = vadd.f32 0.0, %v1829
    %1831 = vdwg.mxu0
    %v1836 = vcombine.low %v1757, %v1759
    %v1837 = vcombine.low %v1828, %v1830
    %v1839 = vunpack.c.l.s4 1966171168
    %v1840 = vunpack.c.0.s8 %v1839
    %v1841 = vlaneseq
    %v1842 = vshrl.u32 %v1841, 7
    %v1843 = vsub.s32 %v1840, %v1842
    %v1844 = vrot.slane %v1836, %v1843
    %v1846 = vunpack.c.l.s4 1966171168
    %v1847 = vunpack.c.0.s8 %v1846
    %v1848 = vlaneseq
    %v1849 = vshrl.u32 %v1848, 7
    %v1850 = vsub.s32 %v1847, %v1849
    %v1851 = vrot.slane %v1837, %v1850
    %v1852 = vcombine.low %v1844, %v1851
    %v1854 = vunpack.c.l.s4 1966171168
    %v1855 = vunpack.c.0.s8 %v1854
    %v1856 = vlaneseq
    %v1857 = vshrl.u32 %v1856, 7
    %v1858 = vsub.s32 %v1855, %v1857
    %v1859 = vrot.slane %v1852, %v1858
    %v1861 = vadd.f32 %v1689, %v1859
    %v1862 = vmul.f32 %v1861, 0.5
    %v1863 = vtanh.pop %v1862
    %v1864 = vmul.f32 %v1863, 0.5
    %v1865 = vadd.f32 %v1864, 0.5
    %v1867 = vrot.slane %v1861, 3
    %v1869 = vtanh.pop %v1867
    %v1871 = vrot.slane %v1865, 1
    %v1873 = vmul.f32 %v1871, %v1682
    %v1874 = vmul.f32 %v1865, %v1869
    %v1875 = vadd.f32 %v1873, %v1874
    %v1876 = vtanh.pop %v1875
    %v1877 = vrot.slane %v1865, 2
    %v1879 = vmul.f32 %v1877, %v1876
    %1880 = vmatprep.subr.mxu0 %v317
    %1881 = vmatpush1.msra.mxu0 %v316
    %1882 = vmatprep.subr.mxu0 %v313
    %1883 = vmatpush1.msra.mxu0 %v312
    %1884 = vmatprep.subr.mxu0 %v309
    %1885 = vmatpush1.msra.mxu0 %v308
    %1886 = vmatprep.subr.mxu0 %v305
    %1887 = vmatpush1.msra.mxu0 %v304
    %1888 = vmatprep.subr.mxu0 %v301
    %1889 = vmatpush1.msra.mxu0 %v300
    %1890 = vmatprep.subr.mxu0 %v297
    %1891 = vmatpush1.msra.mxu0 %v296
    %1892 = vmatprep.subr.mxu0 %v293
    %1893 = vmatpush1.msra.mxu0 %v292
    %1894 = vmatprep.subr.mxu0 %v289
    %1895 = vmatpush1.msra.mxu0 %v288
    %1896 = vmatprep.subr.mxu0 %v285
    %1897 = vmatpush1.msra.mxu0 %v284
    %1898 = vmatprep.subr.mxu0 %v281
    %1899 = vmatpush1.msra.mxu0 %v280
    %1900 = vmatprep.subr.mxu0 %v277
    %1901 = vmatpush1.msra.mxu0 %v276
    %1902 = vmatprep.subr.mxu0 %v273
    %1903 = vmatpush1.msra.mxu0 %v272
    %1904 = vmatprep.subr.mxu0 %v269
    %1905 = vmatpush1.msra.mxu0 %v268
    %1906 = vmatprep.subr.mxu0 %v265
    %1907 = vmatpush1.msra.mxu0 %v264
    %1908 = vmatprep.subr.mxu0 %v261
    %1909 = vmatpush1.msra.mxu0 %v260
    %1910 = vmatprep.subr.mxu0 %v257
    %1911 = vmatpush1.msra.mxu0 %v256
    %1912 = vmatprep.subr.mxu0 0.0
    %1913 = vmatpush2.msra.mxu0 0.0
    %1914 = vmatprep.subr.mxu0 0.0
    %1915 = vmatpush2.msra.mxu0 0.0
    %1916 = vmatprep.subr.mxu0 0.0
    %1917 = vmatpush2.msra.mxu0 0.0
    %1918 = vmatprep.subr.mxu0 0.0
    %1919 = vmatpush2.msra.mxu0 0.0
    %1920 = vmatprep.subr.mxu0 0.0
    %1921 = vmatpush2.msra.mxu0 0.0
    %1922 = vmatprep.subr.mxu0 0.0
    %1923 = vmatpush2.msra.mxu0 0.0
    %1924 = vmatprep.subr.mxu0 0.0
    %1925 = vmatpush2.msra.mxu0 0.0
    %1926 = vmatprep.subr.mxu0 0.0
    %1927 = vmatpush2.msra.mxu0 0.0
    %1928 = vmatprep.subr.mxu0 0.0
    %1929 = vmatpush2.msra.mxu0 0.0
    %1930 = vmatprep.subr.mxu0 0.0
    %1931 = vmatpush2.msra.mxu0 0.0
    %1932 = vmatprep.subr.mxu0 0.0
    %1933 = vmatpush2.msra.mxu0 0.0
    %1934 = vmatprep.subr.mxu0 0.0
    %1935 = vmatpush2.msra.mxu0 0.0
    %1936 = vmatprep.subr.mxu0 0.0
    %1937 = vmatpush2.msra.mxu0 0.0
    %1938 = vmatprep.subr.mxu0 0.0
    %1939 = vmatpush2.msra.mxu0 0.0
    %1940 = vmatprep.subr.mxu0 0.0
    %1941 = vmatpush2.msra.mxu0 0.0
    %1942 = vmatprep.subr.mxu0 0.0
    %1943 = vmatpush2.msra.mxu0 0.0
    %1944 = vmatprep.mubr.f32.mxu0 0.0
    %1945 = vmatmul.mubr.f32.gmra.mxu0 %v1879
    %v1946 = vpop.f32.mrf.mxu0
    %v1947 = vadd.f32 0.0, %v1946
    %v1948 = vpop.f32.mrf.mxu0
    %v1949 = vadd.f32 0.0, %v1948
    %1950 = vdwg.mxu0
    %1951 = vmatprep.subr.mxu0 %v319
    %1952 = vmatpush1.msra.mxu0 %v318
    %1953 = vmatprep.subr.mxu0 %v315
    %1954 = vmatpush1.msra.mxu0 %v314
    %1955 = vmatprep.subr.mxu0 %v311
    %1956 = vmatpush1.msra.mxu0 %v310
    %1957 = vmatprep.subr.mxu0 %v307
    %1958 = vmatpush1.msra.mxu0 %v306
    %1959 = vmatprep.subr.mxu0 %v303
    %1960 = vmatpush1.msra.mxu0 %v302
    %1961 = vmatprep.subr.mxu0 %v299
    %1962 = vmatpush1.msra.mxu0 %v298
    %1963 = vmatprep.subr.mxu0 %v295
    %1964 = vmatpush1.msra.mxu0 %v294
    %1965 = vmatprep.subr.mxu0 %v291
    %1966 = vmatpush1.msra.mxu0 %v290
    %1967 = vmatprep.subr.mxu0 %v287
    %1968 = vmatpush1.msra.mxu0 %v286
    %1969 = vmatprep.subr.mxu0 %v283
    %1970 = vmatpush1.msra.mxu0 %v282
    %1971 = vmatprep.subr.mxu0 %v279
    %1972 = vmatpush1.msra.mxu0 %v278
    %1973 = vmatprep.subr.mxu0 %v275
    %1974 = vmatpush1.msra.mxu0 %v274
    %1975 = vmatprep.subr.mxu0 %v271
    %1976 = vmatpush1.msra.mxu0 %v270
    %1977 = vmatprep.subr.mxu0 %v267
    %1978 = vmatpush1.msra.mxu0 %v266
    %1979 = vmatprep.subr.mxu0 %v263
    %1980 = vmatpush1.msra.mxu0 %v262
    %1981 = vmatprep.subr.mxu0 %v259
    %1982 = vmatpush1.msra.mxu0 %v258
    %1983 = vmatprep.subr.mxu0 0.0
    %1984 = vmatpush2.msra.mxu0 0.0
    %1985 = vmatprep.subr.mxu0 0.0
    %1986 = vmatpush2.msra.mxu0 0.0
    %1987 = vmatprep.subr.mxu0 0.0
    %1988 = vmatpush2.msra.mxu0 0.0
    %1989 = vmatprep.subr.mxu0 0.0
    %1990 = vmatpush2.msra.mxu0 0.0
    %1991 = vmatprep.subr.mxu0 0.0
    %1992 = vmatpush2.msra.mxu0 0.0
    %1993 = vmatprep.subr.mxu0 0.0
    %1994 = vmatpush2.msra.mxu0 0.0
    %1995 = vmatprep.subr.mxu0 0.0
    %1996 = vmatpush2.msra.mxu0 0.0
    %1997 = vmatprep.subr.mxu0 0.0
    %1998 = vmatpush2.msra.mxu0 0.0
    %1999 = vmatprep.subr.mxu0 0.0
    %2000 = vmatpush2.msra.mxu0 0.0
    %2001 = vmatprep.subr.mxu0 0.0
    %2002 = vmatpush2.msra.mxu0 0.0
    %2003 = vmatprep.subr.mxu0 0.0
    %2004 = vmatpush2.msra.mxu0 0.0
    %2005 = vmatprep.subr.mxu0 0.0
    %2006 = vmatpush2.msra.mxu0 0.0
    %2007 = vmatprep.subr.mxu0 0.0
    %2008 = vmatpush2.msra.mxu0 0.0
    %2009 = vmatprep.subr.mxu0 0.0
    %2010 = vmatpush2.msra.mxu0 0.0
    %2011 = vmatprep.subr.mxu0 0.0
    %2012 = vmatpush2.msra.mxu0 0.0
    %2013 = vmatprep.subr.mxu0 0.0
    %2014 = vmatpush2.msra.mxu0 0.0
    %2015 = vmatprep.mubr.f32.mxu0 0.0
    %2016 = vmatmul.mubr.f32.gmra.mxu0 %v1879
    %v2017 = vpop.f32.mrf.mxu0
    %v2018 = vadd.f32 0.0, %v2017
    %v2019 = vpop.f32.mrf.mxu0
    %v2020 = vadd.f32 0.0, %v2019
    %2021 = vdwg.mxu0
    %v2026 = vcombine.low %v1947, %v1949
    %v2027 = vcombine.low %v2018, %v2020
    %v2029 = vunpack.c.l.s4 1966171168
    %v2030 = vunpack.c.0.s8 %v2029
    %v2031 = vlaneseq
    %v2032 = vshrl.u32 %v2031, 7
    %v2033 = vsub.s32 %v2030, %v2032
    %v2034 = vrot.slane %v2026, %v2033
    %v2036 = vunpack.c.l.s4 1966171168
    %v2037 = vunpack.c.0.s8 %v2036
    %v2038 = vlaneseq
    %v2039 = vshrl.u32 %v2038, 7
    %v2040 = vsub.s32 %v2037, %v2039
    %v2041 = vrot.slane %v2027, %v2040
    %v2042 = vcombine.low %v2034, %v2041
    %v2044 = vunpack.c.l.s4 1966171168
    %v2045 = vunpack.c.0.s8 %v2044
    %v2046 = vlaneseq
    %v2047 = vshrl.u32 %v2046, 7
    %v2048 = vsub.s32 %v2045, %v2047
    %v2049 = vrot.slane %v2042, %v2048
    %v2051 = vadd.f32 %v1689, %v2049
    %v2052 = vmul.f32 %v2051, 0.5
    %v2053 = vtanh.pop %v2052
    %v2054 = vmul.f32 %v2053, 0.5
    %v2055 = vadd.f32 %v2054, 0.5
    %v2057 = vrot.slane %v2051, 3
    %v2059 = vtanh.pop %v2057
    %v2061 = vrot.slane %v2055, 1
    %v2063 = vmul.f32 %v2061, %v1875
    %v2064 = vmul.f32 %v2055, %v2059
    %v2065 = vadd.f32 %v2063, %v2064
    %v2066 = vtanh.pop %v2065
    %v2067 = vrot.slane %v2055, 2
    %v2069 = vmul.f32 %v2067, %v2066
    %2070 = vmatprep.subr.mxu0 %v317
    %2071 = vmatpush1.msra.mxu0 %v316
    %2072 = vmatprep.subr.mxu0 %v313
    %2073 = vmatpush1.msra.mxu0 %v312
    %2074 = vmatprep.subr.mxu0 %v309
    %2075 = vmatpush1.msra.mxu0 %v308
    %2076 = vmatprep.subr.mxu0 %v305
    %2077 = vmatpush1.msra.mxu0 %v304
    %2078 = vmatprep.subr.mxu0 %v301
    %2079 = vmatpush1.msra.mxu0 %v300
    %2080 = vmatprep.subr.mxu0 %v297
    %2081 = vmatpush1.msra.mxu0 %v296
    %2082 = vmatprep.subr.mxu0 %v293
    %2083 = vmatpush1.msra.mxu0 %v292
    %2084 = vmatprep.subr.mxu0 %v289
    %2085 = vmatpush1.msra.mxu0 %v288
    %2086 = vmatprep.subr.mxu0 %v285
    %2087 = vmatpush1.msra.mxu0 %v284
    %2088 = vmatprep.subr.mxu0 %v281
    %2089 = vmatpush1.msra.mxu0 %v280
    %2090 = vmatprep.subr.mxu0 %v277
    %2091 = vmatpush1.msra.mxu0 %v276
    %2092 = vmatprep.subr.mxu0 %v273
    %2093 = vmatpush1.msra.mxu0 %v272
    %2094 = vmatprep.subr.mxu0 %v269
    %2095 = vmatpush1.msra.mxu0 %v268
    %2096 = vmatprep.subr.mxu0 %v265
    %2097 = vmatpush1.msra.mxu0 %v264
    %2098 = vmatprep.subr.mxu0 %v261
    %2099 = vmatpush1.msra.mxu0 %v260
    %2100 = vmatprep.subr.mxu0 %v257
    %2101 = vmatpush1.msra.mxu0 %v256
    %2102 = vmatprep.subr.mxu0 0.0
    %2103 = vmatpush2.msra.mxu0 0.0
    %2104 = vmatprep.subr.mxu0 0.0
    %2105 = vmatpush2.msra.mxu0 0.0
    %2106 = vmatprep.subr.mxu0 0.0
    %2107 = vmatpush2.msra.mxu0 0.0
    %2108 = vmatprep.subr.mxu0 0.0
    %2109 = vmatpush2.msra.mxu0 0.0
    %2110 = vmatprep.subr.mxu0 0.0
    %2111 = vmatpush2.msra.mxu0 0.0
    %2112 = vmatprep.subr.mxu0 0.0
    %2113 = vmatpush2.msra.mxu0 0.0
    %2114 = vmatprep.subr.mxu0 0.0
    %2115 = vmatpush2.msra.mxu0 0.0
    %2116 = vmatprep.subr.mxu0 0.0
    %2117 = vmatpush2.msra.mxu0 0.0
    %2118 = vmatprep.subr.mxu0 0.0
    %2119 = vmatpush2.msra.mxu0 0.0
    %2120 = vmatprep.subr.mxu0 0.0
    %2121 = vmatpush2.msra.mxu0 0.0
    %2122 = vmatprep.subr.mxu0 0.0
    %2123 = vmatpush2.msra.mxu0 0.0
    %2124 = vmatprep.subr.mxu0 0.0
    %2125 = vmatpush2.msra.mxu0 0.0
    %2126 = vmatprep.subr.mxu0 0.0
    %2127 = vmatpush2.msra.mxu0 0.0
    %2128 = vmatprep.subr.mxu0 0.0
    %2129 = vmatpush2.msra.mxu0 0.0
    %2130 = vmatprep.subr.mxu0 0.0
    %2131 = vmatpush2.msra.mxu0 0.0
    %2132 = vmatprep.subr.mxu0 0.0
    %2133 = vmatpush2.msra.mxu0 0.0
    %2134 = vmatprep.mubr.f32.mxu0 0.0
    %2135 = vmatmul.mubr.f32.gmra.mxu0 %v2069
    %v2136 = vpop.f32.mrf.mxu0
    %v2137 = vadd.f32 0.0, %v2136
    %v2138 = vpop.f32.mrf.mxu0
    %v2139 = vadd.f32 0.0, %v2138
    %2140 = vdwg.mxu0
    %2141 = vmatprep.subr.mxu0 %v319
    %2142 = vmatpush1.msra.mxu0 %v318
    %2143 = vmatprep.subr.mxu0 %v315
    %2144 = vmatpush1.msra.mxu0 %v314
    %2145 = vmatprep.subr.mxu0 %v311
    %2146 = vmatpush1.msra.mxu0 %v310
    %2147 = vmatprep.subr.mxu0 %v307
    %2148 = vmatpush1.msra.mxu0 %v306
    %2149 = vmatprep.subr.mxu0 %v303
    %2150 = vmatpush1.msra.mxu0 %v302
    %2151 = vmatprep.subr.mxu0 %v299
    %2152 = vmatpush1.msra.mxu0 %v298
    %2153 = vmatprep.subr.mxu0 %v295
    %2154 = vmatpush1.msra.mxu0 %v294
    %2155 = vmatprep.subr.mxu0 %v291
    %2156 = vmatpush1.msra.mxu0 %v290
    %2157 = vmatprep.subr.mxu0 %v287
    %2158 = vmatpush1.msra.mxu0 %v286
    %2159 = vmatprep.subr.mxu0 %v283
    %2160 = vmatpush1.msra.mxu0 %v282
    %2161 = vmatprep.subr.mxu0 %v279
    %2162 = vmatpush1.msra.mxu0 %v278
    %2163 = vmatprep.subr.mxu0 %v275
    %2164 = vmatpush1.msra.mxu0 %v274
    %2165 = vmatprep.subr.mxu0 %v271
    %2166 = vmatpush1.msra.mxu0 %v270
    %2167 = vmatprep.subr.mxu0 %v267
    %2168 = vmatpush1.msra.mxu0 %v266
    %2169 = vmatprep.subr.mxu0 %v263
    %2170 = vmatpush1.msra.mxu0 %v262
    %2171 = vmatprep.subr.mxu0 %v259
    %2172 = vmatpush1.msra.mxu0 %v258
    %2173 = vmatprep.subr.mxu0 0.0
    %2174 = vmatpush2.msra.mxu0 0.0
    %2175 = vmatprep.subr.mxu0 0.0
    %2176 = vmatpush2.msra.mxu0 0.0
    %2177 = vmatprep.subr.mxu0 0.0
    %2178 = vmatpush2.msra.mxu0 0.0
    %2179 = vmatprep.subr.mxu0 0.0
    %2180 = vmatpush2.msra.mxu0 0.0
    %2181 = vmatprep.subr.mxu0 0.0
    %2182 = vmatpush2.msra.mxu0 0.0
    %2183 = vmatprep.subr.mxu0 0.0
    %2184 = vmatpush2.msra.mxu0 0.0
    %2185 = vmatprep.subr.mxu0 0.0
    %2186 = vmatpush2.msra.mxu0 0.0
    %2187 = vmatprep.subr.mxu0 0.0
    %2188 = vmatpush2.msra.mxu0 0.0
    %2189 = vmatprep.subr.mxu0 0.0
    %2190 = vmatpush2.msra.mxu0 0.0
    %2191 = vmatprep.subr.mxu0 0.0
    %2192 = vmatpush2.msra.mxu0 0.0
    %2193 = vmatprep.subr.mxu0 0.0
    %2194 = vmatpush2.msra.mxu0 0.0
    %2195 = vmatprep.subr.mxu0 0.0
    %2196 = vmatpush2.msra.mxu0 0.0
    %2197 = vmatprep.subr.mxu0 0.0
    %2198 = vmatpush2.msra.mxu0 0.0
    %2199 = vmatprep.subr.mxu0 0.0
    %2200 = vmatpush2.msra.mxu0 0.0
    %2201 = vmatprep.subr.mxu0 0.0
    %2202 = vmatpush2.msra.mxu0 0.0
    %2203 = vmatprep.subr.mxu0 0.0
    %2204 = vmatpush2.msra.mxu0 0.0
    %2205 = vmatprep.mubr.f32.mxu0 0.0
    %2206 = vmatmul.mubr.f32.gmra.mxu0 %v2069
    %v2207 = vpop.f32.mrf.mxu0
    %v2208 = vadd.f32 0.0, %v2207
    %v2209 = vpop.f32.mrf.mxu0
    %v2210 = vadd.f32 0.0, %v2209
    %2211 = vdwg.mxu0
    %v2216 = vcombine.low %v2137, %v2139
    %v2217 = vcombine.low %v2208, %v2210
    %v2219 = vunpack.c.l.s4 1966171168
    %v2220 = vunpack.c.0.s8 %v2219
    %v2221 = vlaneseq
    %v2222 = vshrl.u32 %v2221, 7
    %v2223 = vsub.s32 %v2220, %v2222
    %v2224 = vrot.slane %v2216, %v2223
    %v2226 = vunpack.c.l.s4 1966171168
    %v2227 = vunpack.c.0.s8 %v2226
    %v2228 = vlaneseq
    %v2229 = vshrl.u32 %v2228, 7
    %v2230 = vsub.s32 %v2227, %v2229
    %v2231 = vrot.slane %v2217, %v2230
    %v2232 = vcombine.low %v2224, %v2231
    %v2234 = vunpack.c.l.s4 1966171168
    %v2235 = vunpack.c.0.s8 %v2234
    %v2236 = vlaneseq
    %v2237 = vshrl.u32 %v2236, 7
    %v2238 = vsub.s32 %v2235, %v2237
    %v2239 = vrot.slane %v2232, %v2238
    %v2241 = vadd.f32 %v1689, %v2239
    %v2242 = vmul.f32 %v2241, 0.5
    %v2243 = vtanh.pop %v2242
    %v2244 = vmul.f32 %v2243, 0.5
    %v2245 = vadd.f32 %v2244, 0.5
    %v2247 = vrot.slane %v2241, 3
    %v2249 = vtanh.pop %v2247
    %v2251 = vrot.slane %v2245, 1
    %v2253 = vmul.f32 %v2251, %v2065
    %v2254 = vmul.f32 %v2245, %v2249
    %v2255 = vadd.f32 %v2253, %v2254
    %v2256 = vtanh.pop %v2255
    %v2257 = vrot.slane %v2245, 2
    %v2259 = vmul.f32 %v2257, %v2256
    %2260 = vmatprep.subr.mxu0 %v317
    %2261 = vmatpush1.msra.mxu0 %v316
    %2262 = vmatprep.subr.mxu0 %v313
    %2263 = vmatpush1.msra.mxu0 %v312
    %2264 = vmatprep.subr.mxu0 %v309
    %2265 = vmatpush1.msra.mxu0 %v308
    %2266 = vmatprep.subr.mxu0 %v305
    %2267 = vmatpush1.msra.mxu0 %v304
    %2268 = vmatprep.subr.mxu0 %v301
    %2269 = vmatpush1.msra.mxu0 %v300
    %2270 = vmatprep.subr.mxu0 %v297
    %2271 = vmatpush1.msra.mxu0 %v296
    %2272 = vmatprep.subr.mxu0 %v293
    %2273 = vmatpush1.msra.mxu0 %v292
    %2274 = vmatprep.subr.mxu0 %v289
    %2275 = vmatpush1.msra.mxu0 %v288
    %2276 = vmatprep.subr.mxu0 %v285
    %2277 = vmatpush1.msra.mxu0 %v284
    %2278 = vmatprep.subr.mxu0 %v281
    %2279 = vmatpush1.msra.mxu0 %v280
    %2280 = vmatprep.subr.mxu0 %v277
    %2281 = vmatpush1.msra.mxu0 %v276
    %2282 = vmatprep.subr.mxu0 %v273
    %2283 = vmatpush1.msra.mxu0 %v272
    %2284 = vmatprep.subr.mxu0 %v269
    %2285 = vmatpush1.msra.mxu0 %v268
    %2286 = vmatprep.subr.mxu0 %v265
    %2287 = vmatpush1.msra.mxu0 %v264
    %2288 = vmatprep.subr.mxu0 %v261
    %2289 = vmatpush1.msra.mxu0 %v260
    %2290 = vmatprep.subr.mxu0 %v257
    %2291 = vmatpush1.msra.mxu0 %v256
    %2292 = vmatprep.subr.mxu0 0.0
    %2293 = vmatpush2.msra.mxu0 0.0
    %2294 = vmatprep.subr.mxu0 0.0
    %2295 = vmatpush2.msra.mxu0 0.0
    %2296 = vmatprep.subr.mxu0 0.0
    %2297 = vmatpush2.msra.mxu0 0.0
    %2298 = vmatprep.subr.mxu0 0.0
    %2299 = vmatpush2.msra.mxu0 0.0
    %2300 = vmatprep.subr.mxu0 0.0
    %2301 = vmatpush2.msra.mxu0 0.0
    %2302 = vmatprep.subr.mxu0 0.0
    %2303 = vmatpush2.msra.mxu0 0.0
    %2304 = vmatprep.subr.mxu0 0.0
    %2305 = vmatpush2.msra.mxu0 0.0
    %2306 = vmatprep.subr.mxu0 0.0
    %2307 = vmatpush2.msra.mxu0 0.0
    %2308 = vmatprep.subr.mxu0 0.0
    %2309 = vmatpush2.msra.mxu0 0.0
    %2310 = vmatprep.subr.mxu0 0.0
    %2311 = vmatpush2.msra.mxu0 0.0
    %2312 = vmatprep.subr.mxu0 0.0
    %2313 = vmatpush2.msra.mxu0 0.0
    %2314 = vmatprep.subr.mxu0 0.0
    %2315 = vmatpush2.msra.mxu0 0.0
    %2316 = vmatprep.subr.mxu0 0.0
    %2317 = vmatpush2.msra.mxu0 0.0
    %2318 = vmatprep.subr.mxu0 0.0
    %2319 = vmatpush2.msra.mxu0 0.0
    %2320 = vmatprep.subr.mxu0 0.0
    %2321 = vmatpush2.msra.mxu0 0.0
    %2322 = vmatprep.subr.mxu0 0.0
    %2323 = vmatpush2.msra.mxu0 0.0
    %2324 = vmatprep.mubr.f32.mxu0 0.0
    %2325 = vmatmul.mubr.f32.gmra.mxu0 %v2259
    %v2326 = vpop.f32.mrf.mxu0
    %v2327 = vadd.f32 0.0, %v2326
    %v2328 = vpop.f32.mrf.mxu0
    %v2329 = vadd.f32 0.0, %v2328
    %2330 = vdwg.mxu0
    %2331 = vmatprep.subr.mxu0 %v319
    %2332 = vmatpush1.msra.mxu0 %v318
    %2333 = vmatprep.subr.mxu0 %v315
    %2334 = vmatpush1.msra.mxu0 %v314
    %2335 = vmatprep.subr.mxu0 %v311
    %2336 = vmatpush1.msra.mxu0 %v310
    %2337 = vmatprep.subr.mxu0 %v307
    %2338 = vmatpush1.msra.mxu0 %v306
    %2339 = vmatprep.subr.mxu0 %v303
    %2340 = vmatpush1.msra.mxu0 %v302
    %2341 = vmatprep.subr.mxu0 %v299
    %2342 = vmatpush1.msra.mxu0 %v298
    %2343 = vmatprep.subr.mxu0 %v295
    %2344 = vmatpush1.msra.mxu0 %v294
    %2345 = vmatprep.subr.mxu0 %v291
    %2346 = vmatpush1.msra.mxu0 %v290
    %2347 = vmatprep.subr.mxu0 %v287
    %2348 = vmatpush1.msra.mxu0 %v286
    %2349 = vmatprep.subr.mxu0 %v283
    %2350 = vmatpush1.msra.mxu0 %v282
    %2351 = vmatprep.subr.mxu0 %v279
    %2352 = vmatpush1.msra.mxu0 %v278
    %2353 = vmatprep.subr.mxu0 %v275
    %2354 = vmatpush1.msra.mxu0 %v274
    %2355 = vmatprep.subr.mxu0 %v271
    %2356 = vmatpush1.msra.mxu0 %v270
    %2357 = vmatprep.subr.mxu0 %v267
    %2358 = vmatpush1.msra.mxu0 %v266
    %2359 = vmatprep.subr.mxu0 %v263
    %2360 = vmatpush1.msra.mxu0 %v262
    %2361 = vmatprep.subr.mxu0 %v259
    %2362 = vmatpush1.msra.mxu0 %v258
    %2363 = vmatprep.subr.mxu0 0.0
    %2364 = vmatpush2.msra.mxu0 0.0
    %2365 = vmatprep.subr.mxu0 0.0
    %2366 = vmatpush2.msra.mxu0 0.0
    %2367 = vmatprep.subr.mxu0 0.0
    %2368 = vmatpush2.msra.mxu0 0.0
    %2369 = vmatprep.subr.mxu0 0.0
    %2370 = vmatpush2.msra.mxu0 0.0
    %2371 = vmatprep.subr.mxu0 0.0
    %2372 = vmatpush2.msra.mxu0 0.0
    %2373 = vmatprep.subr.mxu0 0.0
    %2374 = vmatpush2.msra.mxu0 0.0
    %2375 = vmatprep.subr.mxu0 0.0
    %2376 = vmatpush2.msra.mxu0 0.0
    %2377 = vmatprep.subr.mxu0 0.0
    %2378 = vmatpush2.msra.mxu0 0.0
    %2379 = vmatprep.subr.mxu0 0.0
    %2380 = vmatpush2.msra.mxu0 0.0
    %2381 = vmatprep.subr.mxu0 0.0
    %2382 = vmatpush2.msra.mxu0 0.0
    %2383 = vmatprep.subr.mxu0 0.0
    %2384 = vmatpush2.msra.mxu0 0.0
    %2385 = vmatprep.subr.mxu0 0.0
    %2386 = vmatpush2.msra.mxu0 0.0
    %2387 = vmatprep.subr.mxu0 0.0
    %2388 = vmatpush2.msra.mxu0 0.0
    %2389 = vmatprep.subr.mxu0 0.0
    %2390 = vmatpush2.msra.mxu0 0.0
    %2391 = vmatprep.subr.mxu0 0.0
    %2392 = vmatpush2.msra.mxu0 0.0
    %2393 = vmatprep.subr.mxu0 0.0
    %2394 = vmatpush2.msra.mxu0 0.0
    %2395 = vmatprep.mubr.f32.mxu0 0.0
    %2396 = vmatmul.mubr.f32.gmra.mxu0 %v2259
    %v2397 = vpop.f32.mrf.mxu0
    %v2398 = vadd.f32 0.0, %v2397
    %v2399 = vpop.f32.mrf.mxu0
    %v2400 = vadd.f32 0.0, %v2399
    %2401 = vdwg.mxu0
    %v2406 = vcombine.low %v2327, %v2329
    %v2407 = vcombine.low %v2398, %v2400
    %v2409 = vunpack.c.l.s4 1966171168
    %v2410 = vunpack.c.0.s8 %v2409
    %v2411 = vlaneseq
    %v2412 = vshrl.u32 %v2411, 7
    %v2413 = vsub.s32 %v2410, %v2412
    %v2414 = vrot.slane %v2406, %v2413
    %v2416 = vunpack.c.l.s4 1966171168
    %v2417 = vunpack.c.0.s8 %v2416
    %v2418 = vlaneseq
    %v2419 = vshrl.u32 %v2418, 7
    %v2420 = vsub.s32 %v2417, %v2419
    %v2421 = vrot.slane %v2407, %v2420
    %v2422 = vcombine.low %v2414, %v2421
    %v2424 = vunpack.c.l.s4 1966171168
    %v2425 = vunpack.c.0.s8 %v2424
    %v2426 = vlaneseq
    %v2427 = vshrl.u32 %v2426, 7
    %v2428 = vsub.s32 %v2425, %v2427
    %v2429 = vrot.slane %v2422, %v2428
    %v2431 = vadd.f32 %v1689, %v2429
    %v2432 = vmul.f32 %v2431, 0.5
    %v2433 = vtanh.pop %v2432
    %v2434 = vmul.f32 %v2433, 0.5
    %v2435 = vadd.f32 %v2434, 0.5
    %v2437 = vrot.slane %v2431, 3
    %v2439 = vtanh.pop %v2437
    %v2441 = vrot.slane %v2435, 1
    %v2443 = vmul.f32 %v2441, %v2255
    %v2444 = vmul.f32 %v2435, %v2439
    %v2445 = vadd.f32 %v2443, %v2444
    %v2446 = vtanh.pop %v2445
    %v2447 = vrot.slane %v2435, 2
    %v2449 = vmul.f32 %v2447, %v2446
    %s2450 = smul.u32 8, 4
    %s2451 = smul.u32 %s2450, 8
    %s2452 = sshll.u32 %s2451, 4
    %2453 = dma.done [#allocation4], %s2452
    %v2454 = vld [vmem:[#allocation3] sm:$0xff]
    %v2455 = vld [vmem:[#allocation3 + $0x8] sm:$0xff]
    %v2456 = vld [vmem:[#allocation3 + $0x10] sm:$0xff]
    %v2457 = vld [vmem:[#allocation3 + $0x18] sm:$0xff]
    %v2458 = vld [vmem:[#allocation3 + $0x20] sm:$0xff]
    %v2459 = vld [vmem:[#allocation3 + $0x28] sm:$0xff]
    %v2460 = vld [vmem:[#allocation3 + $0x30] sm:$0xff]
    %v2461 = vld [vmem:[#allocation3 + $0x38] sm:$0xff]
    %v2462 = vld [vmem:[#allocation3 + $0x40] sm:$0xff]
    %v2463 = vld [vmem:[#allocation3 + $0x48] sm:$0xff]
    %v2464 = vld [vmem:[#allocation3 + $0x50] sm:$0xff]
    %v2465 = vld [vmem:[#allocation3 + $0x58] sm:$0xff]
    %v2466 = vld [vmem:[#allocation3 + $0x60] sm:$0xff]
    %v2467 = vld [vmem:[#allocation3 + $0x68] sm:$0xff]
    %v2468 = vld [vmem:[#allocation3 + $0x70] sm:$0xff]
    %v2469 = vld [vmem:[#allocation3 + $0x78] sm:$0xff]
    %v2470 = vld [vmem:[#allocation3 + $0x80] sm:$0xff]
    %v2471 = vld [vmem:[#allocation3 + $0x88] sm:$0xff]
    %v2472 = vld [vmem:[#allocation3 + $0x90] sm:$0xff]
    %v2473 = vld [vmem:[#allocation3 + $0x98] sm:$0xff]
    %v2474 = vld [vmem:[#allocation3 + $0xa0] sm:$0xff]
    %v2475 = vld [vmem:[#allocation3 + $0xa8] sm:$0xff]
    %v2476 = vld [vmem:[#allocation3 + $0xb0] sm:$0xff]
    %v2477 = vld [vmem:[#allocation3 + $0xb8] sm:$0xff]
    %v2478 = vld [vmem:[#allocation3 + $0xc0] sm:$0xff]
    %v2479 = vld [vmem:[#allocation3 + $0xc8] sm:$0xff]
    %v2480 = vld [vmem:[#allocation3 + $0xd0] sm:$0xff]
    %v2481 = vld [vmem:[#allocation3 + $0xd8] sm:$0xff]
    %v2482 = vld [vmem:[#allocation3 + $0xe0] sm:$0xff]
    %v2483 = vld [vmem:[#allocation3 + $0xe8] sm:$0xff]
    %v2484 = vld [vmem:[#allocation3 + $0xf0] sm:$0xff]
    %v2485 = vld [vmem:[#allocation3 + $0xf8] sm:$0xff]
    %v2486 = vld [vmem:[#allocation11] sm:$0xff]
    %v2488 = vlaneseq
    %v2489 = vshrl.u32 %v2488, 7
    %v2490 = vsub.s32 0, %v2489
    %v2491 = vrot.slane %v2486, %v2490
    %v2492 = vlaneseq
    %v2493 = vshrl.u32 %v2492, 7
    %v2494 = vsub.s32 1, %v2493
    %v2495 = vrot.slane %v2486, %v2494
    %v2496 = vlaneseq
    %v2497 = vshrl.u32 %v2496, 7
    %v2498 = vsub.s32 2, %v2497
    %v2499 = vrot.slane %v2486, %v2498
    %v2500 = vlaneseq
    %v2501 = vshrl.u32 %v2500, 7
    %v2502 = vsub.s32 3, %v2501
    %v2503 = vrot.slane %v2486, %v2502
    %v2504 = vlaneseq
    %v2505 = vshrl.u32 %v2504, 7
    %v2506 = vsub.s32 4, %v2505
    %v2507 = vrot.slane %v2486, %v2506
    %v2508 = vlaneseq
    %v2509 = vshrl.u32 %v2508, 7
    %v2510 = vsub.s32 5, %v2509
    %v2511 = vrot.slane %v2486, %v2510
    %v2512 = vlaneseq
    %v2513 = vshrl.u32 %v2512, 7
    %v2514 = vsub.s32 6, %v2513
    %v2515 = vrot.slane %v2486, %v2514
    %v2516 = vlaneseq
    %v2517 = vshrl.u32 %v2516, 7
    %v2518 = vsub.s32 7, %v2517
    %v2519 = vrot.slane %v2486, %v2518
    %v2529 = vsel %vm101, %v2449, 0
    %2531 = vmatprep.subr.mxu0 0.0
    %2532 = vmatpush1.msra.mxu0 0.0
    %2533 = vmatprep.subr.mxu0 0.0
    %2534 = vmatpush1.msra.mxu0 0.0
    %2535 = vmatprep.subr.mxu0 0.0
    %2536 = vmatpush1.msra.mxu0 0.0
    %2537 = vmatprep.subr.mxu0 0.0
    %2538 = vmatpush1.msra.mxu0 0.0
    %2539 = vmatprep.subr.mxu0 0.0
    %2540 = vmatpush1.msra.mxu0 0.0
    %2541 = vmatprep.subr.mxu0 0.0
    %2542 = vmatpush1.msra.mxu0 0.0
    %2543 = vmatprep.subr.mxu0 0.0
    %2544 = vmatpush1.msra.mxu0 0.0
    %2545 = vmatprep.subr.mxu0 0.0
    %2546 = vmatpush1.msra.mxu0 0.0
    %2547 = vmatprep.subr.mxu0 0.0
    %2548 = vmatpush1.msra.mxu0 0.0
    %2549 = vmatprep.subr.mxu0 0.0
    %2550 = vmatpush1.msra.mxu0 0.0
    %2551 = vmatprep.subr.mxu0 0.0
    %2552 = vmatpush1.msra.mxu0 0.0
    %2553 = vmatprep.subr.mxu0 0.0
    %2554 = vmatpush1.msra.mxu0 0.0
    %2555 = vmatprep.subr.mxu0 %v2479
    %2556 = vmatpush1.msra.mxu0 %v2478
    %2557 = vmatprep.subr.mxu0 %v2471
    %2558 = vmatpush1.msra.mxu0 %v2470
    %2559 = vmatprep.subr.mxu0 %v2463
    %2560 = vmatpush1.msra.mxu0 %v2462
    %2561 = vmatprep.subr.mxu0 %v2455
    %2562 = vmatpush1.msra.mxu0 %v2454
    %2563 = vmatprep.subr.mxu0 0.0
    %2564 = vmatpush2.msra.mxu0 0.0
    %2565 = vmatprep.subr.mxu0 0.0
    %2566 = vmatpush2.msra.mxu0 0.0
    %2567 = vmatprep.subr.mxu0 0.0
    %2568 = vmatpush2.msra.mxu0 0.0
    %2569 = vmatprep.subr.mxu0 0.0
    %2570 = vmatpush2.msra.mxu0 0.0
    %2571 = vmatprep.subr.mxu0 0.0
    %2572 = vmatpush2.msra.mxu0 0.0
    %2573 = vmatprep.subr.mxu0 0.0
    %2574 = vmatpush2.msra.mxu0 0.0
    %2575 = vmatprep.subr.mxu0 0.0
    %2576 = vmatpush2.msra.mxu0 0.0
    %2577 = vmatprep.subr.mxu0 0.0
    %2578 = vmatpush2.msra.mxu0 0.0
    %2579 = vmatprep.subr.mxu0 0.0
    %2580 = vmatpush2.msra.mxu0 0.0
    %2581 = vmatprep.subr.mxu0 0.0
    %2582 = vmatpush2.msra.mxu0 0.0
    %2583 = vmatprep.subr.mxu0 0.0
    %2584 = vmatpush2.msra.mxu0 0.0
    %2585 = vmatprep.subr.mxu0 0.0
    %2586 = vmatpush2.msra.mxu0 0.0
    %2587 = vmatprep.subr.mxu0 0.0
    %2588 = vmatpush2.msra.mxu0 0.0
    %2589 = vmatprep.subr.mxu0 0.0
    %2590 = vmatpush2.msra.mxu0 0.0
    %2591 = vmatprep.subr.mxu0 0.0
    %2592 = vmatpush2.msra.mxu0 0.0
    %2593 = vmatprep.subr.mxu0 0.0
    %2594 = vmatpush2.msra.mxu0 0.0
    %2595 = vmatprep.mubr.f32.mxu0 0.0
    %2596 = vmatmul.mubr.f32.gmra.mxu0 %v2529
    %v2597 = vpop.f32.mrf.mxu0
    %v2598 = vadd.f32 %v2491, %v2597
    %v2599 = vpop.f32.mrf.mxu0
    %v2600 = vadd.f32 %v2495, %v2599
    %2601 = vdwg.mxu0
    %2602 = vmatprep.subr.mxu0 0.0
    %2603 = vmatpush1.msra.mxu0 0.0
    %2604 = vmatprep.subr.mxu0 0.0
    %2605 = vmatpush1.msra.mxu0 0.0
    %2606 = vmatprep.subr.mxu0 0.0
    %2607 = vmatpush1.msra.mxu0 0.0
    %2608 = vmatprep.subr.mxu0 0.0
    %2609 = vmatpush1.msra.mxu0 0.0
    %2610 = vmatprep.subr.mxu0 0.0
    %2611 = vmatpush1.msra.mxu0 0.0
    %2612 = vmatprep.subr.mxu0 0.0
    %2613 = vmatpush1.msra.mxu0 0.0
    %2614 = vmatprep.subr.mxu0 0.0
    %2615 = vmatpush1.msra.mxu0 0.0
    %2616 = vmatprep.subr.mxu0 0.0
    %2617 = vmatpush1.msra.mxu0 0.0
    %2618 = vmatprep.subr.mxu0 0.0
    %2619 = vmatpush1.msra.mxu0 0.0
    %2620 = vmatprep.subr.mxu0 0.0
    %2621 = vmatpush1.msra.mxu0 0.0
    %2622 = vmatprep.subr.mxu0 0.0
    %2623 = vmatpush1.msra.mxu0 0.0
    %2624 = vmatprep.subr.mxu0 0.0
    %2625 = vmatpush1.msra.mxu0 0.0
    %2626 = vmatprep.subr.mxu0 %v2481
    %2627 = vmatpush1.msra.mxu0 %v2480
    %2628 = vmatprep.subr.mxu0 %v2473
    %2629 = vmatpush1.msra.mxu0 %v2472
    %2630 = vmatprep.subr.mxu0 %v2465
    %2631 = vmatpush1.msra.mxu0 %v2464
    %2632 = vmatprep.subr.mxu0 %v2457
    %2633 = vmatpush1.msra.mxu0 %v2456
    %2634 = vmatprep.subr.mxu0 0.0
    %2635 = vmatpush2.msra.mxu0 0.0
    %2636 = vmatprep.subr.mxu0 0.0
    %2637 = vmatpush2.msra.mxu0 0.0
    %2638 = vmatprep.subr.mxu0 0.0
    %2639 = vmatpush2.msra.mxu0 0.0
    %2640 = vmatprep.subr.mxu0 0.0
    %2641 = vmatpush2.msra.mxu0 0.0
    %2642 = vmatprep.subr.mxu0 0.0
    %2643 = vmatpush2.msra.mxu0 0.0
    %2644 = vmatprep.subr.mxu0 0.0
    %2645 = vmatpush2.msra.mxu0 0.0
    %2646 = vmatprep.subr.mxu0 0.0
    %2647 = vmatpush2.msra.mxu0 0.0
    %2648 = vmatprep.subr.mxu0 0.0
    %2649 = vmatpush2.msra.mxu0 0.0
    %2650 = vmatprep.subr.mxu0 0.0
    %2651 = vmatpush2.msra.mxu0 0.0
    %2652 = vmatprep.subr.mxu0 0.0
    %2653 = vmatpush2.msra.mxu0 0.0
    %2654 = vmatprep.subr.mxu0 0.0
    %2655 = vmatpush2.msra.mxu0 0.0
    %2656 = vmatprep.subr.mxu0 0.0
    %2657 = vmatpush2.msra.mxu0 0.0
    %2658 = vmatprep.subr.mxu0 0.0
    %2659 = vmatpush2.msra.mxu0 0.0
    %2660 = vmatprep.subr.mxu0 0.0
    %2661 = vmatpush2.msra.mxu0 0.0
    %2662 = vmatprep.subr.mxu0 0.0
    %2663 = vmatpush2.msra.mxu0 0.0
    %2664 = vmatprep.subr.mxu0 0.0
    %2665 = vmatpush2.msra.mxu0 0.0
    %2666 = vmatprep.mubr.f32.mxu0 0.0
    %2667 = vmatmul.mubr.f32.gmra.mxu0 %v2529
    %v2668 = vpop.f32.mrf.mxu0
    %v2669 = vadd.f32 %v2499, %v2668
    %v2670 = vpop.f32.mrf.mxu0
    %v2671 = vadd.f32 %v2503, %v2670
    %2672 = vdwg.mxu0
    %2673 = vmatprep.subr.mxu0 0.0
    %2674 = vmatpush1.msra.mxu0 0.0
    %2675 = vmatprep.subr.mxu0 0.0
    %2676 = vmatpush1.msra.mxu0 0.0
    %2677 = vmatprep.subr.mxu0 0.0
    %2678 = vmatpush1.msra.mxu0 0.0
    %2679 = vmatprep.subr.mxu0 0.0
    %2680 = vmatpush1.msra.mxu0 0.0
    %2681 = vmatprep.subr.mxu0 0.0
    %2682 = vmatpush1.msra.mxu0 0.0
    %2683 = vmatprep.subr.mxu0 0.0
    %2684 = vmatpush1.msra.mxu0 0.0
    %2685 = vmatprep.subr.mxu0 0.0
    %2686 = vmatpush1.msra.mxu0 0.0
    %2687 = vmatprep.subr.mxu0 0.0
    %2688 = vmatpush1.msra.mxu0 0.0
    %2689 = vmatprep.subr.mxu0 0.0
    %2690 = vmatpush1.msra.mxu0 0.0
    %2691 = vmatprep.subr.mxu0 0.0
    %2692 = vmatpush1.msra.mxu0 0.0
    %2693 = vmatprep.subr.mxu0 0.0
    %2694 = vmatpush1.msra.mxu0 0.0
    %2695 = vmatprep.subr.mxu0 0.0
    %2696 = vmatpush1.msra.mxu0 0.0
    %2697 = vmatprep.subr.mxu0 %v2483
    %2698 = vmatpush1.msra.mxu0 %v2482
    %2699 = vmatprep.subr.mxu0 %v2475
    %2700 = vmatpush1.msra.mxu0 %v2474
    %2701 = vmatprep.subr.mxu0 %v2467
    %2702 = vmatpush1.msra.mxu0 %v2466
    %2703 = vmatprep.subr.mxu0 %v2459
    %2704 = vmatpush1.msra.mxu0 %v2458
    %2705 = vmatprep.subr.mxu0 0.0
    %2706 = vmatpush2.msra.mxu0 0.0
    %2707 = vmatprep.subr.mxu0 0.0
    %2708 = vmatpush2.msra.mxu0 0.0
    %2709 = vmatprep.subr.mxu0 0.0
    %2710 = vmatpush2.msra.mxu0 0.0
    %2711 = vmatprep.subr.mxu0 0.0
    %2712 = vmatpush2.msra.mxu0 0.0
    %2713 = vmatprep.subr.mxu0 0.0
    %2714 = vmatpush2.msra.mxu0 0.0
    %2715 = vmatprep.subr.mxu0 0.0
    %2716 = vmatpush2.msra.mxu0 0.0
    %2717 = vmatprep.subr.mxu0 0.0
    %2718 = vmatpush2.msra.mxu0 0.0
    %2719 = vmatprep.subr.mxu0 0.0
    %2720 = vmatpush2.msra.mxu0 0.0
    %2721 = vmatprep.subr.mxu0 0.0
    %2722 = vmatpush2.msra.mxu0 0.0
    %2723 = vmatprep.subr.mxu0 0.0
    %2724 = vmatpush2.msra.mxu0 0.0
    %2725 = vmatprep.subr.mxu0 0.0
    %2726 = vmatpush2.msra.mxu0 0.0
    %2727 = vmatprep.subr.mxu0 0.0
    %2728 = vmatpush2.msra.mxu0 0.0
    %2729 = vmatprep.subr.mxu0 0.0
    %2730 = vmatpush2.msra.mxu0 0.0
    %2731 = vmatprep.subr.mxu0 0.0
    %2732 = vmatpush2.msra.mxu0 0.0
    %2733 = vmatprep.subr.mxu0 0.0
    %2734 = vmatpush2.msra.mxu0 0.0
    %2735 = vmatprep.subr.mxu0 0.0
    %2736 = vmatpush2.msra.mxu0 0.0
    %2737 = vmatprep.mubr.f32.mxu0 0.0
    %2738 = vmatmul.mubr.f32.gmra.mxu0 %v2529
    %v2739 = vpop.f32.mrf.mxu0
    %v2740 = vadd.f32 %v2507, %v2739
    %v2741 = vpop.f32.mrf.mxu0
    %v2742 = vadd.f32 %v2511, %v2741
    %2743 = vdwg.mxu0
    %2744 = vmatprep.subr.mxu0 0.0
    %2745 = vmatpush1.msra.mxu0 0.0
    %2746 = vmatprep.subr.mxu0 0.0
    %2747 = vmatpush1.msra.mxu0 0.0
    %2748 = vmatprep.subr.mxu0 0.0
    %2749 = vmatpush1.msra.mxu0 0.0
    %2750 = vmatprep.subr.mxu0 0.0
    %2751 = vmatpush1.msra.mxu0 0.0
    %2752 = vmatprep.subr.mxu0 0.0
    %2753 = vmatpush1.msra.mxu0 0.0
    %2754 = vmatprep.subr.mxu0 0.0
    %2755 = vmatpush1.msra.mxu0 0.0
    %2756 = vmatprep.subr.mxu0 0.0
    %2757 = vmatpush1.msra.mxu0 0.0
    %2758 = vmatprep.subr.mxu0 0.0
    %2759 = vmatpush1.msra.mxu0 0.0
    %2760 = vmatprep.subr.mxu0 0.0
    %2761 = vmatpush1.msra.mxu0 0.0
    %2762 = vmatprep.subr.mxu0 0.0
    %2763 = vmatpush1.msra.mxu0 0.0
    %2764 = vmatprep.subr.mxu0 0.0
    %2765 = vmatpush1.msra.mxu0 0.0
    %2766 = vmatprep.subr.mxu0 0.0
    %2767 = vmatpush1.msra.mxu0 0.0
    %2768 = vmatprep.subr.mxu0 %v2485
    %2769 = vmatpush1.msra.mxu0 %v2484
    %2770 = vmatprep.subr.mxu0 %v2477
    %2771 = vmatpush1.msra.mxu0 %v2476
    %2772 = vmatprep.subr.mxu0 %v2469
    %2773 = vmatpush1.msra.mxu0 %v2468
    %2774 = vmatprep.subr.mxu0 %v2461
    %2775 = vmatpush1.msra.mxu0 %v2460
    %2776 = vmatprep.subr.mxu0 0.0
    %2777 = vmatpush2.msra.mxu0 0.0
    %2778 = vmatprep.subr.mxu0 0.0
    %2779 = vmatpush2.msra.mxu0 0.0
    %2780 = vmatprep.subr.mxu0 0.0
    %2781 = vmatpush2.msra.mxu0 0.0
    %2782 = vmatprep.subr.mxu0 0.0
    %2783 = vmatpush2.msra.mxu0 0.0
    %2784 = vmatprep.subr.mxu0 0.0
    %2785 = vmatpush2.msra.mxu0 0.0
    %2786 = vmatprep.subr.mxu0 0.0
    %2787 = vmatpush2.msra.mxu0 0.0
    %2788 = vmatprep.subr.mxu0 0.0
    %2789 = vmatpush2.msra.mxu0 0.0
    %2790 = vmatprep.subr.mxu0 0.0
    %2791 = vmatpush2.msra.mxu0 0.0
    %2792 = vmatprep.subr.mxu0 0.0
    %2793 = vmatpush2.msra.mxu0 0.0
    %2794 = vmatprep.subr.mxu0 0.0
    %2795 = vmatpush2.msra.mxu0 0.0
    %2796 = vmatprep.subr.mxu0 0.0
    %2797 = vmatpush2.msra.mxu0 0.0
    %2798 = vmatprep.subr.mxu0 0.0
    %2799 = vmatpush2.msra.mxu0 0.0
    %2800 = vmatprep.subr.mxu0 0.0
    %2801 = vmatpush2.msra.mxu0 0.0
    %2802 = vmatprep.subr.mxu0 0.0
    %2803 = vmatpush2.msra.mxu0 0.0
    %2804 = vmatprep.subr.mxu0 0.0
    %2805 = vmatpush2.msra.mxu0 0.0
    %2806 = vmatprep.subr.mxu0 0.0
    %2807 = vmatpush2.msra.mxu0 0.0
    %2808 = vmatprep.mubr.f32.mxu0 0.0
    %2809 = vmatmul.mubr.f32.gmra.mxu0 %v2529
    %v2810 = vpop.f32.mrf.mxu0
    %v2811 = vadd.f32 %v2515, %v2810
    %v2812 = vpop.f32.mrf.mxu0
    %v2813 = vadd.f32 %v2519, %v2812
    %2814 = vdwg.mxu0
    %v2823 = vcombine.low %v2598, %v2600
    %v2824 = vcombine.low %v2669, %v2671
    %v2825 = vcombine.low %v2740, %v2742
    %v2826 = vcombine.low %v2811, %v2813
    %v2828 = vunpack.c.l.s4 1966171168
    %v2829 = vunpack.c.0.s8 %v2828
    %v2830 = vlaneseq
    %v2831 = vshrl.u32 %v2830, 7
    %v2832 = vsub.s32 %v2829, %v2831
    %v2833 = vrot.slane %v2823, %v2832
    %v2835 = vunpack.c.l.s4 1966171168
    %v2836 = vunpack.c.0.s8 %v2835
    %v2837 = vlaneseq
    %v2838 = vshrl.u32 %v2837, 7
    %v2839 = vsub.s32 %v2836, %v2838
    %v2840 = vrot.slane %v2824, %v2839
    %v2842 = vunpack.c.l.s4 1966171168
    %v2843 = vunpack.c.0.s8 %v2842
    %v2844 = vlaneseq
    %v2845 = vshrl.u32 %v2844, 7
    %v2846 = vsub.s32 %v2843, %v2845
    %v2847 = vrot.slane %v2825, %v2846
    %v2849 = vunpack.c.l.s4 1966171168
    %v2850 = vunpack.c.0.s8 %v2849
    %v2851 = vlaneseq
    %v2852 = vshrl.u32 %v2851, 7
    %v2853 = vsub.s32 %v2850, %v2852
    %v2854 = vrot.slane %v2826, %v2853
    %v2855 = vcombine.low %v2833, %v2840
    %v2856 = vcombine.low %v2847, %v2854
    %v2858 = vunpack.c.l.s4 1966171168
    %v2859 = vunpack.c.0.s8 %v2858
    %v2860 = vlaneseq
    %v2861 = vshrl.u32 %v2860, 7
    %v2862 = vsub.s32 %v2859, %v2861
    %v2863 = vrot.slane %v2855, %v2862
    %v2865 = vunpack.c.l.s4 1966171168
    %v2866 = vunpack.c.0.s8 %v2865
    %v2867 = vlaneseq
    %v2868 = vshrl.u32 %v2867, 7
    %v2869 = vsub.s32 %v2866, %v2868
    %v2870 = vrot.slane %v2856, %v2869
    %v2871 = vcombine.low %v2863, %v2870
    %2873 = vst [vmem:[#allocation13] sm:$0xff] %v2871
    // Predicated region
    $region42: #{tpu_custom_call.1} parent=1 // pred_check
      _
    $region43: #{tpu_custom_call.1} parent=1 // pred_check_branch
      %2875 = sbr.rel (0) target = $region45
    $region44: #{tpu_custom_call.1} parent=1 // pred_region
      %s2877 = ssub.s32 128, 128
      %2878 = vsyncadd [#allocation7], %s2877
      %s2880 = sshll.u32 [#allocation13], 4
      %s2881 = int_to_ptr.vmem [resolvable:$true] %s2880
      %2883 = dma.vmem_to_hbm [thread:$0]  %s2881, 128, %s6, [#allocation7]
    $region45: #{tpu_custom_call.1} parent=1 // pred_fallthru
      _
    // Predicated region
    $region46: #{tpu_custom_call.1} parent=1 // pred_check
      _
    $region47: #{tpu_custom_call.1} parent=1 // pred_check_branch
      %2885 = sbr.rel (0) target = $region49
    $region48: #{tpu_custom_call.1} parent=1 // pred_region
      %2886 = dma.done [#allocation7], 128
    $region49: #{tpu_custom_call.1} parent=1 // pred_fallthru
      _
    %2887 = vsyncpa [#allocation6], 1
    %2888 = vsyncpa [#allocation9], 1
    %2889 = vsyncpa [#allocation12], 1
    %2890 = vsyncpa [#allocation7], 1
  %2891 = vsyncmov [#allocation4]
  %s2892 = vpop.sfrf %2891
  %p2893 = scmp.eq.s32.totalorder %s2892, 0
  %p2894 = pneg %p2893
  %2896 = shalt.err (%p2894)

</llo_original>
